<compile_context>
chip_gen: v7x
topology: tpu7x:2x2x1
jax: 0.10.0
libtpu: 0.0.40
codegen_flags: <defaults>
</compile_context>

<pallas_src>
import math

import jax
import jax.numpy as jnp
from jax.experimental import pallas as pl
from jax.experimental.pallas import tpu as pltpu

# ------------------------------- scaler --------------------------------------
SCALER_MEAN = 5.0
SCALER_STD = 2.0  # scaler.transform(x) = (x - SCALER_MEAN) / SCALER_STD
_LOG_2PI = math.log(2.0 * math.pi)


# -------------------------- in-kernel building blocks -------------------------
def _timeblock(act, w_ref, b_ref):
    """Gated temporal conv, kernel (1,3), valid padding, tap-wise dots.

    act:   (B, T, N, Cin) f32
    w_ref: (3, Cin, 3*Cout) bf16, per-tap, output cols [conv1 | conv2 | conv3]
    b_ref: (1, 3*Cout) f32
    returns relu(conv1 * sigmoid(conv2) + conv3): (B, T-2, N, Cout) f32.
    """
    B, T, N, Cin = act.shape
    Tp = T - 2
    M = B * Tp * N
    Cout3 = w_ref.shape[-1]
    Cout = Cout3 // 3

    act_b = act.astype(jnp.bfloat16)
    acc = jnp.zeros((M, Cout3), jnp.float32)
    for k in range(3):                       # 3 taps, accumulated in f32
        x_k = act_b[:, k:k + Tp].reshape(M, Cin)
        acc = acc + jnp.dot(x_k, w_ref[k], preferred_element_type=jnp.float32)
    acc = acc + b_ref[...]                   # (1, 3*Cout) broadcast

    c1 = acc[:, 0:Cout]
    c2 = acc[:, Cout:2 * Cout]
    c3 = acc[:, 2 * Cout:3 * Cout]
    g = jnp.maximum(c1 * jax.nn.sigmoid(c2) + c3, 0.0)
    return g.reshape(B, Tp, N, Cout)


def _graphconv(act, th_ref, wmix_ref):
    """relu( kron(I_{B*T}, A_hat) @ (act_flat @ Theta) ).

    Theta is applied first (associativity); the A_hat node mix is a single
    2-D matmul with a host-built block-diagonal operator, so rows keep the
    natural (b, t, n) ordering and no relayout is required.
    """
    B, T, N, C = act.shape
    S = th_ref.shape[-1]
    z = jnp.dot(act.astype(jnp.bfloat16).reshape(B * T * N, C), th_ref[...],
                preferred_element_type=jnp.float32)            # (B*T*N, S)
    mixed = jnp.dot(wmix_ref[...], z.astype(jnp.bfloat16),
                    preferred_element_type=jnp.float32)        # (B*T*N, S)
    return jnp.maximum(mixed, 0.0).reshape(B, T, N, S)


def _batchnorm(act):
    """BatchNorm2d(num_nodes): per-node stats over (batch, time, channel).

    Training-mode batch statistics, gamma=1, beta=0, eps=1e-5; sum and
    sum-of-squares are computed in one traversal.
    """
    # TODO(synk): eval-mode (running-statistics) BatchNorm not modeled.
    B, T, N, C = act.shape
    cnt = float(B * T * C)
    s = jnp.sum(act, axis=3, keepdims=True)
    s = jnp.sum(s, axis=1, keepdims=True)
    s = jnp.sum(s, axis=0, keepdims=True)                      # (1,1,N,1)
    q = jnp.sum(act * act, axis=3, keepdims=True)
    q = jnp.sum(q, axis=1, keepdims=True)
    q = jnp.sum(q, axis=0, keepdims=True)
    mean = s / cnt
    var = jnp.maximum(q / cnt - mean * mean, 0.0)
    return (act - mean) * jax.lax.rsqrt(var + 1e-5)


# ----------------------------- fused forward kernel ---------------------------
def _dynamic_reg_kernel(sig_ref, x2_ref, yt_ref, yts_ref,
                        w1a_ref, b1a_ref, th1_ref, wI1_ref, w1b_ref, b1b_ref,
                        w2a_ref, b2a_ref, th2_ref, wI2_ref, w2b_ref, b2b_ref,
                        wlt_ref, blt_ref, fcw_ref, fcb_ref,
                        amart_ref, wmarb_ref,
                        yhat_ref, nll_ref, yhatm_scr):
    g = pl.program_id(0)                     # 0: STGCN(x_t), 1: STGCN(x_t_s)
    act = x2_ref[...]                        # (B, T, N, Cin) for this pass

    # ----------------------------- STGCN ---------------------------------
    t = _timeblock(act, w1a_ref, b1a_ref)            # block 1
    t = _graphconv(t, th1_ref, wI1_ref)
    t = _timeblock(t, w1b_ref, b1b_ref)
    t = _batchnorm(t)
    t = _timeblock(t, w2a_ref, b2a_ref)              # block 2
    t = _graphconv(t, th2_ref, wI2_ref)
    t = _timeblock(t, w2b_ref, b2b_ref)
    t = _batchnorm(t)
    t = _timeblock(t, wlt_ref, blt_ref)              # last temporal: (B,Tf,N,64)

    B, Tf, N, C = t.shape
    # FC as a single dot with K = Tf*C = 128 (rows of fc_w ordered (t, c)).
    feat = jnp.concatenate([t[:, ti] for ti in range(Tf)], axis=-1)  # (B,N,Tf*C)
    feat = feat.reshape(B * N, Tf * C).astype(jnp.bfloat16)
    out4 = jnp.dot(feat, fcw_ref[...], preferred_element_type=jnp.float32)
    out4 = out4 + fcb_ref[...]                                        # (B*N, Q)
    Q = out4.shape[-1]
    out4 = out4.reshape(B, N, Q)

    @pl.when(g == 0)
    def _():
        yhatm_scr[...] = out4                # yhat_m = STGCN(x_t)

    @pl.when(g == pl.num_programs(0) - 1)
    def _():
        # This pass produced yhat_s = STGCN(x_t_s): build the MAR residual,
        # combine with yhat_m from the scratch, and compute the MGD 'eye' NLL.
        yts = yts_ref[...]                   # unscaled y_t_s, (B, N, Q)
        eta_s = ((yts - SCALER_MEAN) / SCALER_STD - out4) * \
            (yts != 0.0).astype(jnp.float32)
        # eta = A_mar @ eta_s @ B_mar (in (Q,N)); in (N,Q) orientation:
        #   eta = kron(I_B, B_mar^T) @ (eta_s_flat @ A_mar^T)
        tmp = jnp.dot(eta_s.reshape(B * N, Q), amart_ref[...],
                      preferred_element_type=jnp.float32)
        eta = jnp.dot(wmarb_ref[...], tmp,
                      preferred_element_type=jnp.float32).reshape(B, N, Q)
        yhat = yhatm_scr[...] + eta
        yhat_ref[...] = yhat

        # ------------------------ MGD 'eye' NLL ---------------------------
        yt = yt_ref[...]                     # unscaled y_t, (B, N, Q)
        eps = ((yt - SCALER_MEAN) / SCALER_STD - yhat) * \
            (yt != 0.0).astype(jnp.float32)
        r = jnp.sum(eps * eps, axis=2, keepdims=True)
        r = jnp.sum(r, axis=1, keepdims=True)
        r = jnp.sum(r, axis=0, keepdims=True)                  # (1,1,1)
        ss = r[:, :, 0]                                        # (1,1)
        sp = sig_ref[0, 0]                   # softplus(sigma)  (variance)
        log_sp = sig_ref[0, 1]               # log softplus(sigma)
        dim = N * Q
        nll_ref[...] = 0.5 * (ss / (sp * B) + dim * (_LOG_2PI + log_sp))


# ------------------------------- forward wrapper ------------------------------
def _dynamic_reg_forward_impl(x, y, kp, out_dim, sigma):
    """x: (B, T, N, in_dim+1), y: (B, T, N, 2).  Returns (y_t_hat, nll)."""
    B, T, N, _ = x.shape
    Q = out_dim

    y_t = y[:, :Q, :, 0]                                       # (B, Q, N)
    y_t_s = y[:, :Q, :, 1]
    x_t = jnp.concatenate([x[..., :1], x[..., 2:]], axis=-1)   # (B, T, N, in_dim)
    x_t_s = x[..., 1:]
    # the two weight-sharing STGCN passes stacked along batch; already in the
    # kernel's (batch, time, node, feature) layout
    x2 = jnp.concatenate([x_t, x_t_s], axis=0)                 # (2B, T, N, Cin)
    Cin = x2.shape[-1]
    # feed y in (B, N, Q) orientation so the kernel never transposes
    y_t_nq = jnp.transpose(y_t, (0, 2, 1))
    y_t_s_nq = jnp.transpose(y_t_s, (0, 2, 1))

    # traced sigma (no retrace on update): [softplus(sigma), log softplus]
    sp = jax.nn.softplus(jnp.asarray(sigma, jnp.float32))
    sig = jnp.stack([sp, jnp.log(sp)]).reshape(1, 2)

    bf16 = jnp.bfloat16
    T1 = T - 2                               # time length at block-1 graph conv
    T2 = T - 6                               # block-2 graph conv
    # block-diagonal node-mix operators (single-dot A_hat / B_mar application)
    wI1 = jnp.kron(jnp.eye(B * T1, dtype=jnp.float32), kp["a_hat"]).astype(bf16)
    wI2 = jnp.kron(jnp.eye(B * T2, dtype=jnp.float32), kp["a_hat"]).astype(bf16)
    wmarb = jnp.kron(jnp.eye(B, dtype=jnp.float32), kp["B_mar"].T)   # (B*N, B*N)
    amart = kp["A_mar"].T                                            # (Q, Q)

    weights = [kp["w1a"], kp["b1a"], kp["th1"], wI1, kp["w1b"], kp["b1b"],
               kp["w2a"], kp["b2a"], kp["th2"], wI2, kp["w2b"], kp["b2b"],
               kp["wlt"], kp["blt"], kp["fcw"], kp["fcb"], amart, wmarb]

    def const_spec(a):
        nd = a.ndim
        return pl.BlockSpec(a.shape, lambda g, _n=nd: (0,) * _n)

    in_specs = ([pl.BlockSpec(memory_space=pltpu.MemorySpace.SMEM),     # sigma
                 pl.BlockSpec((B, T, N, Cin), lambda g: (g, 0, 0, 0)),  # x2 (per pass)
                 const_spec(y_t_nq), const_spec(y_t_s_nq)]
                + [const_spec(w) for w in weights])

    out_specs = (pl.BlockSpec((B, N, Q), lambda g: (0, 0, 0)),
                 pl.BlockSpec((1, 1), lambda g: (0, 0)))

    yhat_nq, nll = pl.pallas_call(
        _dynamic_reg_kernel,
        grid=(2,),                           # one step per weight-sharing pass
        in_specs=in_specs,
        out_specs=out_specs,
        out_shape=(jax.ShapeDtypeStruct((B, N, Q), jnp.float32),
                   jax.ShapeDtypeStruct((1, 1), jnp.float32)),
        scratch_shapes=[pltpu.VMEM((B, N, Q), jnp.float32)],
        compiler_params=pltpu.CompilerParams(
            # "arbitrary": step 1 reads step 0's yhat_m from VMEM scratch.
            dimension_semantics=("arbitrary",),
            vmem_limit_bytes=32 * 1024 * 1024),
    )(sig, x2, y_t_nq, y_t_s_nq, *weights)

    # TODO(synk): loss_type == 'full' (LowRankMultivariateNormal log_prob) and
    # dist.sample() are not implemented (not exercised by this forward config).
    return jnp.transpose(yhat_nq, (0, 2, 1)), nll[0, 0]


dynamic_reg_forward = jax.jit(_dynamic_reg_forward_impl, static_argnums=(3,))


# ------------------------------ parameter handling ----------------------------
def init_params(key, num_nodes, seq_len, out_dim, in_dim):
    keys = jax.random.split(key, 16)

    def tb(k, cin, cout):
        k1, k2 = jax.random.split(k)
        w = jax.random.normal(k1, (3, 3, cin, cout), jnp.float32) / math.sqrt(3 * cin)
        b = jax.random.normal(k2, (3, 1, cout), jnp.float32) * 0.01
        return w, b

    p = {}
    p["b1_tb1_w"], p["b1_tb1_b"] = tb(keys[0], in_dim, 64)
    p["b1_theta"] = jax.random.uniform(keys[1], (64, 16), jnp.float32,
                                       minval=-0.25, maxval=0.25)
    p["b1_tb2_w"], p["b1_tb2_b"] = tb(keys[2], 16, 64)
    p["b2_tb1_w"], p["b2_tb1_b"] = tb(keys[3], 64, 64)
    p["b2_theta"] = jax.random.uniform(keys[4], (64, 16), jnp.float32,
                                       minval=-0.25, maxval=0.25)
    p["b2_tb2_w"], p["b2_tb2_b"] = tb(keys[5], 16, 64)
    p["lt_w"], p["lt_b"] = tb(keys[6], 64, 64)
    feat = (seq_len - 2 * 5) * 64
    p["fc_w"] = jax.random.normal(keys[7], (feat, out_dim), jnp.float32) / math.sqrt(feat)
    p["fc_b"] = jax.random.normal(keys[8], (1, out_dim), jnp.float32) * 0.01
    # normalized adjacency (ring + self loops)
    adj = (jnp.eye(num_nodes) + jnp.roll(jnp.eye(num_nodes), 1, axis=1)
           + jnp.roll(jnp.eye(num_nodes), -1, axis=1))
    dinv = 1.0 / jnp.sqrt(jnp.sum(adj, axis=1))
    p["A_hat"] = (adj * dinv[:, None] * dinv[None, :]).astype(jnp.float32)
    # mar_regressor, init='diagonal', scaling=0.001
    p["A_mar"] = jnp.eye(seq_len, dtype=jnp.float32) * 0.001
    p["B_mar"] = jnp.eye(num_nodes, dtype=jnp.float32) * 0.001
    # MGD_loss_eye sigma parameter (randn(1))
    p["sigma"] = float(jax.random.normal(keys[9], ()))
    return p


def pack_params(p):
    """Pack raw parameters into the fused-kernel layouts (plain JAX, once).

    TimeBlock weights become per-tap (3, Cin, 3*Cout) bf16 with output columns
    ordered [conv1 | conv2 | conv3]; Theta / FC weights are pre-cast to bf16.
    """
    bf16 = jnp.bfloat16

    def tb_pack(w, b):
        # w: (3 convs, 3 taps, Cin, Cout) -> (3 taps, Cin, 3*Cout)
        wt = jnp.concatenate([w[0], w[1], w[2]], axis=-1)
        bt = jnp.concatenate([b[0], b[1], b[2]], axis=-1)      # (1, 3*Cout)
        return wt.astype(bf16), bt

    k = {}
    k["w1a"], k["b1a"] = tb_pack(p["b1_tb1_w"], p["b1_tb1_b"])
    k["th1"] = p["b1_theta"].astype(bf16)
    k["w1b"], k["b1b"] = tb_pack(p["b1_tb2_w"], p["b1_tb2_b"])
    k["w2a"], k["b2a"] = tb_pack(p["b2_tb1_w"], p["b2_tb1_b"])
    k["th2"] = p["b2_theta"].astype(bf16)
    k["w2b"], k["b2b"] = tb_pack(p["b2_tb2_w"], p["b2_tb2_b"])
    k["wlt"], k["blt"] = tb_pack(p["lt_w"], p["lt_b"])
    k["fcw"] = p["fc_w"].astype(bf16)                          # (Tf*64, Q), rows (t, c)
    k["fcb"] = p["fc_b"]                                       # (1, Q)
    k["a_hat"] = p["A_hat"]
    k["A_mar"] = p["A_mar"]
    k["B_mar"] = p["B_mar"]
    return k


# ----------------------------------- main -------------------------------------
if __name__ == "__main__":
    # out_dim == seq_len is required by mar_regressor (A_mar is (seq_len, seq_len))
    B, seq_len, num_nodes, in_dim, out_dim = 2, 12, 8, 2, 12

    key = jax.random.PRNGKey(0)
    kparam_key, kx, ky = jax.random.split(key, 3)
    params = init_params(kparam_key, num_nodes, seq_len, out_dim, in_dim)
    kparams = pack_params(params)

    x = jax.random.normal(kx, (B, seq_len, num_nodes, in_dim + 1), jnp.float32)
    y = jax.random.normal(ky, (B, seq_len, num_nodes, 2), jnp.float32)

    y_t_hat, nll = dynamic_reg_forward(x, y, kparams, out_dim, params["sigma"])
    jax.block_until_ready((y_t_hat, nll))
    assert y_t_hat.shape == (B, out_dim, num_nodes)
    assert nll.shape == ()
    assert bool(jnp.isfinite(nll)) and bool(jnp.all(jnp.isfinite(y_t_hat)))
    print("KERNEL_OK")
</pallas_src>

<mosaic_0001>
module attributes {stable_mosaic.version = 11 : i64} {
  func.func @_dynamic_reg_kernel(%arg0: i32, %arg1: memref<1x2xf32, #tpu.memory_space<smem>>, %arg2: memref<2x12x8x2xf32, #tpu.memory_space<vmem>>, %arg3: memref<2x8x12xf32, #tpu.memory_space<vmem>>, %arg4: memref<2x8x12xf32, #tpu.memory_space<vmem>>, %arg5: memref<3x2x192xbf16, #tpu.memory_space<vmem>>, %arg6: memref<1x192xf32, #tpu.memory_space<vmem>>, %arg7: memref<64x16xbf16, #tpu.memory_space<vmem>>, %arg8: memref<160x160xbf16, #tpu.memory_space<vmem>>, %arg9: memref<3x16x192xbf16, #tpu.memory_space<vmem>>, %arg10: memref<1x192xf32, #tpu.memory_space<vmem>>, %arg11: memref<3x64x192xbf16, #tpu.memory_space<vmem>>, %arg12: memref<1x192xf32, #tpu.memory_space<vmem>>, %arg13: memref<64x16xbf16, #tpu.memory_space<vmem>>, %arg14: memref<96x96xbf16, #tpu.memory_space<vmem>>, %arg15: memref<3x16x192xbf16, #tpu.memory_space<vmem>>, %arg16: memref<1x192xf32, #tpu.memory_space<vmem>>, %arg17: memref<3x64x192xbf16, #tpu.memory_space<vmem>>, %arg18: memref<1x192xf32, #tpu.memory_space<vmem>>, %arg19: memref<128x12xbf16, #tpu.memory_space<vmem>>, %arg20: memref<1x12xf32, #tpu.memory_space<vmem>>, %arg21: memref<12x12xf32, #tpu.memory_space<vmem>>, %arg22: memref<16x16xf32, #tpu.memory_space<vmem>>, %arg23: memref<2x8x12xf32, #tpu.memory_space<vmem>>, %arg24: memref<1x1xf32, #tpu.memory_space<vmem>>, %arg25: memref<2x8x12xf32, #tpu.memory_space<vmem>>) attributes {dimension_semantics = [#tpu.dimension_semantics<arbitrary>], iteration_bounds = array<i64: 2>, scalar_prefetch = 0 : i64, scratch_operands = 1 : i64, tpu.core_type = #tpu.core_type<tc>, window_params = [{transform_indices = @transform_0, window_bounds = array<i64: 1, 2>}, {transform_indices = @transform_1, window_bounds = array<i64: 2, 12, 8, 2>}, {pipeline_mode = #tpu.pipeline_mode<synchronous>, transform_indices = @transform_2, window_bounds = array<i64: 2, 8, 12>}, {pipeline_mode = #tpu.pipeline_mode<synchronous>, transform_indices = @transform_3, window_bounds = array<i64: 2, 8, 12>}, {pipeline_mode = #tpu.pipeline_mode<synchronous>, transform_indices = @transform_4, window_bounds = array<i64: 3, 2, 192>}, {pipeline_mode = #tpu.pipeline_mode<synchronous>, transform_indices = @transform_5, window_bounds = array<i64: 1, 192>}, {pipeline_mode = #tpu.pipeline_mode<synchronous>, transform_indices = @transform_6, window_bounds = array<i64: 64, 16>}, {pipeline_mode = #tpu.pipeline_mode<synchronous>, transform_indices = @transform_7, window_bounds = array<i64: 160, 160>}, {pipeline_mode = #tpu.pipeline_mode<synchronous>, transform_indices = @transform_8, window_bounds = array<i64: 3, 16, 192>}, {pipeline_mode = #tpu.pipeline_mode<synchronous>, transform_indices = @transform_9, window_bounds = array<i64: 1, 192>}, {pipeline_mode = #tpu.pipeline_mode<synchronous>, transform_indices = @transform_10, window_bounds = array<i64: 3, 64, 192>}, {pipeline_mode = #tpu.pipeline_mode<synchronous>, transform_indices = @transform_11, window_bounds = array<i64: 1, 192>}, {pipeline_mode = #tpu.pipeline_mode<synchronous>, transform_indices = @transform_12, window_bounds = array<i64: 64, 16>}, {pipeline_mode = #tpu.pipeline_mode<synchronous>, transform_indices = @transform_13, window_bounds = array<i64: 96, 96>}, {pipeline_mode = #tpu.pipeline_mode<synchronous>, transform_indices = @transform_14, window_bounds = array<i64: 3, 16, 192>}, {pipeline_mode = #tpu.pipeline_mode<synchronous>, transform_indices = @transform_15, window_bounds = array<i64: 1, 192>}, {pipeline_mode = #tpu.pipeline_mode<synchronous>, transform_indices = @transform_16, window_bounds = array<i64: 3, 64, 192>}, {pipeline_mode = #tpu.pipeline_mode<synchronous>, transform_indices = @transform_17, window_bounds = array<i64: 1, 192>}, {pipeline_mode = #tpu.pipeline_mode<synchronous>, transform_indices = @transform_18, window_bounds = array<i64: 128, 12>}, {pipeline_mode = #tpu.pipeline_mode<synchronous>, transform_indices = @transform_19, window_bounds = array<i64: 1, 12>}, {pipeline_mode = #tpu.pipeline_mode<synchronous>, transform_indices = @transform_20, window_bounds = array<i64: 12, 12>}, {pipeline_mode = #tpu.pipeline_mode<synchronous>, transform_indices = @transform_21, window_bounds = array<i64: 16, 16>}, {pipeline_mode = #tpu.pipeline_mode<synchronous>, transform_indices = @transform_22, window_bounds = array<i64: 2, 8, 12>}, {pipeline_mode = #tpu.pipeline_mode<synchronous>, transform_indices = @transform_23, window_bounds = array<i64: 1, 1>}]} {
    %c0 = arith.constant 0 : index
    %c0_0 = arith.constant 0 : index
    %c0_1 = arith.constant 0 : index
    %c0_2 = arith.constant 0 : index
    %0 = vector.load %arg2[%c0, %c0_0, %c0_1, %c0_2] : memref<2x12x8x2xf32, #tpu.memory_space<vmem>>, vector<2x12x8x2xf32>
    %1 = arith.truncf %0 : vector<2x12x8x2xf32> to vector<2x12x8x2xbf16>
    %cst = arith.constant 0.000000e+00 : f32
    %2 = vector.broadcast %cst : f32 to vector<160x192xf32>
    %3 = vector.extract_strided_slice %1 {offsets = [0, 0, 0, 0], sizes = [2, 10, 8, 2], strides = [1, 1, 1, 1]} : vector<2x12x8x2xbf16> to vector<2x10x8x2xbf16>
    %4 = vector.shape_cast %3 : vector<2x10x8x2xbf16> to vector<160x2xbf16>
    %c0_3 = arith.constant 0 : index
    %c0_4 = arith.constant 0 : index
    %c0_5 = arith.constant 0 : index
    %5 = vector.load %arg5[%c0_3, %c0_4, %c0_5] : memref<3x2x192xbf16, #tpu.memory_space<vmem>>, vector<1x2x192xbf16>
    %6 = vector.shape_cast %5 : vector<1x2x192xbf16> to vector<2x192xbf16>
    %cst_6 = arith.constant dense<0.000000e+00> : vector<160x192xf32>
    %7 = tpu.matmul %4, %6, %cst_6 {dimension_numbers = #tpu.dot_dimension_numbers<[1], [0], [0], [1], [0, 0, 1, 1], [], []>} : vector<160x2xbf16>, vector<2x192xbf16>, vector<160x192xf32> -> vector<160x192xf32>
    %8 = arith.addf %2, %7 : vector<160x192xf32>
    %9 = vector.extract_strided_slice %1 {offsets = [0, 1, 0, 0], sizes = [2, 10, 8, 2], strides = [1, 1, 1, 1]} : vector<2x12x8x2xbf16> to vector<2x10x8x2xbf16>
    %10 = vector.shape_cast %9 : vector<2x10x8x2xbf16> to vector<160x2xbf16>
    %c1 = arith.constant 1 : index
    %c0_7 = arith.constant 0 : index
    %c0_8 = arith.constant 0 : index
    %11 = vector.load %arg5[%c1, %c0_7, %c0_8] : memref<3x2x192xbf16, #tpu.memory_space<vmem>>, vector<1x2x192xbf16>
    %12 = vector.shape_cast %11 : vector<1x2x192xbf16> to vector<2x192xbf16>
    %cst_9 = arith.constant dense<0.000000e+00> : vector<160x192xf32>
    %13 = tpu.matmul %10, %12, %cst_9 {dimension_numbers = #tpu.dot_dimension_numbers<[1], [0], [0], [1], [0, 0, 1, 1], [], []>} : vector<160x2xbf16>, vector<2x192xbf16>, vector<160x192xf32> -> vector<160x192xf32>
    %14 = arith.addf %8, %13 : vector<160x192xf32>
    %15 = vector.extract_strided_slice %1 {offsets = [0, 2, 0, 0], sizes = [2, 10, 8, 2], strides = [1, 1, 1, 1]} : vector<2x12x8x2xbf16> to vector<2x10x8x2xbf16>
    %16 = vector.shape_cast %15 : vector<2x10x8x2xbf16> to vector<160x2xbf16>
    %c2 = arith.constant 2 : index
    %c0_10 = arith.constant 0 : index
    %c0_11 = arith.constant 0 : index
    %17 = vector.load %arg5[%c2, %c0_10, %c0_11] : memref<3x2x192xbf16, #tpu.memory_space<vmem>>, vector<1x2x192xbf16>
    %18 = vector.shape_cast %17 : vector<1x2x192xbf16> to vector<2x192xbf16>
    %cst_12 = arith.constant dense<0.000000e+00> : vector<160x192xf32>
    %19 = tpu.matmul %16, %18, %cst_12 {dimension_numbers = #tpu.dot_dimension_numbers<[1], [0], [0], [1], [0, 0, 1, 1], [], []>} : vector<160x2xbf16>, vector<2x192xbf16>, vector<160x192xf32> -> vector<160x192xf32>
    %20 = arith.addf %14, %19 : vector<160x192xf32>
    %c0_13 = arith.constant 0 : index
    %c0_14 = arith.constant 0 : index
    %21 = vector.load %arg6[%c0_13, %c0_14] : memref<1x192xf32, #tpu.memory_space<vmem>>, vector<1x192xf32>
    %22 = vector.broadcast %21 : vector<1x192xf32> to vector<160x192xf32>
    %23 = arith.addf %20, %22 : vector<160x192xf32>
    %24 = vector.extract_strided_slice %23 {offsets = [0, 0], sizes = [160, 64], strides = [1, 1]} : vector<160x192xf32> to vector<160x64xf32>
    %25 = vector.extract_strided_slice %23 {offsets = [0, 64], sizes = [160, 64], strides = [1, 1]} : vector<160x192xf32> to vector<160x64xf32>
    %26 = vector.extract_strided_slice %23 {offsets = [0, 128], sizes = [160, 64], strides = [1, 1]} : vector<160x192xf32> to vector<160x64xf32>
    %27 = arith.negf %25 : vector<160x64xf32>
    %28 = math.exp %27 : vector<160x64xf32>
    %cst_15 = arith.constant 1.000000e+00 : f32
    %29 = vector.broadcast %cst_15 : f32 to vector<160x64xf32>
    %30 = arith.addf %29, %28 : vector<160x64xf32>
    %31 = arith.divf %29, %30 : vector<160x64xf32>
    %32 = arith.mulf %24, %31 : vector<160x64xf32>
    %33 = arith.addf %32, %26 : vector<160x64xf32>
    %cst_16 = arith.constant 0.000000e+00 : f32
    %34 = vector.broadcast %cst_16 : f32 to vector<160x64xf32>
    %35 = arith.maximumf %33, %34 : vector<160x64xf32>
    %36 = vector.shape_cast %35 : vector<160x64xf32> to vector<2x10x8x64xf32>
    %37 = arith.truncf %36 : vector<2x10x8x64xf32> to vector<2x10x8x64xbf16>
    %38 = vector.shape_cast %37 : vector<2x10x8x64xbf16> to vector<160x64xbf16>
    %c0_17 = arith.constant 0 : index
    %c0_18 = arith.constant 0 : index
    %39 = vector.load %arg7[%c0_17, %c0_18] : memref<64x16xbf16, #tpu.memory_space<vmem>>, vector<64x16xbf16>
    %cst_19 = arith.constant dense<0.000000e+00> : vector<160x16xf32>
    %40 = tpu.matmul %38, %39, %cst_19 {dimension_numbers = #tpu.dot_dimension_numbers<[1], [0], [0], [1], [0, 0, 1, 1], [], []>} : vector<160x64xbf16>, vector<64x16xbf16>, vector<160x16xf32> -> vector<160x16xf32>
    %c0_20 = arith.constant 0 : index
    %c0_21 = arith.constant 0 : index
    %41 = vector.load %arg8[%c0_20, %c0_21] : memref<160x160xbf16, #tpu.memory_space<vmem>>, vector<160x160xbf16>
    %42 = arith.truncf %40 : vector<160x16xf32> to vector<160x16xbf16>
    %cst_22 = arith.constant dense<0.000000e+00> : vector<160x16xf32>
    %43 = tpu.matmul %41, %42, %cst_22 {dimension_numbers = #tpu.dot_dimension_numbers<[1], [0], [0], [1], [0, 0, 1, 1], [], []>} : vector<160x160xbf16>, vector<160x16xbf16>, vector<160x16xf32> -> vector<160x16xf32>
    %cst_23 = arith.constant 0.000000e+00 : f32
    %44 = vector.broadcast %cst_23 : f32 to vector<160x16xf32>
    %45 = arith.maximumf %43, %44 : vector<160x16xf32>
    %46 = vector.shape_cast %45 : vector<160x16xf32> to vector<2x10x8x16xf32>
    %47 = arith.truncf %46 : vector<2x10x8x16xf32> to vector<2x10x8x16xbf16>
    %cst_24 = arith.constant 0.000000e+00 : f32
    %48 = vector.broadcast %cst_24 : f32 to vector<128x192xf32>
    %49 = vector.extract_strided_slice %47 {offsets = [0, 0, 0, 0], sizes = [2, 8, 8, 16], strides = [1, 1, 1, 1]} : vector<2x10x8x16xbf16> to vector<2x8x8x16xbf16>
    %50 = vector.shape_cast %49 : vector<2x8x8x16xbf16> to vector<128x16xbf16>
    %c0_25 = arith.constant 0 : index
    %c0_26 = arith.constant 0 : index
    %c0_27 = arith.constant 0 : index
    %51 = vector.load %arg9[%c0_25, %c0_26, %c0_27] : memref<3x16x192xbf16, #tpu.memory_space<vmem>>, vector<1x16x192xbf16>
    %52 = vector.shape_cast %51 : vector<1x16x192xbf16> to vector<16x192xbf16>
    %cst_28 = arith.constant dense<0.000000e+00> : vector<128x192xf32>
    %53 = tpu.matmul %50, %52, %cst_28 {dimension_numbers = #tpu.dot_dimension_numbers<[1], [0], [0], [1], [0, 0, 1, 1], [], []>} : vector<128x16xbf16>, vector<16x192xbf16>, vector<128x192xf32> -> vector<128x192xf32>
    %54 = arith.addf %48, %53 : vector<128x192xf32>
    %55 = vector.extract_strided_slice %47 {offsets = [0, 1, 0, 0], sizes = [2, 8, 8, 16], strides = [1, 1, 1, 1]} : vector<2x10x8x16xbf16> to vector<2x8x8x16xbf16>
    %56 = vector.shape_cast %55 : vector<2x8x8x16xbf16> to vector<128x16xbf16>
    %c1_29 = arith.constant 1 : index
    %c0_30 = arith.constant 0 : index
    %c0_31 = arith.constant 0 : index
    %57 = vector.load %arg9[%c1_29, %c0_30, %c0_31] : memref<3x16x192xbf16, #tpu.memory_space<vmem>>, vector<1x16x192xbf16>
    %58 = vector.shape_cast %57 : vector<1x16x192xbf16> to vector<16x192xbf16>
    %cst_32 = arith.constant dense<0.000000e+00> : vector<128x192xf32>
    %59 = tpu.matmul %56, %58, %cst_32 {dimension_numbers = #tpu.dot_dimension_numbers<[1], [0], [0], [1], [0, 0, 1, 1], [], []>} : vector<128x16xbf16>, vector<16x192xbf16>, vector<128x192xf32> -> vector<128x192xf32>
    %60 = arith.addf %54, %59 : vector<128x192xf32>
    %61 = vector.extract_strided_slice %47 {offsets = [0, 2, 0, 0], sizes = [2, 8, 8, 16], strides = [1, 1, 1, 1]} : vector<2x10x8x16xbf16> to vector<2x8x8x16xbf16>
    %62 = vector.shape_cast %61 : vector<2x8x8x16xbf16> to vector<128x16xbf16>
    %c2_33 = arith.constant 2 : index
    %c0_34 = arith.constant 0 : index
    %c0_35 = arith.constant 0 : index
    %63 = vector.load %arg9[%c2_33, %c0_34, %c0_35] : memref<3x16x192xbf16, #tpu.memory_space<vmem>>, vector<1x16x192xbf16>
    %64 = vector.shape_cast %63 : vector<1x16x192xbf16> to vector<16x192xbf16>
    %cst_36 = arith.constant dense<0.000000e+00> : vector<128x192xf32>
    %65 = tpu.matmul %62, %64, %cst_36 {dimension_numbers = #tpu.dot_dimension_numbers<[1], [0], [0], [1], [0, 0, 1, 1], [], []>} : vector<128x16xbf16>, vector<16x192xbf16>, vector<128x192xf32> -> vector<128x192xf32>
    %66 = arith.addf %60, %65 : vector<128x192xf32>
    %c0_37 = arith.constant 0 : index
    %c0_38 = arith.constant 0 : index
    %67 = vector.load %arg10[%c0_37, %c0_38] : memref<1x192xf32, #tpu.memory_space<vmem>>, vector<1x192xf32>
    %68 = vector.broadcast %67 : vector<1x192xf32> to vector<128x192xf32>
    %69 = arith.addf %66, %68 : vector<128x192xf32>
    %70 = vector.extract_strided_slice %69 {offsets = [0, 0], sizes = [128, 64], strides = [1, 1]} : vector<128x192xf32> to vector<128x64xf32>
    %71 = vector.extract_strided_slice %69 {offsets = [0, 64], sizes = [128, 64], strides = [1, 1]} : vector<128x192xf32> to vector<128x64xf32>
    %72 = vector.extract_strided_slice %69 {offsets = [0, 128], sizes = [128, 64], strides = [1, 1]} : vector<128x192xf32> to vector<128x64xf32>
    %73 = arith.negf %71 : vector<128x64xf32>
    %74 = math.exp %73 : vector<128x64xf32>
    %cst_39 = arith.constant 1.000000e+00 : f32
    %75 = vector.broadcast %cst_39 : f32 to vector<128x64xf32>
    %76 = arith.addf %75, %74 : vector<128x64xf32>
    %77 = arith.divf %75, %76 : vector<128x64xf32>
    %78 = arith.mulf %70, %77 : vector<128x64xf32>
    %79 = arith.addf %78, %72 : vector<128x64xf32>
    %cst_40 = arith.constant 0.000000e+00 : f32
    %80 = vector.broadcast %cst_40 : f32 to vector<128x64xf32>
    %81 = arith.maximumf %79, %80 : vector<128x64xf32>
    %82 = vector.shape_cast %81 : vector<128x64xf32> to vector<2x8x8x64xf32>
    %cst_41 = arith.constant dense<0.000000e+00> : vector<2x8x8xf32>
    %83 = vector.multi_reduction <add>, %82, %cst_41 [3] : vector<2x8x8x64xf32> to vector<2x8x8xf32>
    %84 = vector.shape_cast %83 : vector<2x8x8xf32> to vector<2x8x8x1xf32>
    %cst_42 = arith.constant dense<0.000000e+00> : vector<2x8x1xf32>
    %85 = vector.multi_reduction <add>, %84, %cst_42 [1] : vector<2x8x8x1xf32> to vector<2x8x1xf32>
    %86 = vector.shape_cast %85 : vector<2x8x1xf32> to vector<2x1x8x1xf32>
    %cst_43 = arith.constant dense<0.000000e+00> : vector<1x8x1xf32>
    %87 = vector.multi_reduction <add>, %86, %cst_43 [0] : vector<2x1x8x1xf32> to vector<1x8x1xf32>
    %88 = vector.shape_cast %87 : vector<1x8x1xf32> to vector<1x1x8x1xf32>
    %89 = arith.mulf %82, %82 : vector<2x8x8x64xf32>
    %cst_44 = arith.constant dense<0.000000e+00> : vector<2x8x8xf32>
    %90 = vector.multi_reduction <add>, %89, %cst_44 [3] : vector<2x8x8x64xf32> to vector<2x8x8xf32>
    %91 = vector.shape_cast %90 : vector<2x8x8xf32> to vector<2x8x8x1xf32>
    %cst_45 = arith.constant dense<0.000000e+00> : vector<2x8x1xf32>
    %92 = vector.multi_reduction <add>, %91, %cst_45 [1] : vector<2x8x8x1xf32> to vector<2x8x1xf32>
    %93 = vector.shape_cast %92 : vector<2x8x1xf32> to vector<2x1x8x1xf32>
    %cst_46 = arith.constant dense<0.000000e+00> : vector<1x8x1xf32>
    %94 = vector.multi_reduction <add>, %93, %cst_46 [0] : vector<2x1x8x1xf32> to vector<1x8x1xf32>
    %95 = vector.shape_cast %94 : vector<1x8x1xf32> to vector<1x1x8x1xf32>
    %cst_47 = arith.constant 1.024000e+03 : f32
    %96 = vector.broadcast %cst_47 : f32 to vector<1x1x8x1xf32>
    %97 = arith.divf %88, %96 : vector<1x1x8x1xf32>
    %cst_48 = arith.constant 1.024000e+03 : f32
    %98 = vector.broadcast %cst_48 : f32 to vector<1x1x8x1xf32>
    %99 = arith.divf %95, %98 : vector<1x1x8x1xf32>
    %100 = arith.mulf %97, %97 : vector<1x1x8x1xf32>
    %101 = arith.subf %99, %100 : vector<1x1x8x1xf32>
    %cst_49 = arith.constant 0.000000e+00 : f32
    %102 = vector.broadcast %cst_49 : f32 to vector<1x1x8x1xf32>
    %103 = arith.maximumf %101, %102 : vector<1x1x8x1xf32>
    %104 = vector.broadcast %97 : vector<1x1x8x1xf32> to vector<2x8x8x64xf32>
    %105 = arith.subf %82, %104 : vector<2x8x8x64xf32>
    %cst_50 = arith.constant 9.99999974E-6 : f32
    %106 = vector.broadcast %cst_50 : f32 to vector<1x1x8x1xf32>
    %107 = arith.addf %103, %106 : vector<1x1x8x1xf32>
    %108 = math.rsqrt %107 : vector<1x1x8x1xf32>
    %109 = vector.broadcast %108 : vector<1x1x8x1xf32> to vector<2x8x8x64xf32>
    %110 = arith.mulf %105, %109 : vector<2x8x8x64xf32>
    %111 = arith.truncf %110 : vector<2x8x8x64xf32> to vector<2x8x8x64xbf16>
    %cst_51 = arith.constant 0.000000e+00 : f32
    %112 = vector.broadcast %cst_51 : f32 to vector<96x192xf32>
    %113 = vector.extract_strided_slice %111 {offsets = [0, 0, 0, 0], sizes = [2, 6, 8, 64], strides = [1, 1, 1, 1]} : vector<2x8x8x64xbf16> to vector<2x6x8x64xbf16>
    %114 = vector.shape_cast %113 : vector<2x6x8x64xbf16> to vector<96x64xbf16>
    %c0_52 = arith.constant 0 : index
    %c0_53 = arith.constant 0 : index
    %c0_54 = arith.constant 0 : index
    %115 = vector.load %arg11[%c0_52, %c0_53, %c0_54] : memref<3x64x192xbf16, #tpu.memory_space<vmem>>, vector<1x64x192xbf16>
    %116 = vector.shape_cast %115 : vector<1x64x192xbf16> to vector<64x192xbf16>
    %cst_55 = arith.constant dense<0.000000e+00> : vector<96x192xf32>
    %117 = tpu.matmul %114, %116, %cst_55 {dimension_numbers = #tpu.dot_dimension_numbers<[1], [0], [0], [1], [0, 0, 1, 1], [], []>} : vector<96x64xbf16>, vector<64x192xbf16>, vector<96x192xf32> -> vector<96x192xf32>
    %118 = arith.addf %112, %117 : vector<96x192xf32>
    %119 = vector.extract_strided_slice %111 {offsets = [0, 1, 0, 0], sizes = [2, 6, 8, 64], strides = [1, 1, 1, 1]} : vector<2x8x8x64xbf16> to vector<2x6x8x64xbf16>
    %120 = vector.shape_cast %119 : vector<2x6x8x64xbf16> to vector<96x64xbf16>
    %c1_56 = arith.constant 1 : index
    %c0_57 = arith.constant 0 : index
    %c0_58 = arith.constant 0 : index
    %121 = vector.load %arg11[%c1_56, %c0_57, %c0_58] : memref<3x64x192xbf16, #tpu.memory_space<vmem>>, vector<1x64x192xbf16>
    %122 = vector.shape_cast %121 : vector<1x64x192xbf16> to vector<64x192xbf16>
    %cst_59 = arith.constant dense<0.000000e+00> : vector<96x192xf32>
    %123 = tpu.matmul %120, %122, %cst_59 {dimension_numbers = #tpu.dot_dimension_numbers<[1], [0], [0], [1], [0, 0, 1, 1], [], []>} : vector<96x64xbf16>, vector<64x192xbf16>, vector<96x192xf32> -> vector<96x192xf32>
    %124 = arith.addf %118, %123 : vector<96x192xf32>
    %125 = vector.extract_strided_slice %111 {offsets = [0, 2, 0, 0], sizes = [2, 6, 8, 64], strides = [1, 1, 1, 1]} : vector<2x8x8x64xbf16> to vector<2x6x8x64xbf16>
    %126 = vector.shape_cast %125 : vector<2x6x8x64xbf16> to vector<96x64xbf16>
    %c2_60 = arith.constant 2 : index
    %c0_61 = arith.constant 0 : index
    %c0_62 = arith.constant 0 : index
    %127 = vector.load %arg11[%c2_60, %c0_61, %c0_62] : memref<3x64x192xbf16, #tpu.memory_space<vmem>>, vector<1x64x192xbf16>
    %128 = vector.shape_cast %127 : vector<1x64x192xbf16> to vector<64x192xbf16>
    %cst_63 = arith.constant dense<0.000000e+00> : vector<96x192xf32>
    %129 = tpu.matmul %126, %128, %cst_63 {dimension_numbers = #tpu.dot_dimension_numbers<[1], [0], [0], [1], [0, 0, 1, 1], [], []>} : vector<96x64xbf16>, vector<64x192xbf16>, vector<96x192xf32> -> vector<96x192xf32>
    %130 = arith.addf %124, %129 : vector<96x192xf32>
    %c0_64 = arith.constant 0 : index
    %c0_65 = arith.constant 0 : index
    %131 = vector.load %arg12[%c0_64, %c0_65] : memref<1x192xf32, #tpu.memory_space<vmem>>, vector<1x192xf32>
    %132 = vector.broadcast %131 : vector<1x192xf32> to vector<96x192xf32>
    %133 = arith.addf %130, %132 : vector<96x192xf32>
    %134 = vector.extract_strided_slice %133 {offsets = [0, 0], sizes = [96, 64], strides = [1, 1]} : vector<96x192xf32> to vector<96x64xf32>
    %135 = vector.extract_strided_slice %133 {offsets = [0, 64], sizes = [96, 64], strides = [1, 1]} : vector<96x192xf32> to vector<96x64xf32>
    %136 = vector.extract_strided_slice %133 {offsets = [0, 128], sizes = [96, 64], strides = [1, 1]} : vector<96x192xf32> to vector<96x64xf32>
    %137 = arith.negf %135 : vector<96x64xf32>
    %138 = math.exp %137 : vector<96x64xf32>
    %cst_66 = arith.constant 1.000000e+00 : f32
    %139 = vector.broadcast %cst_66 : f32 to vector<96x64xf32>
    %140 = arith.addf %139, %138 : vector<96x64xf32>
    %141 = arith.divf %139, %140 : vector<96x64xf32>
    %142 = arith.mulf %134, %141 : vector<96x64xf32>
    %143 = arith.addf %142, %136 : vector<96x64xf32>
    %cst_67 = arith.constant 0.000000e+00 : f32
    %144 = vector.broadcast %cst_67 : f32 to vector<96x64xf32>
    %145 = arith.maximumf %143, %144 : vector<96x64xf32>
    %146 = vector.shape_cast %145 : vector<96x64xf32> to vector<2x6x8x64xf32>
    %147 = arith.truncf %146 : vector<2x6x8x64xf32> to vector<2x6x8x64xbf16>
    %148 = vector.shape_cast %147 : vector<2x6x8x64xbf16> to vector<96x64xbf16>
    %c0_68 = arith.constant 0 : index
    %c0_69 = arith.constant 0 : index
    %149 = vector.load %arg13[%c0_68, %c0_69] : memref<64x16xbf16, #tpu.memory_space<vmem>>, vector<64x16xbf16>
    %cst_70 = arith.constant dense<0.000000e+00> : vector<96x16xf32>
    %150 = tpu.matmul %148, %149, %cst_70 {dimension_numbers = #tpu.dot_dimension_numbers<[1], [0], [0], [1], [0, 0, 1, 1], [], []>} : vector<96x64xbf16>, vector<64x16xbf16>, vector<96x16xf32> -> vector<96x16xf32>
    %c0_71 = arith.constant 0 : index
    %c0_72 = arith.constant 0 : index
    %151 = vector.load %arg14[%c0_71, %c0_72] : memref<96x96xbf16, #tpu.memory_space<vmem>>, vector<96x96xbf16>
    %152 = arith.truncf %150 : vector<96x16xf32> to vector<96x16xbf16>
    %cst_73 = arith.constant dense<0.000000e+00> : vector<96x16xf32>
    %153 = tpu.matmul %151, %152, %cst_73 {dimension_numbers = #tpu.dot_dimension_numbers<[1], [0], [0], [1], [0, 0, 1, 1], [], []>} : vector<96x96xbf16>, vector<96x16xbf16>, vector<96x16xf32> -> vector<96x16xf32>
    %cst_74 = arith.constant 0.000000e+00 : f32
    %154 = vector.broadcast %cst_74 : f32 to vector<96x16xf32>
    %155 = arith.maximumf %153, %154 : vector<96x16xf32>
    %156 = vector.shape_cast %155 : vector<96x16xf32> to vector<2x6x8x16xf32>
    %157 = arith.truncf %156 : vector<2x6x8x16xf32> to vector<2x6x8x16xbf16>
    %cst_75 = arith.constant 0.000000e+00 : f32
    %158 = vector.broadcast %cst_75 : f32 to vector<64x192xf32>
    %159 = vector.extract_strided_slice %157 {offsets = [0, 0, 0, 0], sizes = [2, 4, 8, 16], strides = [1, 1, 1, 1]} : vector<2x6x8x16xbf16> to vector<2x4x8x16xbf16>
    %160 = vector.shape_cast %159 : vector<2x4x8x16xbf16> to vector<64x16xbf16>
    %c0_76 = arith.constant 0 : index
    %c0_77 = arith.constant 0 : index
    %c0_78 = arith.constant 0 : index
    %161 = vector.load %arg15[%c0_76, %c0_77, %c0_78] : memref<3x16x192xbf16, #tpu.memory_space<vmem>>, vector<1x16x192xbf16>
    %162 = vector.shape_cast %161 : vector<1x16x192xbf16> to vector<16x192xbf16>
    %cst_79 = arith.constant dense<0.000000e+00> : vector<64x192xf32>
    %163 = tpu.matmul %160, %162, %cst_79 {dimension_numbers = #tpu.dot_dimension_numbers<[1], [0], [0], [1], [0, 0, 1, 1], [], []>} : vector<64x16xbf16>, vector<16x192xbf16>, vector<64x192xf32> -> vector<64x192xf32>
    %164 = arith.addf %158, %163 : vector<64x192xf32>
    %165 = vector.extract_strided_slice %157 {offsets = [0, 1, 0, 0], sizes = [2, 4, 8, 16], strides = [1, 1, 1, 1]} : vector<2x6x8x16xbf16> to vector<2x4x8x16xbf16>
    %166 = vector.shape_cast %165 : vector<2x4x8x16xbf16> to vector<64x16xbf16>
    %c1_80 = arith.constant 1 : index
    %c0_81 = arith.constant 0 : index
    %c0_82 = arith.constant 0 : index
    %167 = vector.load %arg15[%c1_80, %c0_81, %c0_82] : memref<3x16x192xbf16, #tpu.memory_space<vmem>>, vector<1x16x192xbf16>
    %168 = vector.shape_cast %167 : vector<1x16x192xbf16> to vector<16x192xbf16>
    %cst_83 = arith.constant dense<0.000000e+00> : vector<64x192xf32>
    %169 = tpu.matmul %166, %168, %cst_83 {dimension_numbers = #tpu.dot_dimension_numbers<[1], [0], [0], [1], [0, 0, 1, 1], [], []>} : vector<64x16xbf16>, vector<16x192xbf16>, vector<64x192xf32> -> vector<64x192xf32>
    %170 = arith.addf %164, %169 : vector<64x192xf32>
    %171 = vector.extract_strided_slice %157 {offsets = [0, 2, 0, 0], sizes = [2, 4, 8, 16], strides = [1, 1, 1, 1]} : vector<2x6x8x16xbf16> to vector<2x4x8x16xbf16>
    %172 = vector.shape_cast %171 : vector<2x4x8x16xbf16> to vector<64x16xbf16>
    %c2_84 = arith.constant 2 : index
    %c0_85 = arith.constant 0 : index
    %c0_86 = arith.constant 0 : index
    %173 = vector.load %arg15[%c2_84, %c0_85, %c0_86] : memref<3x16x192xbf16, #tpu.memory_space<vmem>>, vector<1x16x192xbf16>
    %174 = vector.shape_cast %173 : vector<1x16x192xbf16> to vector<16x192xbf16>
    %cst_87 = arith.constant dense<0.000000e+00> : vector<64x192xf32>
    %175 = tpu.matmul %172, %174, %cst_87 {dimension_numbers = #tpu.dot_dimension_numbers<[1], [0], [0], [1], [0, 0, 1, 1], [], []>} : vector<64x16xbf16>, vector<16x192xbf16>, vector<64x192xf32> -> vector<64x192xf32>
    %176 = arith.addf %170, %175 : vector<64x192xf32>
    %c0_88 = arith.constant 0 : index
    %c0_89 = arith.constant 0 : index
    %177 = vector.load %arg16[%c0_88, %c0_89] : memref<1x192xf32, #tpu.memory_space<vmem>>, vector<1x192xf32>
    %178 = vector.broadcast %177 : vector<1x192xf32> to vector<64x192xf32>
    %179 = arith.addf %176, %178 : vector<64x192xf32>
    %180 = vector.extract_strided_slice %179 {offsets = [0, 0], sizes = [64, 64], strides = [1, 1]} : vector<64x192xf32> to vector<64x64xf32>
    %181 = vector.extract_strided_slice %179 {offsets = [0, 64], sizes = [64, 64], strides = [1, 1]} : vector<64x192xf32> to vector<64x64xf32>
    %182 = vector.extract_strided_slice %179 {offsets = [0, 128], sizes = [64, 64], strides = [1, 1]} : vector<64x192xf32> to vector<64x64xf32>
    %183 = arith.negf %181 : vector<64x64xf32>
    %184 = math.exp %183 : vector<64x64xf32>
    %cst_90 = arith.constant 1.000000e+00 : f32
    %185 = vector.broadcast %cst_90 : f32 to vector<64x64xf32>
    %186 = arith.addf %185, %184 : vector<64x64xf32>
    %187 = arith.divf %185, %186 : vector<64x64xf32>
    %188 = arith.mulf %180, %187 : vector<64x64xf32>
    %189 = arith.addf %188, %182 : vector<64x64xf32>
    %cst_91 = arith.constant 0.000000e+00 : f32
    %190 = vector.broadcast %cst_91 : f32 to vector<64x64xf32>
    %191 = arith.maximumf %189, %190 : vector<64x64xf32>
    %192 = vector.shape_cast %191 : vector<64x64xf32> to vector<2x4x8x64xf32>
    %cst_92 = arith.constant dense<0.000000e+00> : vector<2x4x8xf32>
    %193 = vector.multi_reduction <add>, %192, %cst_92 [3] : vector<2x4x8x64xf32> to vector<2x4x8xf32>
    %194 = vector.shape_cast %193 : vector<2x4x8xf32> to vector<2x4x8x1xf32>
    %cst_93 = arith.constant dense<0.000000e+00> : vector<2x8x1xf32>
    %195 = vector.multi_reduction <add>, %194, %cst_93 [1] : vector<2x4x8x1xf32> to vector<2x8x1xf32>
    %196 = vector.shape_cast %195 : vector<2x8x1xf32> to vector<2x1x8x1xf32>
    %cst_94 = arith.constant dense<0.000000e+00> : vector<1x8x1xf32>
    %197 = vector.multi_reduction <add>, %196, %cst_94 [0] : vector<2x1x8x1xf32> to vector<1x8x1xf32>
    %198 = vector.shape_cast %197 : vector<1x8x1xf32> to vector<1x1x8x1xf32>
    %199 = arith.mulf %192, %192 : vector<2x4x8x64xf32>
    %cst_95 = arith.constant dense<0.000000e+00> : vector<2x4x8xf32>
    %200 = vector.multi_reduction <add>, %199, %cst_95 [3] : vector<2x4x8x64xf32> to vector<2x4x8xf32>
    %201 = vector.shape_cast %200 : vector<2x4x8xf32> to vector<2x4x8x1xf32>
    %cst_96 = arith.constant dense<0.000000e+00> : vector<2x8x1xf32>
    %202 = vector.multi_reduction <add>, %201, %cst_96 [1] : vector<2x4x8x1xf32> to vector<2x8x1xf32>
    %203 = vector.shape_cast %202 : vector<2x8x1xf32> to vector<2x1x8x1xf32>
    %cst_97 = arith.constant dense<0.000000e+00> : vector<1x8x1xf32>
    %204 = vector.multi_reduction <add>, %203, %cst_97 [0] : vector<2x1x8x1xf32> to vector<1x8x1xf32>
    %205 = vector.shape_cast %204 : vector<1x8x1xf32> to vector<1x1x8x1xf32>
    %cst_98 = arith.constant 5.120000e+02 : f32
    %206 = vector.broadcast %cst_98 : f32 to vector<1x1x8x1xf32>
    %207 = arith.divf %198, %206 : vector<1x1x8x1xf32>
    %cst_99 = arith.constant 5.120000e+02 : f32
    %208 = vector.broadcast %cst_99 : f32 to vector<1x1x8x1xf32>
    %209 = arith.divf %205, %208 : vector<1x1x8x1xf32>
    %210 = arith.mulf %207, %207 : vector<1x1x8x1xf32>
    %211 = arith.subf %209, %210 : vector<1x1x8x1xf32>
    %cst_100 = arith.constant 0.000000e+00 : f32
    %212 = vector.broadcast %cst_100 : f32 to vector<1x1x8x1xf32>
    %213 = arith.maximumf %211, %212 : vector<1x1x8x1xf32>
    %214 = vector.broadcast %207 : vector<1x1x8x1xf32> to vector<2x4x8x64xf32>
    %215 = arith.subf %192, %214 : vector<2x4x8x64xf32>
    %cst_101 = arith.constant 9.99999974E-6 : f32
    %216 = vector.broadcast %cst_101 : f32 to vector<1x1x8x1xf32>
    %217 = arith.addf %213, %216 : vector<1x1x8x1xf32>
    %218 = math.rsqrt %217 : vector<1x1x8x1xf32>
    %219 = vector.broadcast %218 : vector<1x1x8x1xf32> to vector<2x4x8x64xf32>
    %220 = arith.mulf %215, %219 : vector<2x4x8x64xf32>
    %221 = arith.truncf %220 : vector<2x4x8x64xf32> to vector<2x4x8x64xbf16>
    %cst_102 = arith.constant 0.000000e+00 : f32
    %222 = vector.broadcast %cst_102 : f32 to vector<32x192xf32>
    %223 = vector.extract_strided_slice %221 {offsets = [0, 0, 0, 0], sizes = [2, 2, 8, 64], strides = [1, 1, 1, 1]} : vector<2x4x8x64xbf16> to vector<2x2x8x64xbf16>
    %224 = vector.shape_cast %223 : vector<2x2x8x64xbf16> to vector<32x64xbf16>
    %c0_103 = arith.constant 0 : index
    %c0_104 = arith.constant 0 : index
    %c0_105 = arith.constant 0 : index
    %225 = vector.load %arg17[%c0_103, %c0_104, %c0_105] : memref<3x64x192xbf16, #tpu.memory_space<vmem>>, vector<1x64x192xbf16>
    %226 = vector.shape_cast %225 : vector<1x64x192xbf16> to vector<64x192xbf16>
    %cst_106 = arith.constant dense<0.000000e+00> : vector<32x192xf32>
    %227 = tpu.matmul %224, %226, %cst_106 {dimension_numbers = #tpu.dot_dimension_numbers<[1], [0], [0], [1], [0, 0, 1, 1], [], []>} : vector<32x64xbf16>, vector<64x192xbf16>, vector<32x192xf32> -> vector<32x192xf32>
    %228 = arith.addf %222, %227 : vector<32x192xf32>
    %229 = vector.extract_strided_slice %221 {offsets = [0, 1, 0, 0], sizes = [2, 2, 8, 64], strides = [1, 1, 1, 1]} : vector<2x4x8x64xbf16> to vector<2x2x8x64xbf16>
    %230 = vector.shape_cast %229 : vector<2x2x8x64xbf16> to vector<32x64xbf16>
    %c1_107 = arith.constant 1 : index
    %c0_108 = arith.constant 0 : index
    %c0_109 = arith.constant 0 : index
    %231 = vector.load %arg17[%c1_107, %c0_108, %c0_109] : memref<3x64x192xbf16, #tpu.memory_space<vmem>>, vector<1x64x192xbf16>
    %232 = vector.shape_cast %231 : vector<1x64x192xbf16> to vector<64x192xbf16>
    %cst_110 = arith.constant dense<0.000000e+00> : vector<32x192xf32>
    %233 = tpu.matmul %230, %232, %cst_110 {dimension_numbers = #tpu.dot_dimension_numbers<[1], [0], [0], [1], [0, 0, 1, 1], [], []>} : vector<32x64xbf16>, vector<64x192xbf16>, vector<32x192xf32> -> vector<32x192xf32>
    %234 = arith.addf %228, %233 : vector<32x192xf32>
    %235 = vector.extract_strided_slice %221 {offsets = [0, 2, 0, 0], sizes = [2, 2, 8, 64], strides = [1, 1, 1, 1]} : vector<2x4x8x64xbf16> to vector<2x2x8x64xbf16>
    %236 = vector.shape_cast %235 : vector<2x2x8x64xbf16> to vector<32x64xbf16>
    %c2_111 = arith.constant 2 : index
    %c0_112 = arith.constant 0 : index
    %c0_113 = arith.constant 0 : index
    %237 = vector.load %arg17[%c2_111, %c0_112, %c0_113] : memref<3x64x192xbf16, #tpu.memory_space<vmem>>, vector<1x64x192xbf16>
    %238 = vector.shape_cast %237 : vector<1x64x192xbf16> to vector<64x192xbf16>
    %cst_114 = arith.constant dense<0.000000e+00> : vector<32x192xf32>
    %239 = tpu.matmul %236, %238, %cst_114 {dimension_numbers = #tpu.dot_dimension_numbers<[1], [0], [0], [1], [0, 0, 1, 1], [], []>} : vector<32x64xbf16>, vector<64x192xbf16>, vector<32x192xf32> -> vector<32x192xf32>
    %240 = arith.addf %234, %239 : vector<32x192xf32>
    %c0_115 = arith.constant 0 : index
    %c0_116 = arith.constant 0 : index
    %241 = vector.load %arg18[%c0_115, %c0_116] : memref<1x192xf32, #tpu.memory_space<vmem>>, vector<1x192xf32>
    %242 = vector.broadcast %241 : vector<1x192xf32> to vector<32x192xf32>
    %243 = arith.addf %240, %242 : vector<32x192xf32>
    %244 = vector.extract_strided_slice %243 {offsets = [0, 0], sizes = [32, 64], strides = [1, 1]} : vector<32x192xf32> to vector<32x64xf32>
    %245 = vector.extract_strided_slice %243 {offsets = [0, 64], sizes = [32, 64], strides = [1, 1]} : vector<32x192xf32> to vector<32x64xf32>
    %246 = vector.extract_strided_slice %243 {offsets = [0, 128], sizes = [32, 64], strides = [1, 1]} : vector<32x192xf32> to vector<32x64xf32>
    %247 = arith.negf %245 : vector<32x64xf32>
    %248 = math.exp %247 : vector<32x64xf32>
    %cst_117 = arith.constant 1.000000e+00 : f32
    %249 = vector.broadcast %cst_117 : f32 to vector<32x64xf32>
    %250 = arith.addf %249, %248 : vector<32x64xf32>
    %251 = arith.divf %249, %250 : vector<32x64xf32>
    %252 = arith.mulf %244, %251 : vector<32x64xf32>
    %253 = arith.addf %252, %246 : vector<32x64xf32>
    %cst_118 = arith.constant 0.000000e+00 : f32
    %254 = vector.broadcast %cst_118 : f32 to vector<32x64xf32>
    %255 = arith.maximumf %253, %254 : vector<32x64xf32>
    %256 = vector.shape_cast %255 : vector<32x64xf32> to vector<2x2x8x64xf32>
    %257 = vector.extract_strided_slice %256 {offsets = [0, 0, 0, 0], sizes = [2, 1, 8, 64], strides = [1, 1, 1, 1]} : vector<2x2x8x64xf32> to vector<2x1x8x64xf32>
    %258 = vector.shape_cast %257 : vector<2x1x8x64xf32> to vector<2x8x64xf32>
    %259 = vector.extract_strided_slice %256 {offsets = [0, 1, 0, 0], sizes = [2, 1, 8, 64], strides = [1, 1, 1, 1]} : vector<2x2x8x64xf32> to vector<2x1x8x64xf32>
    %260 = vector.shape_cast %259 : vector<2x1x8x64xf32> to vector<2x8x64xf32>
    %261 = tpu.concatenate %258, %260 in 2 : vector<2x8x64xf32>, vector<2x8x64xf32> -> vector<2x8x128xf32>
    %262 = vector.shape_cast %261 : vector<2x8x128xf32> to vector<16x128xf32>
    %263 = arith.truncf %262 : vector<16x128xf32> to vector<16x128xbf16>
    %c0_119 = arith.constant 0 : index
    %c0_120 = arith.constant 0 : index
    %264 = vector.load %arg19[%c0_119, %c0_120] : memref<128x12xbf16, #tpu.memory_space<vmem>>, vector<128x12xbf16>
    %cst_121 = arith.constant dense<0.000000e+00> : vector<16x12xf32>
    %265 = tpu.matmul %263, %264, %cst_121 {dimension_numbers = #tpu.dot_dimension_numbers<[1], [0], [0], [1], [0, 0, 1, 1], [], []>} : vector<16x128xbf16>, vector<128x12xbf16>, vector<16x12xf32> -> vector<16x12xf32>
    %c0_122 = arith.constant 0 : index
    %c0_123 = arith.constant 0 : index
    %266 = vector.load %arg20[%c0_122, %c0_123] : memref<1x12xf32, #tpu.memory_space<vmem>>, vector<1x12xf32>
    %267 = vector.broadcast %266 : vector<1x12xf32> to vector<16x12xf32>
    %268 = arith.addf %265, %267 : vector<16x12xf32>
    %269 = vector.shape_cast %268 : vector<16x12xf32> to vector<2x8x12xf32>
    %c0_i32 = arith.constant 0 : i32
    %270 = arith.cmpi eq, %arg0, %c0_i32 : i32
    %271 = arith.extui %270 : i1 to i32
    %c0_i32_124 = arith.constant 0 : i32
    %272 = arith.cmpi ne, %271, %c0_i32_124 : i32
    scf.if %272 {
      %c0_126 = arith.constant 0 : index
      %c0_127 = arith.constant 0 : index
      %c0_128 = arith.constant 0 : index
      %276 = vector.load %arg25[%c0_126, %c0_127, %c0_128] : memref<2x8x12xf32, #tpu.memory_space<vmem>>, vector<2x8x12xf32>
      tpu.vector_store %arg25[%c0_126, %c0_127, %c0_128], %269 {strides = array<i32>} : memref<2x8x12xf32, #tpu.memory_space<vmem>>, vector<2x8x12xf32>,
    } else {
    }
    %c1_i32 = arith.constant 1 : i32
    %273 = arith.cmpi eq, %arg0, %c1_i32 : i32
    %274 = arith.extui %273 : i1 to i32
    %c0_i32_125 = arith.constant 0 : i32
    %275 = arith.cmpi ne, %274, %c0_i32_125 : i32
    scf.if %275 {
      %c0_126 = arith.constant 0 : index
      %c0_127 = arith.constant 0 : index
      %c0_128 = arith.constant 0 : index
      %276 = vector.load %arg4[%c0_126, %c0_127, %c0_128] : memref<2x8x12xf32, #tpu.memory_space<vmem>>, vector<2x8x12xf32>
      %cst_129 = arith.constant 5.000000e+00 : f32
      %277 = vector.broadcast %cst_129 : f32 to vector<2x8x12xf32>
      %278 = arith.subf %276, %277 : vector<2x8x12xf32>
      %cst_130 = arith.constant 2.000000e+00 : f32
      %279 = vector.broadcast %cst_130 : f32 to vector<2x8x12xf32>
      %280 = arith.divf %278, %279 : vector<2x8x12xf32>
      %281 = arith.subf %280, %269 : vector<2x8x12xf32>
      %cst_131 = arith.constant 0.000000e+00 : f32
      %282 = vector.broadcast %cst_131 : f32 to vector<2x8x12xf32>
      %283 = arith.cmpf one, %276, %282 : vector<2x8x12xf32>
      %284 = arith.extui %283 : vector<2x8x12xi1> to vector<2x8x12xi32>
      %285 = arith.sitofp %284 : vector<2x8x12xi32> to vector<2x8x12xf32>
      %286 = arith.mulf %281, %285 : vector<2x8x12xf32>
      %287 = vector.shape_cast %286 : vector<2x8x12xf32> to vector<16x12xf32>
      %c0_132 = arith.constant 0 : index
      %c0_133 = arith.constant 0 : index
      %288 = vector.load %arg21[%c0_132, %c0_133] : memref<12x12xf32, #tpu.memory_space<vmem>>, vector<12x12xf32>
      %cst_134 = arith.constant dense<0.000000e+00> : vector<16x12xf32>
      %289 = tpu.matmul %287, %288, %cst_134 {dimension_numbers = #tpu.dot_dimension_numbers<[1], [0], [0], [1], [0, 0, 1, 1], [], []>} : vector<16x12xf32>, vector<12x12xf32>, vector<16x12xf32> -> vector<16x12xf32>
      %c0_135 = arith.constant 0 : index
      %c0_136 = arith.constant 0 : index
      %290 = vector.load %arg22[%c0_135, %c0_136] : memref<16x16xf32, #tpu.memory_space<vmem>>, vector<16x16xf32>
      %cst_137 = arith.constant dense<0.000000e+00> : vector<16x12xf32>
      %291 = tpu.matmul %290, %289, %cst_137 {dimension_numbers = #tpu.dot_dimension_numbers<[1], [0], [0], [1], [0, 0, 1, 1], [], []>} : vector<16x16xf32>, vector<16x12xf32>, vector<16x12xf32> -> vector<16x12xf32>
      %292 = vector.shape_cast %291 : vector<16x12xf32> to vector<2x8x12xf32>
      %c0_138 = arith.constant 0 : index
      %c0_139 = arith.constant 0 : index
      %c0_140 = arith.constant 0 : index
      %293 = vector.load %arg25[%c0_138, %c0_139, %c0_140] : memref<2x8x12xf32, #tpu.memory_space<vmem>>, vector<2x8x12xf32>
      %294 = arith.addf %293, %292 : vector<2x8x12xf32>
      %c0_141 = arith.constant 0 : index
      %c0_142 = arith.constant 0 : index
      %c0_143 = arith.constant 0 : index
      %295 = vector.load %arg23[%c0_141, %c0_142, %c0_143] : memref<2x8x12xf32, #tpu.memory_space<vmem>>, vector<2x8x12xf32>
      tpu.vector_store %arg23[%c0_141, %c0_142, %c0_143], %294 {strides = array<i32>} : memref<2x8x12xf32, #tpu.memory_space<vmem>>, vector<2x8x12xf32>,
      %c0_144 = arith.constant 0 : index
      %c0_145 = arith.constant 0 : index
      %c0_146 = arith.constant 0 : index
      %296 = vector.load %arg3[%c0_144, %c0_145, %c0_146] : memref<2x8x12xf32, #tpu.memory_space<vmem>>, vector<2x8x12xf32>
      %cst_147 = arith.constant 5.000000e+00 : f32
      %297 = vector.broadcast %cst_147 : f32 to vector<2x8x12xf32>
      %298 = arith.subf %296, %297 : vector<2x8x12xf32>
      %cst_148 = arith.constant 2.000000e+00 : f32
      %299 = vector.broadcast %cst_148 : f32 to vector<2x8x12xf32>
      %300 = arith.divf %298, %299 : vector<2x8x12xf32>
      %301 = arith.subf %300, %294 : vector<2x8x12xf32>
      %cst_149 = arith.constant 0.000000e+00 : f32
      %302 = vector.broadcast %cst_149 : f32 to vector<2x8x12xf32>
      %303 = arith.cmpf one, %296, %302 : vector<2x8x12xf32>
      %304 = arith.extui %303 : vector<2x8x12xi1> to vector<2x8x12xi32>
      %305 = arith.sitofp %304 : vector<2x8x12xi32> to vector<2x8x12xf32>
      %306 = arith.mulf %301, %305 : vector<2x8x12xf32>
      %307 = arith.mulf %306, %306 : vector<2x8x12xf32>
      %cst_150 = arith.constant dense<0.000000e+00> : vector<2x8xf32>
      %308 = vector.multi_reduction <add>, %307, %cst_150 [2] : vector<2x8x12xf32> to vector<2x8xf32>
      %309 = vector.shape_cast %308 : vector<2x8xf32> to vector<2x8x1xf32>
      %cst_151 = arith.constant dense<0.000000e+00> : vector<2x1xf32>
      %310 = vector.multi_reduction <add>, %309, %cst_151 [1] : vector<2x8x1xf32> to vector<2x1xf32>
      %311 = vector.shape_cast %310 : vector<2x1xf32> to vector<2x1x1xf32>
      %cst_152 = arith.constant dense<0.000000e+00> : vector<1x1xf32>
      %312 = vector.multi_reduction <add>, %311, %cst_152 [0] : vector<2x1x1xf32> to vector<1x1xf32>
      %313 = vector.shape_cast %312 : vector<1x1xf32> to vector<1x1x1xf32>
      %314 = vector.shape_cast %313 : vector<1x1x1xf32> to vector<1x1xf32>
      %c0_153 = arith.constant 0 : index
      %c0_154 = arith.constant 0 : index
      %315 = memref.load %arg1[%c0_153, %c0_154] : memref<1x2xf32, #tpu.memory_space<smem>>
      %c0_155 = arith.constant 0 : index
      %c1_156 = arith.constant 1 : index
      %316 = memref.load %arg1[%c0_155, %c1_156] : memref<1x2xf32, #tpu.memory_space<smem>>
      %cst_157 = arith.constant 2.000000e+00 : f32
      %317 = arith.mulf %315, %cst_157 : f32
      %318 = vector.broadcast %317 : f32 to vector<1x1xf32>
      %319 = arith.divf %314, %318 : vector<1x1xf32>
      %cst_158 = arith.constant 1.83787704 : f32
      %320 = arith.addf %cst_158, %316 : f32
      %cst_159 = arith.constant 9.600000e+01 : f32
      %321 = arith.mulf %cst_159, %320 : f32
      %322 = vector.broadcast %321 : f32 to vector<1x1xf32>
      %323 = arith.addf %319, %322 : vector<1x1xf32>
      %cst_160 = arith.constant 5.000000e-01 : f32
      %324 = vector.broadcast %cst_160 : f32 to vector<1x1xf32>
      %325 = arith.mulf %324, %323 : vector<1x1xf32>
      %c0_161 = arith.constant 0 : index
      %c0_162 = arith.constant 0 : index
      %326 = vector.load %arg24[%c0_161, %c0_162] : memref<1x1xf32, #tpu.memory_space<vmem>>, vector<1x1xf32>
      tpu.vector_store %arg24[%c0_161, %c0_162], %325 {strides = array<i32>} : memref<1x1xf32, #tpu.memory_space<vmem>>, vector<1x1xf32>,
    } else {
    }
    return
  }
  func.func @transform_0(%arg0: i32) -> (i32, i32) {
    %c0_i32 = arith.constant 0 : i32
    %c0_i32_0 = arith.constant 0 : i32
    %c0_i32_1 = arith.constant 0 : i32
    return %c0_i32, %c0_i32_0 : i32, i32
  }
  func.func @transform_1(%arg0: i32) -> (i32, i32, i32, i32) {
    %c0_i32 = arith.constant 0 : i32
    %c0_i32_0 = arith.constant 0 : i32
    %c0_i32_1 = arith.constant 0 : i32
    %c0_i32_2 = arith.constant 0 : i32
    return %arg0, %c0_i32, %c0_i32_0, %c0_i32_1 : i32, i32, i32, i32
  }
  func.func @transform_2(%arg0: i32) -> (i32, i32, i32) {
    %c0_i32 = arith.constant 0 : i32
    %c0_i32_0 = arith.constant 0 : i32
    %c0_i32_1 = arith.constant 0 : i32
    %c0_i32_2 = arith.constant 0 : i32
    return %c0_i32, %c0_i32_0, %c0_i32_1 : i32, i32, i32
  }
  func.func @transform_3(%arg0: i32) -> (i32, i32, i32) {
    %c0_i32 = arith.constant 0 : i32
    %c0_i32_0 = arith.constant 0 : i32
    %c0_i32_1 = arith.constant 0 : i32
    %c0_i32_2 = arith.constant 0 : i32
    return %c0_i32, %c0_i32_0, %c0_i32_1 : i32, i32, i32
  }
  func.func @transform_4(%arg0: i32) -> (i32, i32, i32) {
    %c0_i32 = arith.constant 0 : i32
    %c0_i32_0 = arith.constant 0 : i32
    %c0_i32_1 = arith.constant 0 : i32
    %c0_i32_2 = arith.constant 0 : i32
    return %c0_i32, %c0_i32_0, %c0_i32_1 : i32, i32, i32
  }
  func.func @transform_5(%arg0: i32) -> (i32, i32) {
    %c0_i32 = arith.constant 0 : i32
    %c0_i32_0 = arith.constant 0 : i32
    %c0_i32_1 = arith.constant 0 : i32
    return %c0_i32, %c0_i32_0 : i32, i32
  }
  func.func @transform_6(%arg0: i32) -> (i32, i32) {
    %c0_i32 = arith.constant 0 : i32
    %c0_i32_0 = arith.constant 0 : i32
    %c0_i32_1 = arith.constant 0 : i32
    return %c0_i32, %c0_i32_0 : i32, i32
  }
  func.func @transform_7(%arg0: i32) -> (i32, i32) {
    %c0_i32 = arith.constant 0 : i32
    %c0_i32_0 = arith.constant 0 : i32
    %c0_i32_1 = arith.constant 0 : i32
    return %c0_i32, %c0_i32_0 : i32, i32
  }
  func.func @transform_8(%arg0: i32) -> (i32, i32, i32) {
    %c0_i32 = arith.constant 0 : i32
    %c0_i32_0 = arith.constant 0 : i32
    %c0_i32_1 = arith.constant 0 : i32
    %c0_i32_2 = arith.constant 0 : i32
    return %c0_i32, %c0_i32_0, %c0_i32_1 : i32, i32, i32
  }
  func.func @transform_9(%arg0: i32) -> (i32, i32) {
    %c0_i32 = arith.constant 0 : i32
    %c0_i32_0 = arith.constant 0 : i32
    %c0_i32_1 = arith.constant 0 : i32
    return %c0_i32, %c0_i32_0 : i32, i32
  }
  func.func @transform_10(%arg0: i32) -> (i32, i32, i32) {
    %c0_i32 = arith.constant 0 : i32
    %c0_i32_0 = arith.constant 0 : i32
    %c0_i32_1 = arith.constant 0 : i32
    %c0_i32_2 = arith.constant 0 : i32
    return %c0_i32, %c0_i32_0, %c0_i32_1 : i32, i32, i32
  }
  func.func @transform_11(%arg0: i32) -> (i32, i32) {
    %c0_i32 = arith.constant 0 : i32
    %c0_i32_0 = arith.constant 0 : i32
    %c0_i32_1 = arith.constant 0 : i32
    return %c0_i32, %c0_i32_0 : i32, i32
  }
  func.func @transform_12(%arg0: i32) -> (i32, i32) {
    %c0_i32 = arith.constant 0 : i32
    %c0_i32_0 = arith.constant 0 : i32
    %c0_i32_1 = arith.constant 0 : i32
    return %c0_i32, %c0_i32_0 : i32, i32
  }
  func.func @transform_13(%arg0: i32) -> (i32, i32) {
    %c0_i32 = arith.constant 0 : i32
    %c0_i32_0 = arith.constant 0 : i32
    %c0_i32_1 = arith.constant 0 : i32
    return %c0_i32, %c0_i32_0 : i32, i32
  }
  func.func @transform_14(%arg0: i32) -> (i32, i32, i32) {
    %c0_i32 = arith.constant 0 : i32
    %c0_i32_0 = arith.constant 0 : i32
    %c0_i32_1 = arith.constant 0 : i32
    %c0_i32_2 = arith.constant 0 : i32
    return %c0_i32, %c0_i32_0, %c0_i32_1 : i32, i32, i32
  }
  func.func @transform_15(%arg0: i32) -> (i32, i32) {
    %c0_i32 = arith.constant 0 : i32
    %c0_i32_0 = arith.constant 0 : i32
    %c0_i32_1 = arith.constant 0 : i32
    return %c0_i32, %c0_i32_0 : i32, i32
  }
  func.func @transform_16(%arg0: i32) -> (i32, i32, i32) {
    %c0_i32 = arith.constant 0 : i32
    %c0_i32_0 = arith.constant 0 : i32
    %c0_i32_1 = arith.constant 0 : i32
    %c0_i32_2 = arith.constant 0 : i32
    return %c0_i32, %c0_i32_0, %c0_i32_1 : i32, i32, i32
  }
  func.func @transform_17(%arg0: i32) -> (i32, i32) {
    %c0_i32 = arith.constant 0 : i32
    %c0_i32_0 = arith.constant 0 : i32
    %c0_i32_1 = arith.constant 0 : i32
    return %c0_i32, %c0_i32_0 : i32, i32
  }
  func.func @transform_18(%arg0: i32) -> (i32, i32) {
    %c0_i32 = arith.constant 0 : i32
    %c0_i32_0 = arith.constant 0 : i32
    %c0_i32_1 = arith.constant 0 : i32
    return %c0_i32, %c0_i32_0 : i32, i32
  }
  func.func @transform_19(%arg0: i32) -> (i32, i32) {
    %c0_i32 = arith.constant 0 : i32
    %c0_i32_0 = arith.constant 0 : i32
    %c0_i32_1 = arith.constant 0 : i32
    return %c0_i32, %c0_i32_0 : i32, i32
  }
  func.func @transform_20(%arg0: i32) -> (i32, i32) {
    %c0_i32 = arith.constant 0 : i32
    %c0_i32_0 = arith.constant 0 : i32
    %c0_i32_1 = arith.constant 0 : i32
    return %c0_i32, %c0_i32_0 : i32, i32
  }
  func.func @transform_21(%arg0: i32) -> (i32, i32) {
    %c0_i32 = arith.constant 0 : i32
    %c0_i32_0 = arith.constant 0 : i32
    %c0_i32_1 = arith.constant 0 : i32
    return %c0_i32, %c0_i32_0 : i32, i32
  }
  func.func @transform_22(%arg0: i32) -> (i32, i32, i32) {
    %c0_i32 = arith.constant 0 : i32
    %c0_i32_0 = arith.constant 0 : i32
    %c0_i32_1 = arith.constant 0 : i32
    %c0_i32_2 = arith.constant 0 : i32
    return %c0_i32, %c0_i32_0, %c0_i32_1 : i32, i32, i32
  }
  func.func @transform_23(%arg0: i32) -> (i32, i32) {
    %c0_i32 = arith.constant 0 : i32
    %c0_i32_0 = arith.constant 0 : i32
    %c0_i32_1 = arith.constant 0 : i32
    return %c0_i32, %c0_i32_0 : i32, i32
  }
}

</mosaic_0001>

<llo_original>
// kernel: _dynamic_reg_forward_impl.1
$region0: #{_dynamic_reg_forward_impl.1}
  #allocation0 [shape = 'u32[]', space=smem, size = 0x4, offset = 0x4, fixed_abs, tag = 'smem constant byte address 0x4 - core index']
  #allocation1 [shape = 'u32[144,128]{1,0:T(1,128)}', space=vmem, size = 0x12000, scoped, tag = 'internal scratch']
  #allocation2 [shape = 'f32[2,8,12]{2,1,0:T(8,128)}', space=vmem, size = 0x2000, scoped, tag = 'scratch operand']
  %s0 = inlined_call_operand.vmem [shape: f32[1,2], index: 0, kind: input, shape index: {}]
  %s1 = inlined_call_operand.vmem [shape: f32[4,12,8,2], index: 1, kind: input, shape index: {}]
  %s2 = inlined_call_operand.vmem [shape: f32[2,8,12], index: 2, kind: input, shape index: {}]
  %s3 = inlined_call_operand.vmem [shape: f32[2,8,12], index: 3, kind: input, shape index: {}]
  %s4 = inlined_call_operand.vmem [shape: bf16[3,2,192], index: 4, kind: input, shape index: {}]
  %s5 = inlined_call_operand.vmem [shape: f32[1,192], index: 5, kind: input, shape index: {}]
  %s6 = inlined_call_operand.vmem [shape: bf16[64,16], index: 6, kind: input, shape index: {}]
  %s7 = inlined_call_operand.vmem [shape: bf16[160,160], index: 7, kind: input, shape index: {}]
  %s8 = inlined_call_operand.vmem [shape: bf16[3,16,192], index: 8, kind: input, shape index: {}]
  %s9 = inlined_call_operand.vmem [shape: f32[1,192], index: 9, kind: input, shape index: {}]
  %s10 = inlined_call_operand.vmem [shape: bf16[3,64,192], index: 10, kind: input, shape index: {}]
  %s11 = inlined_call_operand.vmem [shape: f32[1,192], index: 11, kind: input, shape index: {}]
  %s12 = inlined_call_operand.vmem [shape: bf16[64,16], index: 12, kind: input, shape index: {}]
  %s13 = inlined_call_operand.vmem [shape: bf16[96,96], index: 13, kind: input, shape index: {}]
  %s14 = inlined_call_operand.vmem [shape: bf16[3,16,192], index: 14, kind: input, shape index: {}]
  %s15 = inlined_call_operand.vmem [shape: f32[1,192], index: 15, kind: input, shape index: {}]
  %s16 = inlined_call_operand.vmem [shape: bf16[3,64,192], index: 16, kind: input, shape index: {}]
  %s17 = inlined_call_operand.vmem [shape: f32[1,192], index: 17, kind: input, shape index: {}]
  %s18 = inlined_call_operand.vmem [shape: bf16[128,12], index: 18, kind: input, shape index: {}]
  %s19 = inlined_call_operand.vmem [shape: f32[1,12], index: 19, kind: input, shape index: {}]
  %s20 = inlined_call_operand.vmem [shape: f32[12,12], index: 20, kind: input, shape index: {}]
  %s21 = inlined_call_operand.vmem [shape: f32[16,16], index: 21, kind: input, shape index: {}]
  %s22 = inlined_call_operand.hbm [shape: f32[2,8,12], index: 22, kind: output, shape index: {0}]
  %s23 = inlined_call_operand.hbm [shape: f32[1,1], index: 23, kind: output, shape index: {1}]
  %24 = xla_tuple %s22, %s23
  %s25 = sld [smem:[#allocation0]]
  $region141: #{_dynamic_reg_forward_impl.1} parent=0
    _
  %s27 = ssub.s32 1, %s25
  %s28 = scalar_select 0, %s27, %s25
  $region1: #{_dynamic_reg_forward_impl.1} parent=0
    #allocation3 [shape = 'u8[512]{0}', space=smem, size = 0x200, scoped, tag = 'input window, operand 0, single buffered']
    #allocation4 [shape = 's32[2]{0}', space=sflag, size = 0x8, scoped, tag = 'scoped memory for _dynamic_reg_forward_impl.1']
    #allocation5 [shape = 's32[2]{0}', space=sflag, size = 0x8, scoped, tag = 'scoped memory for _dynamic_reg_forward_impl.1']
    #allocation6 [shape = 'u8[8192]{0}', space=vmem, size = 0x2000, scoped, tag = 'output window, operand 0, single buffered']
    #allocation7 [shape = 'u8[512]{0}', space=vmem, size = 0x400, scoped, tag = 'output window, operand 1, single buffered']
    #allocation8 [shape = 's32[1]{0}', space=sflag, size = 0x4, scoped, tag = 'scoped memory for _dynamic_reg_forward_impl.1']
    %29 = vsyncpa [#allocation5], 0
    %30 = vsyncpa [#allocation4], 0
    %31 = vsyncpa [#allocation8], 0
    loop: start=0, step=1, limit=4
    $region2: #{_dynamic_reg_forward_impl.1} parent=1 // loop_pre_header
      _
    $region3: #{_dynamic_reg_forward_impl.1} parent=1 // loop_header
      %s33 = sphi 0, %s37
      %p34 = scmp.ge.s32.totalorder %s33, 4
      %s41 = sphi 0, %s41
      %s43 = sphi 0, %s41
      %s44 = sphi 0, %s43
      %s58 = sphi 0, %s44
      %s64 = sphi 0, %s66
      %s67 = sphi 0, %s64
      %s68 = sphi 0, %s67
      %s84 = sphi 0, %s68
      %s88 = sphi 0, %s88
      %s90 = sphi 0, %s88
      %s91 = sphi 0, %s90
      %s105 = sphi 0, %s91
      %s109 = sphi 0, %s109
      %s111 = sphi 0, %s109
      %s112 = sphi 0, %s111
      %s126 = sphi 0, %s112
      %s130 = sphi 0, %s130
      %s132 = sphi 0, %s130
      %s133 = sphi 0, %s132
      %s147 = sphi 0, %s133
      %s151 = sphi 0, %s151
      %s153 = sphi 0, %s151
      %s154 = sphi 0, %s153
      %s168 = sphi 0, %s154
      %s172 = sphi 0, %s172
      %s174 = sphi 0, %s172
      %s175 = sphi 0, %s174
      %s189 = sphi 0, %s175
      %s193 = sphi 0, %s193
      %s195 = sphi 0, %s193
      %s196 = sphi 0, %s195
      %s210 = sphi 0, %s196
      %s214 = sphi 0, %s214
      %s216 = sphi 0, %s214
      %s217 = sphi 0, %s216
      %s231 = sphi 0, %s217
      %s235 = sphi 0, %s235
      %s237 = sphi 0, %s235
      %s238 = sphi 0, %s237
      %s252 = sphi 0, %s238
      %s256 = sphi 0, %s256
      %s258 = sphi 0, %s256
      %s259 = sphi 0, %s258
      %s273 = sphi 0, %s259
      %s277 = sphi 0, %s277
      %s279 = sphi 0, %s277
      %s280 = sphi 0, %s279
      %s294 = sphi 0, %s280
      %s298 = sphi 0, %s298
      %s300 = sphi 0, %s298
      %s301 = sphi 0, %s300
      %s315 = sphi 0, %s301
      %s319 = sphi 0, %s319
      %s321 = sphi 0, %s319
      %s322 = sphi 0, %s321
      %s336 = sphi 0, %s322
      %s340 = sphi 0, %s340
      %s342 = sphi 0, %s340
      %s343 = sphi 0, %s342
      %s357 = sphi 0, %s343
      %s361 = sphi 0, %s361
      %s363 = sphi 0, %s361
      %s364 = sphi 0, %s363
      %s378 = sphi 0, %s364
      %s382 = sphi 0, %s382
      %s384 = sphi 0, %s382
      %s385 = sphi 0, %s384
      %s399 = sphi 0, %s385
      %s403 = sphi 0, %s403
      %s405 = sphi 0, %s403
      %s406 = sphi 0, %s405
      %s420 = sphi 0, %s406
      %s424 = sphi 0, %s424
      %s426 = sphi 0, %s424
      %s427 = sphi 0, %s426
      %s441 = sphi 0, %s427
      %s445 = sphi 0, %s445
      %s447 = sphi 0, %s445
      %s448 = sphi 0, %s447
      %s462 = sphi 0, %s448
      %s466 = sphi 0, %s466
      %s468 = sphi 0, %s466
      %s469 = sphi 0, %s468
      %s483 = sphi 0, %s469
      %s487 = sphi 0, %s487
      %s489 = sphi 0, %s487
      %s490 = sphi 0, %s489
      %s504 = sphi 0, %s490
      %s508 = sphi 0, %s508
      %s510 = sphi 0, %s508
      %s511 = sphi 0, %s510
      %s525 = sphi 0, %s511
      %s529 = sphi 0, %s529
      %s531 = sphi 0, %s529
      %s532 = sphi 0, %s531
      %s546 = sphi 0, %s532
    $region4: #{_dynamic_reg_forward_impl.1} parent=1 // loop_header_branch
      %36 = sbr.rel (%p34) target = $region8
    $region5: #{_dynamic_reg_forward_impl.1} parent=1 // loop_body
      %s38 = ssub.s32 %s33, 1
      %s39 = ssub.s32 %s33, 2
      %s40 = sadd.s32 %s33, 1
      %s42 = sadd.s32 %s41, 1
      %p45 = scmp.eq.s32.totalorder %s33, 1
      %p46 = scmp.ne.s32.totalorder %s41, %s43
      %p47 = scmp.eq.s32.totalorder %s33, 0
      %p48 = por %p46, %p47
      %p49 = scmp.ne.s32.totalorder %s41, %s43
      %p50 = scmp.eq.s32.totalorder %s38, 1
      %p51 = por %p49, %p50
      %p52 = scmp.ne.s32.totalorder %s43, %s44
      %p53 = scmp.eq.s32.totalorder %s38, 0
      %p54 = por %p52, %p53
      %p55 = scmp.ne.s32.totalorder %s43, %s44
      %p56 = scmp.eq.s32.totalorder %s39, 1
      %p57 = por %p55, %p56
      %p59 = scmp.ne.s32.totalorder %s44, %s58
      %p60 = scmp.eq.s32.totalorder %s39, 0
      %p61 = por %p59, %p60
      %s62 = ssub.s32 %s33, %s40
      %p63 = scmp.eq.s32.totalorder %s62, 0
      %s65 = sadd.s32 %s64, 1
      %s66 = scalar_select %p63, %s64, %s65
      %p69 = pneg %p63
      %p70 = scmp.eq.s32.totalorder %s33, 1
      %p71 = por %p69, %p70
      %p72 = scmp.ne.s32.totalorder %s64, %s67
      %p73 = scmp.eq.s32.totalorder %s33, 0
      %p74 = por %p72, %p73
      %p75 = scmp.ne.s32.totalorder %s64, %s67
      %p76 = scmp.eq.s32.totalorder %s38, 1
      %p77 = por %p75, %p76
      %p78 = scmp.ne.s32.totalorder %s67, %s68
      %p79 = scmp.eq.s32.totalorder %s38, 0
      %p80 = por %p78, %p79
      %p81 = scmp.ne.s32.totalorder %s67, %s68
      %p82 = scmp.eq.s32.totalorder %s39, 1
      %p83 = por %p81, %p82
      %p85 = scmp.ne.s32.totalorder %s68, %s84
      %p86 = scmp.eq.s32.totalorder %s39, 0
      %p87 = por %p85, %p86
      %s89 = sadd.s32 %s88, 1
      %p92 = scmp.eq.s32.totalorder %s33, 1
      %p93 = scmp.ne.s32.totalorder %s88, %s90
      %p94 = scmp.eq.s32.totalorder %s33, 0
      %p95 = por %p93, %p94
      %p96 = scmp.ne.s32.totalorder %s88, %s90
      %p97 = scmp.eq.s32.totalorder %s38, 1
      %p98 = por %p96, %p97
      %p99 = scmp.ne.s32.totalorder %s90, %s91
      %p100 = scmp.eq.s32.totalorder %s38, 0
      %p101 = por %p99, %p100
      %p102 = scmp.ne.s32.totalorder %s90, %s91
      %p103 = scmp.eq.s32.totalorder %s39, 1
      %p104 = por %p102, %p103
      %p106 = scmp.ne.s32.totalorder %s91, %s105
      %p107 = scmp.eq.s32.totalorder %s39, 0
      %p108 = por %p106, %p107
      %s110 = sadd.s32 %s109, 1
      %p113 = scmp.eq.s32.totalorder %s33, 1
      %p114 = scmp.ne.s32.totalorder %s109, %s111
      %p115 = scmp.eq.s32.totalorder %s33, 0
      %p116 = por %p114, %p115
      %p117 = scmp.ne.s32.totalorder %s109, %s111
      %p118 = scmp.eq.s32.totalorder %s38, 1
      %p119 = por %p117, %p118
      %p120 = scmp.ne.s32.totalorder %s111, %s112
      %p121 = scmp.eq.s32.totalorder %s38, 0
      %p122 = por %p120, %p121
      %p123 = scmp.ne.s32.totalorder %s111, %s112
      %p124 = scmp.eq.s32.totalorder %s39, 1
      %p125 = por %p123, %p124
      %p127 = scmp.ne.s32.totalorder %s112, %s126
      %p128 = scmp.eq.s32.totalorder %s39, 0
      %p129 = por %p127, %p128
      %s131 = sadd.s32 %s130, 1
      %p134 = scmp.eq.s32.totalorder %s33, 1
      %p135 = scmp.ne.s32.totalorder %s130, %s132
      %p136 = scmp.eq.s32.totalorder %s33, 0
      %p137 = por %p135, %p136
      %p138 = scmp.ne.s32.totalorder %s130, %s132
      %p139 = scmp.eq.s32.totalorder %s38, 1
      %p140 = por %p138, %p139
      %p141 = scmp.ne.s32.totalorder %s132, %s133
      %p142 = scmp.eq.s32.totalorder %s38, 0
      %p143 = por %p141, %p142
      %p144 = scmp.ne.s32.totalorder %s132, %s133
      %p145 = scmp.eq.s32.totalorder %s39, 1
      %p146 = por %p144, %p145
      %p148 = scmp.ne.s32.totalorder %s133, %s147
      %p149 = scmp.eq.s32.totalorder %s39, 0
      %p150 = por %p148, %p149
      %s152 = sadd.s32 %s151, 1
      %p155 = scmp.eq.s32.totalorder %s33, 1
      %p156 = scmp.ne.s32.totalorder %s151, %s153
      %p157 = scmp.eq.s32.totalorder %s33, 0
      %p158 = por %p156, %p157
      %p159 = scmp.ne.s32.totalorder %s151, %s153
      %p160 = scmp.eq.s32.totalorder %s38, 1
      %p161 = por %p159, %p160
      %p162 = scmp.ne.s32.totalorder %s153, %s154
      %p163 = scmp.eq.s32.totalorder %s38, 0
      %p164 = por %p162, %p163
      %p165 = scmp.ne.s32.totalorder %s153, %s154
      %p166 = scmp.eq.s32.totalorder %s39, 1
      %p167 = por %p165, %p166
      %p169 = scmp.ne.s32.totalorder %s154, %s168
      %p170 = scmp.eq.s32.totalorder %s39, 0
      %p171 = por %p169, %p170
      %s173 = sadd.s32 %s172, 1
      %p176 = scmp.eq.s32.totalorder %s33, 1
      %p177 = scmp.ne.s32.totalorder %s172, %s174
      %p178 = scmp.eq.s32.totalorder %s33, 0
      %p179 = por %p177, %p178
      %p180 = scmp.ne.s32.totalorder %s172, %s174
      %p181 = scmp.eq.s32.totalorder %s38, 1
      %p182 = por %p180, %p181
      %p183 = scmp.ne.s32.totalorder %s174, %s175
      %p184 = scmp.eq.s32.totalorder %s38, 0
      %p185 = por %p183, %p184
      %p186 = scmp.ne.s32.totalorder %s174, %s175
      %p187 = scmp.eq.s32.totalorder %s39, 1
      %p188 = por %p186, %p187
      %p190 = scmp.ne.s32.totalorder %s175, %s189
      %p191 = scmp.eq.s32.totalorder %s39, 0
      %p192 = por %p190, %p191
      %s194 = sadd.s32 %s193, 1
      %p197 = scmp.eq.s32.totalorder %s33, 1
      %p198 = scmp.ne.s32.totalorder %s193, %s195
      %p199 = scmp.eq.s32.totalorder %s33, 0
      %p200 = por %p198, %p199
      %p201 = scmp.ne.s32.totalorder %s193, %s195
      %p202 = scmp.eq.s32.totalorder %s38, 1
      %p203 = por %p201, %p202
      %p204 = scmp.ne.s32.totalorder %s195, %s196
      %p205 = scmp.eq.s32.totalorder %s38, 0
      %p206 = por %p204, %p205
      %p207 = scmp.ne.s32.totalorder %s195, %s196
      %p208 = scmp.eq.s32.totalorder %s39, 1
      %p209 = por %p207, %p208
      %p211 = scmp.ne.s32.totalorder %s196, %s210
      %p212 = scmp.eq.s32.totalorder %s39, 0
      %p213 = por %p211, %p212
      %s215 = sadd.s32 %s214, 1
      %p218 = scmp.eq.s32.totalorder %s33, 1
      %p219 = scmp.ne.s32.totalorder %s214, %s216
      %p220 = scmp.eq.s32.totalorder %s33, 0
      %p221 = por %p219, %p220
      %p222 = scmp.ne.s32.totalorder %s214, %s216
      %p223 = scmp.eq.s32.totalorder %s38, 1
      %p224 = por %p222, %p223
      %p225 = scmp.ne.s32.totalorder %s216, %s217
      %p226 = scmp.eq.s32.totalorder %s38, 0
      %p227 = por %p225, %p226
      %p228 = scmp.ne.s32.totalorder %s216, %s217
      %p229 = scmp.eq.s32.totalorder %s39, 1
      %p230 = por %p228, %p229
      %p232 = scmp.ne.s32.totalorder %s217, %s231
      %p233 = scmp.eq.s32.totalorder %s39, 0
      %p234 = por %p232, %p233
      %s236 = sadd.s32 %s235, 1
      %p239 = scmp.eq.s32.totalorder %s33, 1
      %p240 = scmp.ne.s32.totalorder %s235, %s237
      %p241 = scmp.eq.s32.totalorder %s33, 0
      %p242 = por %p240, %p241
      %p243 = scmp.ne.s32.totalorder %s235, %s237
      %p244 = scmp.eq.s32.totalorder %s38, 1
      %p245 = por %p243, %p244
      %p246 = scmp.ne.s32.totalorder %s237, %s238
      %p247 = scmp.eq.s32.totalorder %s38, 0
      %p248 = por %p246, %p247
      %p249 = scmp.ne.s32.totalorder %s237, %s238
      %p250 = scmp.eq.s32.totalorder %s39, 1
      %p251 = por %p249, %p250
      %p253 = scmp.ne.s32.totalorder %s238, %s252
      %p254 = scmp.eq.s32.totalorder %s39, 0
      %p255 = por %p253, %p254
      %s257 = sadd.s32 %s256, 1
      %p260 = scmp.eq.s32.totalorder %s33, 1
      %p261 = scmp.ne.s32.totalorder %s256, %s258
      %p262 = scmp.eq.s32.totalorder %s33, 0
      %p263 = por %p261, %p262
      %p264 = scmp.ne.s32.totalorder %s256, %s258
      %p265 = scmp.eq.s32.totalorder %s38, 1
      %p266 = por %p264, %p265
      %p267 = scmp.ne.s32.totalorder %s258, %s259
      %p268 = scmp.eq.s32.totalorder %s38, 0
      %p269 = por %p267, %p268
      %p270 = scmp.ne.s32.totalorder %s258, %s259
      %p271 = scmp.eq.s32.totalorder %s39, 1
      %p272 = por %p270, %p271
      %p274 = scmp.ne.s32.totalorder %s259, %s273
      %p275 = scmp.eq.s32.totalorder %s39, 0
      %p276 = por %p274, %p275
      %s278 = sadd.s32 %s277, 1
      %p281 = scmp.eq.s32.totalorder %s33, 1
      %p282 = scmp.ne.s32.totalorder %s277, %s279
      %p283 = scmp.eq.s32.totalorder %s33, 0
      %p284 = por %p282, %p283
      %p285 = scmp.ne.s32.totalorder %s277, %s279
      %p286 = scmp.eq.s32.totalorder %s38, 1
      %p287 = por %p285, %p286
      %p288 = scmp.ne.s32.totalorder %s279, %s280
      %p289 = scmp.eq.s32.totalorder %s38, 0
      %p290 = por %p288, %p289
      %p291 = scmp.ne.s32.totalorder %s279, %s280
      %p292 = scmp.eq.s32.totalorder %s39, 1
      %p293 = por %p291, %p292
      %p295 = scmp.ne.s32.totalorder %s280, %s294
      %p296 = scmp.eq.s32.totalorder %s39, 0
      %p297 = por %p295, %p296
      %s299 = sadd.s32 %s298, 1
      %p302 = scmp.eq.s32.totalorder %s33, 1
      %p303 = scmp.ne.s32.totalorder %s298, %s300
      %p304 = scmp.eq.s32.totalorder %s33, 0
      %p305 = por %p303, %p304
      %p306 = scmp.ne.s32.totalorder %s298, %s300
      %p307 = scmp.eq.s32.totalorder %s38, 1
      %p308 = por %p306, %p307
      %p309 = scmp.ne.s32.totalorder %s300, %s301
      %p310 = scmp.eq.s32.totalorder %s38, 0
      %p311 = por %p309, %p310
      %p312 = scmp.ne.s32.totalorder %s300, %s301
      %p313 = scmp.eq.s32.totalorder %s39, 1
      %p314 = por %p312, %p313
      %p316 = scmp.ne.s32.totalorder %s301, %s315
      %p317 = scmp.eq.s32.totalorder %s39, 0
      %p318 = por %p316, %p317
      %s320 = sadd.s32 %s319, 1
      %p323 = scmp.eq.s32.totalorder %s33, 1
      %p324 = scmp.ne.s32.totalorder %s319, %s321
      %p325 = scmp.eq.s32.totalorder %s33, 0
      %p326 = por %p324, %p325
      %p327 = scmp.ne.s32.totalorder %s319, %s321
      %p328 = scmp.eq.s32.totalorder %s38, 1
      %p329 = por %p327, %p328
      %p330 = scmp.ne.s32.totalorder %s321, %s322
      %p331 = scmp.eq.s32.totalorder %s38, 0
      %p332 = por %p330, %p331
      %p333 = scmp.ne.s32.totalorder %s321, %s322
      %p334 = scmp.eq.s32.totalorder %s39, 1
      %p335 = por %p333, %p334
      %p337 = scmp.ne.s32.totalorder %s322, %s336
      %p338 = scmp.eq.s32.totalorder %s39, 0
      %p339 = por %p337, %p338
      %s341 = sadd.s32 %s340, 1
      %p344 = scmp.eq.s32.totalorder %s33, 1
      %p345 = scmp.ne.s32.totalorder %s340, %s342
      %p346 = scmp.eq.s32.totalorder %s33, 0
      %p347 = por %p345, %p346
      %p348 = scmp.ne.s32.totalorder %s340, %s342
      %p349 = scmp.eq.s32.totalorder %s38, 1
      %p350 = por %p348, %p349
      %p351 = scmp.ne.s32.totalorder %s342, %s343
      %p352 = scmp.eq.s32.totalorder %s38, 0
      %p353 = por %p351, %p352
      %p354 = scmp.ne.s32.totalorder %s342, %s343
      %p355 = scmp.eq.s32.totalorder %s39, 1
      %p356 = por %p354, %p355
      %p358 = scmp.ne.s32.totalorder %s343, %s357
      %p359 = scmp.eq.s32.totalorder %s39, 0
      %p360 = por %p358, %p359
      %s362 = sadd.s32 %s361, 1
      %p365 = scmp.eq.s32.totalorder %s33, 1
      %p366 = scmp.ne.s32.totalorder %s361, %s363
      %p367 = scmp.eq.s32.totalorder %s33, 0
      %p368 = por %p366, %p367
      %p369 = scmp.ne.s32.totalorder %s361, %s363
      %p370 = scmp.eq.s32.totalorder %s38, 1
      %p371 = por %p369, %p370
      %p372 = scmp.ne.s32.totalorder %s363, %s364
      %p373 = scmp.eq.s32.totalorder %s38, 0
      %p374 = por %p372, %p373
      %p375 = scmp.ne.s32.totalorder %s363, %s364
      %p376 = scmp.eq.s32.totalorder %s39, 1
      %p377 = por %p375, %p376
      %p379 = scmp.ne.s32.totalorder %s364, %s378
      %p380 = scmp.eq.s32.totalorder %s39, 0
      %p381 = por %p379, %p380
      %s383 = sadd.s32 %s382, 1
      %p386 = scmp.eq.s32.totalorder %s33, 1
      %p387 = scmp.ne.s32.totalorder %s382, %s384
      %p388 = scmp.eq.s32.totalorder %s33, 0
      %p389 = por %p387, %p388
      %p390 = scmp.ne.s32.totalorder %s382, %s384
      %p391 = scmp.eq.s32.totalorder %s38, 1
      %p392 = por %p390, %p391
      %p393 = scmp.ne.s32.totalorder %s384, %s385
      %p394 = scmp.eq.s32.totalorder %s38, 0
      %p395 = por %p393, %p394
      %p396 = scmp.ne.s32.totalorder %s384, %s385
      %p397 = scmp.eq.s32.totalorder %s39, 1
      %p398 = por %p396, %p397
      %p400 = scmp.ne.s32.totalorder %s385, %s399
      %p401 = scmp.eq.s32.totalorder %s39, 0
      %p402 = por %p400, %p401
      %s404 = sadd.s32 %s403, 1
      %p407 = scmp.eq.s32.totalorder %s33, 1
      %p408 = scmp.ne.s32.totalorder %s403, %s405
      %p409 = scmp.eq.s32.totalorder %s33, 0
      %p410 = por %p408, %p409
      %p411 = scmp.ne.s32.totalorder %s403, %s405
      %p412 = scmp.eq.s32.totalorder %s38, 1
      %p413 = por %p411, %p412
      %p414 = scmp.ne.s32.totalorder %s405, %s406
      %p415 = scmp.eq.s32.totalorder %s38, 0
      %p416 = por %p414, %p415
      %p417 = scmp.ne.s32.totalorder %s405, %s406
      %p418 = scmp.eq.s32.totalorder %s39, 1
      %p419 = por %p417, %p418
      %p421 = scmp.ne.s32.totalorder %s406, %s420
      %p422 = scmp.eq.s32.totalorder %s39, 0
      %p423 = por %p421, %p422
      %s425 = sadd.s32 %s424, 1
      %p428 = scmp.eq.s32.totalorder %s33, 1
      %p429 = scmp.ne.s32.totalorder %s424, %s426
      %p430 = scmp.eq.s32.totalorder %s33, 0
      %p431 = por %p429, %p430
      %p432 = scmp.ne.s32.totalorder %s424, %s426
      %p433 = scmp.eq.s32.totalorder %s38, 1
      %p434 = por %p432, %p433
      %p435 = scmp.ne.s32.totalorder %s426, %s427
      %p436 = scmp.eq.s32.totalorder %s38, 0
      %p437 = por %p435, %p436
      %p438 = scmp.ne.s32.totalorder %s426, %s427
      %p439 = scmp.eq.s32.totalorder %s39, 1
      %p440 = por %p438, %p439
      %p442 = scmp.ne.s32.totalorder %s427, %s441
      %p443 = scmp.eq.s32.totalorder %s39, 0
      %p444 = por %p442, %p443
      %s446 = sadd.s32 %s445, 1
      %p449 = scmp.eq.s32.totalorder %s33, 1
      %p450 = scmp.ne.s32.totalorder %s445, %s447
      %p451 = scmp.eq.s32.totalorder %s33, 0
      %p452 = por %p450, %p451
      %p453 = scmp.ne.s32.totalorder %s445, %s447
      %p454 = scmp.eq.s32.totalorder %s38, 1
      %p455 = por %p453, %p454
      %p456 = scmp.ne.s32.totalorder %s447, %s448
      %p457 = scmp.eq.s32.totalorder %s38, 0
      %p458 = por %p456, %p457
      %p459 = scmp.ne.s32.totalorder %s447, %s448
      %p460 = scmp.eq.s32.totalorder %s39, 1
      %p461 = por %p459, %p460
      %p463 = scmp.ne.s32.totalorder %s448, %s462
      %p464 = scmp.eq.s32.totalorder %s39, 0
      %p465 = por %p463, %p464
      %s467 = sadd.s32 %s466, 1
      %p470 = scmp.eq.s32.totalorder %s33, 1
      %p471 = scmp.ne.s32.totalorder %s466, %s468
      %p472 = scmp.eq.s32.totalorder %s33, 0
      %p473 = por %p471, %p472
      %p474 = scmp.ne.s32.totalorder %s466, %s468
      %p475 = scmp.eq.s32.totalorder %s38, 1
      %p476 = por %p474, %p475
      %p477 = scmp.ne.s32.totalorder %s468, %s469
      %p478 = scmp.eq.s32.totalorder %s38, 0
      %p479 = por %p477, %p478
      %p480 = scmp.ne.s32.totalorder %s468, %s469
      %p481 = scmp.eq.s32.totalorder %s39, 1
      %p482 = por %p480, %p481
      %p484 = scmp.ne.s32.totalorder %s469, %s483
      %p485 = scmp.eq.s32.totalorder %s39, 0
      %p486 = por %p484, %p485
      %s488 = sadd.s32 %s487, 1
      %p491 = scmp.eq.s32.totalorder %s33, 1
      %p492 = scmp.ne.s32.totalorder %s487, %s489
      %p493 = scmp.eq.s32.totalorder %s33, 0
      %p494 = por %p492, %p493
      %p495 = scmp.ne.s32.totalorder %s487, %s489
      %p496 = scmp.eq.s32.totalorder %s38, 1
      %p497 = por %p495, %p496
      %p498 = scmp.ne.s32.totalorder %s489, %s490
      %p499 = scmp.eq.s32.totalorder %s38, 0
      %p500 = por %p498, %p499
      %p501 = scmp.ne.s32.totalorder %s489, %s490
      %p502 = scmp.eq.s32.totalorder %s39, 1
      %p503 = por %p501, %p502
      %p505 = scmp.ne.s32.totalorder %s490, %s504
      %p506 = scmp.eq.s32.totalorder %s39, 0
      %p507 = por %p505, %p506
      %s509 = sadd.s32 %s508, 1
      %p512 = scmp.eq.s32.totalorder %s33, 1
      %p513 = scmp.ne.s32.totalorder %s508, %s510
      %p514 = scmp.eq.s32.totalorder %s33, 0
      %p515 = por %p513, %p514
      %p516 = scmp.ne.s32.totalorder %s508, %s510
      %p517 = scmp.eq.s32.totalorder %s38, 1
      %p518 = por %p516, %p517
      %p519 = scmp.ne.s32.totalorder %s510, %s511
      %p520 = scmp.eq.s32.totalorder %s38, 0
      %p521 = por %p519, %p520
      %p522 = scmp.ne.s32.totalorder %s510, %s511
      %p523 = scmp.eq.s32.totalorder %s39, 1
      %p524 = por %p522, %p523
      %p526 = scmp.ne.s32.totalorder %s511, %s525
      %p527 = scmp.eq.s32.totalorder %s39, 0
      %p528 = por %p526, %p527
      %s530 = sadd.s32 %s529, 1
      %p533 = scmp.eq.s32.totalorder %s33, 1
      %p534 = scmp.ne.s32.totalorder %s529, %s531
      %p535 = scmp.eq.s32.totalorder %s33, 0
      %p536 = por %p534, %p535
      %p537 = scmp.ne.s32.totalorder %s529, %s531
      %p538 = scmp.eq.s32.totalorder %s38, 1
      %p539 = por %p537, %p538
      %p540 = scmp.ne.s32.totalorder %s531, %s532
      %p541 = scmp.eq.s32.totalorder %s38, 0
      %p542 = por %p540, %p541
      %p543 = scmp.ne.s32.totalorder %s531, %s532
      %p544 = scmp.eq.s32.totalorder %s39, 1
      %p545 = por %p543, %p544
      %p547 = scmp.ne.s32.totalorder %s532, %s546
      %p548 = scmp.eq.s32.totalorder %s39, 0
      %p549 = por %p547, %p548
      %p550 = scmp.le.s32.totalorder 1, %s33
      %p551 = scmp.lt.s32.totalorder %s33, 3
      %p552 = pnand %p550, %p551
      %p553 = pneg %p552
      // Predicated region
      $region9: #{_dynamic_reg_forward_impl.1} parent=5 // pred_check
        _
      $region10: #{_dynamic_reg_forward_impl.1} parent=5 // pred_check_branch
        %555 = sbr.rel (%p552) target = $region12
      $region11: #{_dynamic_reg_forward_impl.1} parent=5 // pred_region
        %s556 = ssub.s32 %s33, 1
        // Predicated region
        $region13: #{_dynamic_reg_forward_impl.1} parent=11 // pred_check
          %p557 = pneg %p54
        $region14: #{_dynamic_reg_forward_impl.1} parent=11 // pred_check_branch
          %559 = sbr.rel (%p557) target = $region16
        $region15: #{_dynamic_reg_forward_impl.1} parent=11 // pred_region
          %s561 = ssub.s32 16, 16
          %562 = vsyncadd [#allocation5], %s561
          %s564 = sshll.u32 %s0, 4
          %s565 = int_to_ptr.vmem [resolvable:$true] %s564
          %567 = dma.vmem_to_smem %s565, 16, [#allocation3], [#allocation5]
        $region16: #{_dynamic_reg_forward_impl.1} parent=11 // pred_fallthru
          _
        // Predicated region
        $region17: #{_dynamic_reg_forward_impl.1} parent=11 // pred_check
          %p568 = pneg %p101
        $region18: #{_dynamic_reg_forward_impl.1} parent=11 // pred_check_branch
          %570 = sbr.rel (%p568) target = $region20
        $region19: #{_dynamic_reg_forward_impl.1} parent=11 // pred_region
          _
        $region20: #{_dynamic_reg_forward_impl.1} parent=11 // pred_fallthru
          _
        // Predicated region
        $region21: #{_dynamic_reg_forward_impl.1} parent=11 // pred_check
          %p571 = pneg %p122
        $region22: #{_dynamic_reg_forward_impl.1} parent=11 // pred_check_branch
          %573 = sbr.rel (%p571) target = $region24
        $region23: #{_dynamic_reg_forward_impl.1} parent=11 // pred_region
          _
        $region24: #{_dynamic_reg_forward_impl.1} parent=11 // pred_fallthru
          _
        // Predicated region
        $region25: #{_dynamic_reg_forward_impl.1} parent=11 // pred_check
          %p574 = pneg %p143
        $region26: #{_dynamic_reg_forward_impl.1} parent=11 // pred_check_branch
          %576 = sbr.rel (%p574) target = $region28
        $region27: #{_dynamic_reg_forward_impl.1} parent=11 // pred_region
          _
        $region28: #{_dynamic_reg_forward_impl.1} parent=11 // pred_fallthru
          _
        // Predicated region
        $region29: #{_dynamic_reg_forward_impl.1} parent=11 // pred_check
          %p577 = pneg %p164
        $region30: #{_dynamic_reg_forward_impl.1} parent=11 // pred_check_branch
          %579 = sbr.rel (%p577) target = $region32
        $region31: #{_dynamic_reg_forward_impl.1} parent=11 // pred_region
          _
        $region32: #{_dynamic_reg_forward_impl.1} parent=11 // pred_fallthru
          _
        // Predicated region
        $region33: #{_dynamic_reg_forward_impl.1} parent=11 // pred_check
          %p580 = pneg %p185
        $region34: #{_dynamic_reg_forward_impl.1} parent=11 // pred_check_branch
          %582 = sbr.rel (%p580) target = $region36
        $region35: #{_dynamic_reg_forward_impl.1} parent=11 // pred_region
          _
        $region36: #{_dynamic_reg_forward_impl.1} parent=11 // pred_fallthru
          _
        // Predicated region
        $region37: #{_dynamic_reg_forward_impl.1} parent=11 // pred_check
          %p583 = pneg %p206
        $region38: #{_dynamic_reg_forward_impl.1} parent=11 // pred_check_branch
          %585 = sbr.rel (%p583) target = $region40
        $region39: #{_dynamic_reg_forward_impl.1} parent=11 // pred_region
          _
        $region40: #{_dynamic_reg_forward_impl.1} parent=11 // pred_fallthru
          _
        // Predicated region
        $region41: #{_dynamic_reg_forward_impl.1} parent=11 // pred_check
          %p586 = pneg %p227
        $region42: #{_dynamic_reg_forward_impl.1} parent=11 // pred_check_branch
          %588 = sbr.rel (%p586) target = $region44
        $region43: #{_dynamic_reg_forward_impl.1} parent=11 // pred_region
          _
        $region44: #{_dynamic_reg_forward_impl.1} parent=11 // pred_fallthru
          _
        // Predicated region
        $region45: #{_dynamic_reg_forward_impl.1} parent=11 // pred_check
          %p589 = pneg %p248
        $region46: #{_dynamic_reg_forward_impl.1} parent=11 // pred_check_branch
          %591 = sbr.rel (%p589) target = $region48
        $region47: #{_dynamic_reg_forward_impl.1} parent=11 // pred_region
          _
        $region48: #{_dynamic_reg_forward_impl.1} parent=11 // pred_fallthru
          _
        // Predicated region
        $region49: #{_dynamic_reg_forward_impl.1} parent=11 // pred_check
          %p592 = pneg %p269
        $region50: #{_dynamic_reg_forward_impl.1} parent=11 // pred_check_branch
          %594 = sbr.rel (%p592) target = $region52
        $region51: #{_dynamic_reg_forward_impl.1} parent=11 // pred_region
          _
        $region52: #{_dynamic_reg_forward_impl.1} parent=11 // pred_fallthru
          _
        // Predicated region
        $region53: #{_dynamic_reg_forward_impl.1} parent=11 // pred_check
          %p595 = pneg %p290
        $region54: #{_dynamic_reg_forward_impl.1} parent=11 // pred_check_branch
          %597 = sbr.rel (%p595) target = $region56
        $region55: #{_dynamic_reg_forward_impl.1} parent=11 // pred_region
          _
        $region56: #{_dynamic_reg_forward_impl.1} parent=11 // pred_fallthru
          _
        // Predicated region
        $region57: #{_dynamic_reg_forward_impl.1} parent=11 // pred_check
          %p598 = pneg %p311
        $region58: #{_dynamic_reg_forward_impl.1} parent=11 // pred_check_branch
          %600 = sbr.rel (%p598) target = $region60
        $region59: #{_dynamic_reg_forward_impl.1} parent=11 // pred_region
          _
        $region60: #{_dynamic_reg_forward_impl.1} parent=11 // pred_fallthru
          _
        // Predicated region
        $region61: #{_dynamic_reg_forward_impl.1} parent=11 // pred_check
          %p601 = pneg %p332
        $region62: #{_dynamic_reg_forward_impl.1} parent=11 // pred_check_branch
          %603 = sbr.rel (%p601) target = $region64
        $region63: #{_dynamic_reg_forward_impl.1} parent=11 // pred_region
          _
        $region64: #{_dynamic_reg_forward_impl.1} parent=11 // pred_fallthru
          _
        // Predicated region
        $region65: #{_dynamic_reg_forward_impl.1} parent=11 // pred_check
          %p604 = pneg %p353
        $region66: #{_dynamic_reg_forward_impl.1} parent=11 // pred_check_branch
          %606 = sbr.rel (%p604) target = $region68
        $region67: #{_dynamic_reg_forward_impl.1} parent=11 // pred_region
          _
        $region68: #{_dynamic_reg_forward_impl.1} parent=11 // pred_fallthru
          _
        // Predicated region
        $region69: #{_dynamic_reg_forward_impl.1} parent=11 // pred_check
          %p607 = pneg %p374
        $region70: #{_dynamic_reg_forward_impl.1} parent=11 // pred_check_branch
          %609 = sbr.rel (%p607) target = $region72
        $region71: #{_dynamic_reg_forward_impl.1} parent=11 // pred_region
          _
        $region72: #{_dynamic_reg_forward_impl.1} parent=11 // pred_fallthru
          _
        // Predicated region
        $region73: #{_dynamic_reg_forward_impl.1} parent=11 // pred_check
          %p610 = pneg %p395
        $region74: #{_dynamic_reg_forward_impl.1} parent=11 // pred_check_branch
          %612 = sbr.rel (%p610) target = $region76
        $region75: #{_dynamic_reg_forward_impl.1} parent=11 // pred_region
          _
        $region76: #{_dynamic_reg_forward_impl.1} parent=11 // pred_fallthru
          _
        // Predicated region
        $region77: #{_dynamic_reg_forward_impl.1} parent=11 // pred_check
          %p613 = pneg %p416
        $region78: #{_dynamic_reg_forward_impl.1} parent=11 // pred_check_branch
          %615 = sbr.rel (%p613) target = $region80
        $region79: #{_dynamic_reg_forward_impl.1} parent=11 // pred_region
          _
        $region80: #{_dynamic_reg_forward_impl.1} parent=11 // pred_fallthru
          _
        // Predicated region
        $region81: #{_dynamic_reg_forward_impl.1} parent=11 // pred_check
          %p616 = pneg %p437
        $region82: #{_dynamic_reg_forward_impl.1} parent=11 // pred_check_branch
          %618 = sbr.rel (%p616) target = $region84
        $region83: #{_dynamic_reg_forward_impl.1} parent=11 // pred_region
          _
        $region84: #{_dynamic_reg_forward_impl.1} parent=11 // pred_fallthru
          _
        // Predicated region
        $region85: #{_dynamic_reg_forward_impl.1} parent=11 // pred_check
          %p619 = pneg %p458
        $region86: #{_dynamic_reg_forward_impl.1} parent=11 // pred_check_branch
          %621 = sbr.rel (%p619) target = $region88
        $region87: #{_dynamic_reg_forward_impl.1} parent=11 // pred_region
          _
        $region88: #{_dynamic_reg_forward_impl.1} parent=11 // pred_fallthru
          _
        // Predicated region
        $region89: #{_dynamic_reg_forward_impl.1} parent=11 // pred_check
          %p622 = pneg %p479
        $region90: #{_dynamic_reg_forward_impl.1} parent=11 // pred_check_branch
          %624 = sbr.rel (%p622) target = $region92
        $region91: #{_dynamic_reg_forward_impl.1} parent=11 // pred_region
          _
        $region92: #{_dynamic_reg_forward_impl.1} parent=11 // pred_fallthru
          _
        // Predicated region
        $region93: #{_dynamic_reg_forward_impl.1} parent=11 // pred_check
          %p625 = pneg %p500
        $region94: #{_dynamic_reg_forward_impl.1} parent=11 // pred_check_branch
          %627 = sbr.rel (%p625) target = $region96
        $region95: #{_dynamic_reg_forward_impl.1} parent=11 // pred_region
          _
        $region96: #{_dynamic_reg_forward_impl.1} parent=11 // pred_fallthru
          _
      $region12: #{_dynamic_reg_forward_impl.1} parent=5 // pred_fallthru
        _
      %p628 = scmp.lt.s32.totalorder %s33, 2
      // Predicated region
      $region97: #{_dynamic_reg_forward_impl.1} parent=5 // pred_check
        %p629 = pneg %p628
      $region98: #{_dynamic_reg_forward_impl.1} parent=5 // pred_check_branch
        %631 = sbr.rel (%p629) target = $region100
      $region99: #{_dynamic_reg_forward_impl.1} parent=5 // pred_region
        // Predicated region
        $region101: #{_dynamic_reg_forward_impl.1} parent=99 // pred_check
          %p632 = pneg %p74
        $region102: #{_dynamic_reg_forward_impl.1} parent=99 // pred_check_branch
          %634 = sbr.rel (%p632) target = $region104
        $region103: #{_dynamic_reg_forward_impl.1} parent=99 // pred_region
          %s635 = smul.u32 2, %s33
          %p636 = scmp.lt.s32.totalorder %s635, 3
          %s637 = scalar_select %p636, %s635, 3
          %s638 = smul.addr %s637, 12
          %s639 = smul.addr %s638, 8
          %s640 = scalar_lea.vmem %s1, %s639
          %s641 = smul.u32 2, %s33
        $region104: #{_dynamic_reg_forward_impl.1} parent=99 // pred_fallthru
          _
      $region100: #{_dynamic_reg_forward_impl.1} parent=5 // pred_fallthru
        _
      %p642 = scmp.le.s32.totalorder 1, %s33
      %p643 = scmp.lt.s32.totalorder %s33, 3
      %p644 = pnand %p642, %p643
      %p645 = pneg %p644
      // Predicated region
      $region105: #{_dynamic_reg_forward_impl.1} parent=5 // pred_check
        _
      $region106: #{_dynamic_reg_forward_impl.1} parent=5 // pred_check_branch
        %647 = sbr.rel (%p644) target = $region108
      $region107: #{_dynamic_reg_forward_impl.1} parent=5 // pred_region
        %s648 = ssub.s32 %s33, 1
        // Predicated region
        $region109: #{_dynamic_reg_forward_impl.1} parent=107 // pred_check
          %p649 = pneg %p54
        $region110: #{_dynamic_reg_forward_impl.1} parent=107 // pred_check_branch
          %651 = sbr.rel (%p649) target = $region112
        $region111: #{_dynamic_reg_forward_impl.1} parent=107 // pred_region
          %652 = dma.done [#allocation5], 16
        $region112: #{_dynamic_reg_forward_impl.1} parent=107 // pred_fallthru
          _
        %653 = sfence
        %p654 = pneg %p54
        %p655 = pneg %p51
        %s656 = smul.u32 2, %s38
        %p657 = scmp.lt.s32.totalorder %s656, 3
        %s658 = scalar_select %p657, %s656, 3
        %s659 = smul.addr %s658, 12
        %s660 = smul.addr %s659, 8
        %s661 = scalar_lea.vmem %s1, %s660
        %p662 = pneg %p80
        %p663 = pneg %p77
        %p664 = pneg %p101
        %p665 = pneg %p98
        %p666 = pneg %p122
        %p667 = pneg %p119
        %p668 = pneg %p143
        %p669 = pneg %p140
        %p670 = pneg %p164
        %p671 = pneg %p161
        %p672 = pneg %p185
        %p673 = pneg %p182
        %p674 = pneg %p206
        %p675 = pneg %p203
        %p676 = pneg %p227
        %p677 = pneg %p224
        %p678 = pneg %p248
        %p679 = pneg %p245
        %p680 = pneg %p269
        %p681 = pneg %p266
        %p682 = pneg %p290
        %p683 = pneg %p287
        %p684 = pneg %p311
        %p685 = pneg %p308
        %p686 = pneg %p332
        %p687 = pneg %p329
        %p688 = pneg %p353
        %p689 = pneg %p350
        %p690 = pneg %p374
        %p691 = pneg %p371
        %p692 = pneg %p395
        %p693 = pneg %p392
        %p694 = pneg %p416
        %p695 = pneg %p413
        %p696 = pneg %p437
        %p697 = pneg %p434
        %p698 = pneg %p458
        %p699 = pneg %p455
        %p700 = pneg %p479
        %p701 = pneg %p476
        %p702 = pneg %p500
        %p703 = pneg %p497
        %p704 = pneg %p521
        %p705 = pneg %p518
        %p706 = pneg %p542
        %p707 = pneg %p539
        %s708 = smul.u32 2, %s38
        %p709 = scmp.lt.s32.totalorder %s708, 3
        %s710 = scalar_select %p709, %s708, 3
        %s711 = smul.addr %s710, 12
        %s712 = smul.addr %s711, 8
        %s713 = scalar_lea.vmem %s1, %s712
        %s714 = smul.u32 2, %s38
        %v716 = vld [vmem:[%s713] sm:$0xff]
        %v717 = vld [vmem:[%s713 + $0x8] sm:$0xff]
        %v718 = vld [vmem:[%s713 + $0x10] sm:$0xff]
        %v719 = vld [vmem:[%s713 + $0x18] sm:$0xff]
        %v720 = vld [vmem:[%s713 + $0x20] sm:$0xff]
        %v721 = vld [vmem:[%s713 + $0x28] sm:$0xff]
        %v722 = vld [vmem:[%s713 + $0x30] sm:$0xff]
        %v723 = vld [vmem:[%s713 + $0x38] sm:$0xff]
        %v724 = vld [vmem:[%s713 + $0x40] sm:$0xff]
        %v725 = vld [vmem:[%s713 + $0x48] sm:$0xff]
        %v726 = vld [vmem:[%s713 + $0x50] sm:$0xff]
        %v727 = vld [vmem:[%s713 + $0x58] sm:$0xff]
        %v728 = vld [vmem:[%s713 + $0x60] sm:$0xff]
        %v729 = vld [vmem:[%s713 + $0x68] sm:$0xff]
        %v730 = vld [vmem:[%s713 + $0x70] sm:$0xff]
        %v731 = vld [vmem:[%s713 + $0x78] sm:$0xff]
        %v732 = vld [vmem:[%s713 + $0x80] sm:$0xff]
        %v733 = vld [vmem:[%s713 + $0x88] sm:$0xff]
        %v734 = vld [vmem:[%s713 + $0x90] sm:$0xff]
        %v735 = vld [vmem:[%s713 + $0x98] sm:$0xff]
        %v736 = vld [vmem:[%s713 + $0xa0] sm:$0xff]
        %v737 = vld [vmem:[%s713 + $0xa8] sm:$0xff]
        %v738 = vld [vmem:[%s713 + $0xb0] sm:$0xff]
        %v739 = vld [vmem:[%s713 + $0xb8] sm:$0xff]
        %v740 = vpack.c.bf16 %v716, %v716
        %v741 = vpack.c.bf16 %v717, %v717
        %v742 = vpack.c.bf16 %v718, %v718
        %v743 = vpack.c.bf16 %v719, %v719
        %v744 = vpack.c.bf16 %v720, %v720
        %v745 = vpack.c.bf16 %v721, %v721
        %v746 = vpack.c.bf16 %v722, %v722
        %v747 = vpack.c.bf16 %v723, %v723
        %v748 = vpack.c.bf16 %v724, %v724
        %v749 = vpack.c.bf16 %v725, %v725
        %v750 = vpack.c.bf16 %v726, %v726
        %v751 = vpack.c.bf16 %v727, %v727
        %v752 = vpack.c.bf16 %v728, %v728
        %v753 = vpack.c.bf16 %v729, %v729
        %v754 = vpack.c.bf16 %v730, %v730
        %v755 = vpack.c.bf16 %v731, %v731
        %v756 = vpack.c.bf16 %v732, %v732
        %v757 = vpack.c.bf16 %v733, %v733
        %v758 = vpack.c.bf16 %v734, %v734
        %v759 = vpack.c.bf16 %v735, %v735
        %v760 = vpack.c.bf16 %v736, %v736
        %v761 = vpack.c.bf16 %v737, %v737
        %v762 = vpack.c.bf16 %v738, %v738
        %v763 = vpack.c.bf16 %v739, %v739
        %v764 = vld [vmem:[%s4] sm:$0x3]
        %s765 = scalar_lea.vmem %s4, 2
        %v766 = vld [vmem:[%s765] sm:$0x3]
        %v787 = vunpack.c.l.b16 %v741
        %v788 = vunpack.c.l.b16 %v742
        %v789 = vunpack.c.l.b16 %v743
        %v790 = vunpack.c.l.b16 %v744
        %v791 = vunpack.c.l.b16 %v745
        %v792 = vunpack.c.l.b16 %v746
        %v793 = vunpack.c.l.b16 %v747
        %v794 = vunpack.c.l.b16 %v748
        %v795 = vunpack.c.l.b16 %v749
        %v796 = vunpack.c.l.b16 %v750
        %v797 = vunpack.c.l.b16 %v753
        %v798 = vunpack.c.l.b16 %v754
        %v799 = vunpack.c.l.b16 %v755
        %v800 = vunpack.c.l.b16 %v756
        %v801 = vunpack.c.l.b16 %v757
        %v802 = vunpack.c.l.b16 %v758
        %v803 = vunpack.c.l.b16 %v759
        %v804 = vunpack.c.l.b16 %v760
        %v805 = vunpack.c.l.b16 %v761
        %v806 = vunpack.c.l.b16 %v762
        %v807 = vpack.c.b16 %v788, %v787
        %v808 = vpack.c.b16 %v790, %v789
        %v809 = vpack.c.b16 %v792, %v791
        %v810 = vpack.c.b16 %v794, %v793
        %v811 = vpack.c.b16 %v796, %v795
        %v812 = vpack.c.b16 %v798, %v797
        %v813 = vpack.c.b16 %v800, %v799
        %v814 = vpack.c.b16 %v802, %v801
        %v815 = vpack.c.b16 %v804, %v803
        %v816 = vpack.c.b16 %v806, %v805
        %v819 = vunpack.c.l.s4 1966171168
        %v820 = vunpack.c.0.s8 %v819
        %v821 = vlaneseq
        %v822 = vshrl.u32 %v821, 7
        %v823 = vsub.s32 %v820, %v822
        %v824 = vrot.slane %v766, %v823
        %v825 = vcombine.high %v824, %v824
        %v827 = vunpack.c.l.s4 1966171168
        %v828 = vunpack.c.0.s8 %v827
        %v829 = vlaneseq
        %v830 = vshrl.u32 %v829, 7
        %v831 = vsub.s32 %v828, %v830
        %v832 = vrot.slane %v824, %v831
        %v834 = vunpack.c.l.s4 1966171168
        %v835 = vunpack.c.0.s8 %v834
        %v836 = vlaneseq
        %v837 = vshrl.u32 %v836, 7
        %v838 = vsub.s32 %v835, %v837
        %v839 = vrot.slane %v825, %v838
        %vm840 = vcmask 15360
        %v842 = vsel %vm840, %v807, 0
        %v845 = vsel %vm840, %v808, 0
        %v848 = vsel %vm840, %v809, 0
        %v851 = vsel %vm840, %v810, 0
        %v854 = vsel %vm840, %v811, 0
        %v857 = vsel %vm840, %v812, 0
        %v860 = vsel %vm840, %v813, 0
        %v863 = vsel %vm840, %v814, 0
        %v866 = vsel %vm840, %v815, 0
        %v869 = vsel %vm840, %v816, 0
        %vm871 = vcmask 1040384
        %v873 = vsel %vm871, %v832, 0
        %v876 = vsel %vm871, %v839, 0
        %878 = vmatprep.subr.bf16.mxu0 %v876
        %879 = vmatpush1.bf16.msra.mxu0 %v873
        %880 = vmatprep.subr.bf16.mxu0 0
        %881 = vmatpush1.bf16.msra.mxu0 0
        %882 = vmatprep.subr.bf16.mxu0 0
        %883 = vmatpush1.bf16.msra.mxu0 0
        %884 = vmatprep.subr.bf16.mxu0 0
        %885 = vmatpush1.bf16.msra.mxu0 0
        %886 = vmatprep.subr.bf16.mxu0 0
        %887 = vmatpush1.bf16.msra.mxu0 0
        %888 = vmatprep.subr.bf16.mxu0 0
        %889 = vmatpush1.bf16.msra.mxu0 0
        %890 = vmatprep.subr.bf16.mxu0 0
        %891 = vmatpush1.bf16.msra.mxu0 0
        %892 = vmatprep.subr.bf16.mxu0 0
        %893 = vmatpush1.bf16.msra.mxu0 0
        %894 = vmatprep.subr.bf16.mxu0 0
        %895 = vmatpush1.bf16.msra.mxu0 0
        %896 = vmatprep.subr.bf16.mxu0 0
        %897 = vmatpush1.bf16.msra.mxu0 0
        %898 = vmatprep.subr.bf16.mxu0 0
        %899 = vmatpush1.bf16.msra.mxu0 0
        %900 = vmatprep.subr.bf16.mxu0 0
        %901 = vmatpush1.bf16.msra.mxu0 0
        %902 = vmatprep.subr.bf16.mxu0 0
        %903 = vmatpush1.bf16.msra.mxu0 0
        %904 = vmatprep.subr.bf16.mxu0 0
        %905 = vmatpush1.bf16.msra.mxu0 0
        %906 = vmatprep.subr.bf16.mxu0 0
        %907 = vmatpush1.bf16.msra.mxu0 0
        %908 = vmatprep.subr.bf16.mxu0 0
        %909 = vmatpush1.bf16.msra.mxu0 0
        %910 = vmatprep.mubr.bf16.mxu0 0
        %911 = vmatmul.mubr.bf16.gmra.mrb[0].mxu0 %v842
        %v912 = vpop.f32.mrb[0].mxu0
        %v913 = vadd.f32 0.0, %v912
        %v914 = vpop.f32.mrb[0].mxu0
        %v915 = vadd.f32 0.0, %v914
        %v916 = vpop.f32.mrb[0].mxu0
        %v917 = vadd.f32 0.0, %v916
        %v918 = vpop.f32.mrb[0].mxu0
        %v919 = vadd.f32 0.0, %v918
        %920 = vmatprep.mubr.bf16.mxu0 0
        %921 = vmatmul.mubr.bf16.gmra.mrb[0].mxu0 %v845
        %v922 = vpop.f32.mrb[0].mxu0
        %v923 = vadd.f32 0.0, %v922
        %v924 = vpop.f32.mrb[0].mxu0
        %v925 = vadd.f32 0.0, %v924
        %v926 = vpop.f32.mrb[0].mxu0
        %v927 = vadd.f32 0.0, %v926
        %v928 = vpop.f32.mrb[0].mxu0
        %v929 = vadd.f32 0.0, %v928
        %930 = vmatprep.mubr.bf16.mxu0 0
        %931 = vmatmul.mubr.bf16.gmra.mrb[0].mxu0 %v848
        %v932 = vpop.f32.mrb[0].mxu0
        %v933 = vadd.f32 0.0, %v932
        %v934 = vpop.f32.mrb[0].mxu0
        %v935 = vadd.f32 0.0, %v934
        %v936 = vpop.f32.mrb[0].mxu0
        %v937 = vadd.f32 0.0, %v936
        %v938 = vpop.f32.mrb[0].mxu0
        %v939 = vadd.f32 0.0, %v938
        %940 = vmatprep.mubr.bf16.mxu0 0
        %941 = vmatmul.mubr.bf16.gmra.mrb[0].mxu0 %v851
        %v942 = vpop.f32.mrb[0].mxu0
        %v943 = vadd.f32 0.0, %v942
        %v944 = vpop.f32.mrb[0].mxu0
        %v945 = vadd.f32 0.0, %v944
        %v946 = vpop.f32.mrb[0].mxu0
        %v947 = vadd.f32 0.0, %v946
        %v948 = vpop.f32.mrb[0].mxu0
        %v949 = vadd.f32 0.0, %v948
        %950 = vmatprep.mubr.bf16.mxu0 0
        %951 = vmatmul.mubr.bf16.gmra.mrb[0].mxu0 %v854
        %v952 = vpop.f32.mrb[0].mxu0
        %v953 = vadd.f32 0.0, %v952
        %v954 = vpop.f32.mrb[0].mxu0
        %v955 = vadd.f32 0.0, %v954
        %v956 = vpop.f32.mrb[0].mxu0
        %v957 = vadd.f32 0.0, %v956
        %v958 = vpop.f32.mrb[0].mxu0
        %v959 = vadd.f32 0.0, %v958
        %960 = vmatprep.mubr.bf16.mxu0 0
        %961 = vmatmul.mubr.bf16.gmra.mrb[0].mxu0 %v857
        %v962 = vpop.f32.mrb[0].mxu0
        %v963 = vadd.f32 0.0, %v962
        %v964 = vpop.f32.mrb[0].mxu0
        %v965 = vadd.f32 0.0, %v964
        %v966 = vpop.f32.mrb[0].mxu0
        %v967 = vadd.f32 0.0, %v966
        %v968 = vpop.f32.mrb[0].mxu0
        %v969 = vadd.f32 0.0, %v968
        %970 = vmatprep.mubr.bf16.mxu0 0
        %971 = vmatmul.mubr.bf16.gmra.mrb[0].mxu0 %v860
        %v972 = vpop.f32.mrb[0].mxu0
        %v973 = vadd.f32 0.0, %v972
        %v974 = vpop.f32.mrb[0].mxu0
        %v975 = vadd.f32 0.0, %v974
        %v976 = vpop.f32.mrb[0].mxu0
        %v977 = vadd.f32 0.0, %v976
        %v978 = vpop.f32.mrb[0].mxu0
        %v979 = vadd.f32 0.0, %v978
        %980 = vmatprep.mubr.bf16.mxu0 0
        %981 = vmatmul.mubr.bf16.gmra.mrb[0].mxu0 %v863
        %v982 = vpop.f32.mrb[0].mxu0
        %v983 = vadd.f32 0.0, %v982
        %v984 = vpop.f32.mrb[0].mxu0
        %v985 = vadd.f32 0.0, %v984
        %v986 = vpop.f32.mrb[0].mxu0
        %v987 = vadd.f32 0.0, %v986
        %v988 = vpop.f32.mrb[0].mxu0
        %v989 = vadd.f32 0.0, %v988
        %990 = vmatprep.mubr.bf16.mxu0 0
        %991 = vmatmul.mubr.bf16.gmra.mrb[0].mxu0 %v866
        %v992 = vpop.f32.mrb[0].mxu0
        %v993 = vadd.f32 0.0, %v992
        %v994 = vpop.f32.mrb[0].mxu0
        %v995 = vadd.f32 0.0, %v994
        %v996 = vpop.f32.mrb[0].mxu0
        %v997 = vadd.f32 0.0, %v996
        %v998 = vpop.f32.mrb[0].mxu0
        %v999 = vadd.f32 0.0, %v998
        %1000 = vmatprep.mubr.bf16.mxu0 0
        %1001 = vmatmul.mubr.bf16.gmra.mrb[0].mxu0 %v869
        %v1002 = vpop.f32.mrb[0].mxu0
        %v1003 = vadd.f32 0.0, %v1002
        %v1004 = vpop.f32.mrb[0].mxu0
        %v1005 = vadd.f32 0.0, %v1004
        %v1006 = vpop.f32.mrb[0].mxu0
        %v1007 = vadd.f32 0.0, %v1006
        %v1008 = vpop.f32.mrb[0].mxu0
        %v1009 = vadd.f32 0.0, %v1008
        %1010 = vdwg.mxu0
        %v1013 = vunpack.c.l.b16 %v740
        %v1014 = vunpack.c.l.b16 %v752
        %v1015 = vpack.c.b16 %v787, %v1013
        %v1016 = vpack.c.b16 %v789, %v788
        %v1017 = vpack.c.b16 %v791, %v790
        %v1018 = vpack.c.b16 %v793, %v792
        %v1019 = vpack.c.b16 %v795, %v794
        %v1020 = vpack.c.b16 %v797, %v1014
        %v1021 = vpack.c.b16 %v799, %v798
        %v1022 = vpack.c.b16 %v801, %v800
        %v1023 = vpack.c.b16 %v803, %v802
        %v1024 = vpack.c.b16 %v805, %v804
        %v1027 = vunpack.c.l.s4 1966171168
        %v1028 = vunpack.c.0.s8 %v1027
        %v1029 = vlaneseq
        %v1030 = vshrl.u32 %v1029, 7
        %v1031 = vsub.s32 %v1028, %v1030
        %v1032 = vrot.slane %v764, %v1031
        %v1033 = vcombine.high %v1032, %v1032
        %v1035 = vunpack.c.l.s4 1966171168
        %v1036 = vunpack.c.0.s8 %v1035
        %v1037 = vlaneseq
        %v1038 = vshrl.u32 %v1037, 7
        %v1039 = vsub.s32 %v1036, %v1038
        %v1040 = vrot.slane %v1032, %v1039
        %v1042 = vunpack.c.l.s4 1966171168
        %v1043 = vunpack.c.0.s8 %v1042
        %v1044 = vlaneseq
        %v1045 = vshrl.u32 %v1044, 7
        %v1046 = vsub.s32 %v1043, %v1045
        %v1047 = vrot.slane %v1033, %v1046
        %v1049 = vsel %vm840, %v1015, 0
        %v1052 = vsel %vm840, %v1016, 0
        %v1055 = vsel %vm840, %v1017, 0
        %v1058 = vsel %vm840, %v1018, 0
        %v1061 = vsel %vm840, %v1019, 0
        %v1064 = vsel %vm840, %v1020, 0
        %v1067 = vsel %vm840, %v1021, 0
        %v1070 = vsel %vm840, %v1022, 0
        %v1073 = vsel %vm840, %v1023, 0
        %v1076 = vsel %vm840, %v1024, 0
        %v1079 = vsel %vm871, %v1040, 0
        %v1082 = vsel %vm871, %v1047, 0
        %1084 = vmatprep.subr.bf16.mxu0 %v1082
        %1085 = vmatpush1.bf16.msra.mxu0 %v1079
        %1086 = vmatprep.subr.bf16.mxu0 0
        %1087 = vmatpush1.bf16.msra.mxu0 0
        %1088 = vmatprep.subr.bf16.mxu0 0
        %1089 = vmatpush1.bf16.msra.mxu0 0
        %1090 = vmatprep.subr.bf16.mxu0 0
        %1091 = vmatpush1.bf16.msra.mxu0 0
        %1092 = vmatprep.subr.bf16.mxu0 0
        %1093 = vmatpush1.bf16.msra.mxu0 0
        %1094 = vmatprep.subr.bf16.mxu0 0
        %1095 = vmatpush1.bf16.msra.mxu0 0
        %1096 = vmatprep.subr.bf16.mxu0 0
        %1097 = vmatpush1.bf16.msra.mxu0 0
        %1098 = vmatprep.subr.bf16.mxu0 0
        %1099 = vmatpush1.bf16.msra.mxu0 0
        %1100 = vmatprep.subr.bf16.mxu0 0
        %1101 = vmatpush1.bf16.msra.mxu0 0
        %1102 = vmatprep.subr.bf16.mxu0 0
        %1103 = vmatpush1.bf16.msra.mxu0 0
        %1104 = vmatprep.subr.bf16.mxu0 0
        %1105 = vmatpush1.bf16.msra.mxu0 0
        %1106 = vmatprep.subr.bf16.mxu0 0
        %1107 = vmatpush1.bf16.msra.mxu0 0
        %1108 = vmatprep.subr.bf16.mxu0 0
        %1109 = vmatpush1.bf16.msra.mxu0 0
        %1110 = vmatprep.subr.bf16.mxu0 0
        %1111 = vmatpush1.bf16.msra.mxu0 0
        %1112 = vmatprep.subr.bf16.mxu0 0
        %1113 = vmatpush1.bf16.msra.mxu0 0
        %1114 = vmatprep.subr.bf16.mxu0 0
        %1115 = vmatpush1.bf16.msra.mxu0 0
        %1116 = vmatprep.mubr.bf16.mxu0 0
        %1117 = vmatmul.mubr.bf16.gmra.mrb[0].mxu0 %v1049
        %v1118 = vpop.f32.mrb[0].mxu0
        %v1119 = vadd.f32 %v913, %v1118
        %v1120 = vpop.f32.mrb[0].mxu0
        %v1121 = vadd.f32 %v915, %v1120
        %v1122 = vpop.f32.mrb[0].mxu0
        %v1123 = vadd.f32 %v917, %v1122
        %v1124 = vpop.f32.mrb[0].mxu0
        %v1125 = vadd.f32 %v919, %v1124
        %1126 = vmatprep.mubr.bf16.mxu0 0
        %1127 = vmatmul.mubr.bf16.gmra.mrb[0].mxu0 %v1052
        %v1128 = vpop.f32.mrb[0].mxu0
        %v1129 = vadd.f32 %v923, %v1128
        %v1130 = vpop.f32.mrb[0].mxu0
        %v1131 = vadd.f32 %v925, %v1130
        %v1132 = vpop.f32.mrb[0].mxu0
        %v1133 = vadd.f32 %v927, %v1132
        %v1134 = vpop.f32.mrb[0].mxu0
        %v1135 = vadd.f32 %v929, %v1134
        %1136 = vmatprep.mubr.bf16.mxu0 0
        %1137 = vmatmul.mubr.bf16.gmra.mrb[0].mxu0 %v1055
        %v1138 = vpop.f32.mrb[0].mxu0
        %v1139 = vadd.f32 %v933, %v1138
        %v1140 = vpop.f32.mrb[0].mxu0
        %v1141 = vadd.f32 %v935, %v1140
        %v1142 = vpop.f32.mrb[0].mxu0
        %v1143 = vadd.f32 %v937, %v1142
        %v1144 = vpop.f32.mrb[0].mxu0
        %v1145 = vadd.f32 %v939, %v1144
        %1146 = vmatprep.mubr.bf16.mxu0 0
        %1147 = vmatmul.mubr.bf16.gmra.mrb[0].mxu0 %v1058
        %v1148 = vpop.f32.mrb[0].mxu0
        %v1149 = vadd.f32 %v943, %v1148
        %v1150 = vpop.f32.mrb[0].mxu0
        %v1151 = vadd.f32 %v945, %v1150
        %v1152 = vpop.f32.mrb[0].mxu0
        %v1153 = vadd.f32 %v947, %v1152
        %v1154 = vpop.f32.mrb[0].mxu0
        %v1155 = vadd.f32 %v949, %v1154
        %1156 = vmatprep.mubr.bf16.mxu0 0
        %1157 = vmatmul.mubr.bf16.gmra.mrb[0].mxu0 %v1061
        %v1158 = vpop.f32.mrb[0].mxu0
        %v1159 = vadd.f32 %v953, %v1158
        %v1160 = vpop.f32.mrb[0].mxu0
        %v1161 = vadd.f32 %v955, %v1160
        %v1162 = vpop.f32.mrb[0].mxu0
        %v1163 = vadd.f32 %v957, %v1162
        %v1164 = vpop.f32.mrb[0].mxu0
        %v1165 = vadd.f32 %v959, %v1164
        %1166 = vmatprep.mubr.bf16.mxu0 0
        %1167 = vmatmul.mubr.bf16.gmra.mrb[0].mxu0 %v1064
        %v1168 = vpop.f32.mrb[0].mxu0
        %v1169 = vadd.f32 %v963, %v1168
        %v1170 = vpop.f32.mrb[0].mxu0
        %v1171 = vadd.f32 %v965, %v1170
        %v1172 = vpop.f32.mrb[0].mxu0
        %v1173 = vadd.f32 %v967, %v1172
        %v1174 = vpop.f32.mrb[0].mxu0
        %v1175 = vadd.f32 %v969, %v1174
        %1176 = vmatprep.mubr.bf16.mxu0 0
        %1177 = vmatmul.mubr.bf16.gmra.mrb[0].mxu0 %v1067
        %v1178 = vpop.f32.mrb[0].mxu0
        %v1179 = vadd.f32 %v973, %v1178
        %v1180 = vpop.f32.mrb[0].mxu0
        %v1181 = vadd.f32 %v975, %v1180
        %v1182 = vpop.f32.mrb[0].mxu0
        %v1183 = vadd.f32 %v977, %v1182
        %v1184 = vpop.f32.mrb[0].mxu0
        %v1185 = vadd.f32 %v979, %v1184
        %1186 = vmatprep.mubr.bf16.mxu0 0
        %1187 = vmatmul.mubr.bf16.gmra.mrb[0].mxu0 %v1070
        %v1188 = vpop.f32.mrb[0].mxu0
        %v1189 = vadd.f32 %v983, %v1188
        %v1190 = vpop.f32.mrb[0].mxu0
        %v1191 = vadd.f32 %v985, %v1190
        %v1192 = vpop.f32.mrb[0].mxu0
        %v1193 = vadd.f32 %v987, %v1192
        %v1194 = vpop.f32.mrb[0].mxu0
        %v1195 = vadd.f32 %v989, %v1194
        %1196 = vmatprep.mubr.bf16.mxu0 0
        %1197 = vmatmul.mubr.bf16.gmra.mrb[0].mxu0 %v1073
        %v1198 = vpop.f32.mrb[0].mxu0
        %v1199 = vadd.f32 %v993, %v1198
        %v1200 = vpop.f32.mrb[0].mxu0
        %v1201 = vadd.f32 %v995, %v1200
        %v1202 = vpop.f32.mrb[0].mxu0
        %v1203 = vadd.f32 %v997, %v1202
        %v1204 = vpop.f32.mrb[0].mxu0
        %v1205 = vadd.f32 %v999, %v1204
        %1206 = vmatprep.mubr.bf16.mxu0 0
        %1207 = vmatmul.mubr.bf16.gmra.mrb[0].mxu0 %v1076
        %v1208 = vpop.f32.mrb[0].mxu0
        %v1209 = vadd.f32 %v1003, %v1208
        %v1210 = vpop.f32.mrb[0].mxu0
        %v1211 = vadd.f32 %v1005, %v1210
        %v1212 = vpop.f32.mrb[0].mxu0
        %v1213 = vadd.f32 %v1007, %v1212
        %v1214 = vpop.f32.mrb[0].mxu0
        %v1215 = vadd.f32 %v1009, %v1214
        %1216 = vdwg.mxu0
        %s1217 = scalar_lea.vmem %s4, 4
        %v1218 = vld [vmem:[%s1217] sm:$0x3]
        %v1221 = vunpack.c.l.b16 %v751
        %v1222 = vunpack.c.l.b16 %v763
        %v1223 = vpack.c.b16 %v1221, %v796
        %v1224 = vpack.c.b16 %v1222, %v806
        %v1227 = vunpack.c.l.s4 1966171168
        %v1228 = vunpack.c.0.s8 %v1227
        %v1229 = vlaneseq
        %v1230 = vshrl.u32 %v1229, 7
        %v1231 = vsub.s32 %v1228, %v1230
        %v1232 = vrot.slane %v1218, %v1231
        %v1233 = vcombine.high %v1232, %v1232
        %v1235 = vunpack.c.l.s4 1966171168
        %v1236 = vunpack.c.0.s8 %v1235
        %v1237 = vlaneseq
        %v1238 = vshrl.u32 %v1237, 7
        %v1239 = vsub.s32 %v1236, %v1238
        %v1240 = vrot.slane %v1232, %v1239
        %v1242 = vunpack.c.l.s4 1966171168
        %v1243 = vunpack.c.0.s8 %v1242
        %v1244 = vlaneseq
        %v1245 = vshrl.u32 %v1244, 7
        %v1246 = vsub.s32 %v1243, %v1245
        %v1247 = vrot.slane %v1233, %v1246
        %v1249 = vsel %vm840, %v1223, 0
        %v1252 = vsel %vm840, %v1224, 0
        %v1255 = vsel %vm871, %v1240, 0
        %v1258 = vsel %vm871, %v1247, 0
        %1260 = vmatprep.subr.bf16.mxu0 %v1258
        %1261 = vmatpush1.bf16.msra.mxu0 %v1255
        %1262 = vmatprep.subr.bf16.mxu0 0
        %1263 = vmatpush1.bf16.msra.mxu0 0
        %1264 = vmatprep.subr.bf16.mxu0 0
        %1265 = vmatpush1.bf16.msra.mxu0 0
        %1266 = vmatprep.subr.bf16.mxu0 0
        %1267 = vmatpush1.bf16.msra.mxu0 0
        %1268 = vmatprep.subr.bf16.mxu0 0
        %1269 = vmatpush1.bf16.msra.mxu0 0
        %1270 = vmatprep.subr.bf16.mxu0 0
        %1271 = vmatpush1.bf16.msra.mxu0 0
        %1272 = vmatprep.subr.bf16.mxu0 0
        %1273 = vmatpush1.bf16.msra.mxu0 0
        %1274 = vmatprep.subr.bf16.mxu0 0
        %1275 = vmatpush1.bf16.msra.mxu0 0
        %1276 = vmatprep.subr.bf16.mxu0 0
        %1277 = vmatpush1.bf16.msra.mxu0 0
        %1278 = vmatprep.subr.bf16.mxu0 0
        %1279 = vmatpush1.bf16.msra.mxu0 0
        %1280 = vmatprep.subr.bf16.mxu0 0
        %1281 = vmatpush1.bf16.msra.mxu0 0
        %1282 = vmatprep.subr.bf16.mxu0 0
        %1283 = vmatpush1.bf16.msra.mxu0 0
        %1284 = vmatprep.subr.bf16.mxu0 0
        %1285 = vmatpush1.bf16.msra.mxu0 0
        %1286 = vmatprep.subr.bf16.mxu0 0
        %1287 = vmatpush1.bf16.msra.mxu0 0
        %1288 = vmatprep.subr.bf16.mxu0 0
        %1289 = vmatpush1.bf16.msra.mxu0 0
        %1290 = vmatprep.subr.bf16.mxu0 0
        %1291 = vmatpush1.bf16.msra.mxu0 0
        %1292 = vmatprep.mubr.bf16.mxu0 0
        %1293 = vmatmul.mubr.bf16.gmra.mrb[0].mxu0 %v1052
        %v1294 = vpop.f32.mrb[0].mxu0
        %v1295 = vadd.f32 0.0, %v1294
        %v1296 = vpop.f32.mrb[0].mxu0
        %v1297 = vadd.f32 0.0, %v1296
        %v1298 = vpop.f32.mrb[0].mxu0
        %v1299 = vadd.f32 0.0, %v1298
        %v1300 = vpop.f32.mrb[0].mxu0
        %v1301 = vadd.f32 0.0, %v1300
        %1302 = vmatprep.mubr.bf16.mxu0 0
        %1303 = vmatmul.mubr.bf16.gmra.mrb[0].mxu0 %v1055
        %v1304 = vpop.f32.mrb[0].mxu0
        %v1305 = vadd.f32 0.0, %v1304
        %v1306 = vpop.f32.mrb[0].mxu0
        %v1307 = vadd.f32 0.0, %v1306
        %v1308 = vpop.f32.mrb[0].mxu0
        %v1309 = vadd.f32 0.0, %v1308
        %v1310 = vpop.f32.mrb[0].mxu0
        %v1311 = vadd.f32 0.0, %v1310
        %1312 = vmatprep.mubr.bf16.mxu0 0
        %1313 = vmatmul.mubr.bf16.gmra.mrb[0].mxu0 %v1058
        %v1314 = vpop.f32.mrb[0].mxu0
        %v1315 = vadd.f32 0.0, %v1314
        %v1316 = vpop.f32.mrb[0].mxu0
        %v1317 = vadd.f32 0.0, %v1316
        %v1318 = vpop.f32.mrb[0].mxu0
        %v1319 = vadd.f32 0.0, %v1318
        %v1320 = vpop.f32.mrb[0].mxu0
        %v1321 = vadd.f32 0.0, %v1320
        %1322 = vmatprep.mubr.bf16.mxu0 0
        %1323 = vmatmul.mubr.bf16.gmra.mrb[0].mxu0 %v1061
        %v1324 = vpop.f32.mrb[0].mxu0
        %v1325 = vadd.f32 0.0, %v1324
        %v1326 = vpop.f32.mrb[0].mxu0
        %v1327 = vadd.f32 0.0, %v1326
        %v1328 = vpop.f32.mrb[0].mxu0
        %v1329 = vadd.f32 0.0, %v1328
        %v1330 = vpop.f32.mrb[0].mxu0
        %v1331 = vadd.f32 0.0, %v1330
        %1332 = vmatprep.mubr.bf16.mxu0 0
        %1333 = vmatmul.mubr.bf16.gmra.mrb[0].mxu0 %v1249
        %v1334 = vpop.f32.mrb[0].mxu0
        %v1335 = vadd.f32 0.0, %v1334
        %v1336 = vpop.f32.mrb[0].mxu0
        %v1337 = vadd.f32 0.0, %v1336
        %v1338 = vpop.f32.mrb[0].mxu0
        %v1339 = vadd.f32 0.0, %v1338
        %v1340 = vpop.f32.mrb[0].mxu0
        %v1341 = vadd.f32 0.0, %v1340
        %1342 = vmatprep.mubr.bf16.mxu0 0
        %1343 = vmatmul.mubr.bf16.gmra.mrb[0].mxu0 %v1067
        %v1344 = vpop.f32.mrb[0].mxu0
        %v1345 = vadd.f32 0.0, %v1344
        %v1346 = vpop.f32.mrb[0].mxu0
        %v1347 = vadd.f32 0.0, %v1346
        %v1348 = vpop.f32.mrb[0].mxu0
        %v1349 = vadd.f32 0.0, %v1348
        %v1350 = vpop.f32.mrb[0].mxu0
        %v1351 = vadd.f32 0.0, %v1350
        %1352 = vmatprep.mubr.bf16.mxu0 0
        %1353 = vmatmul.mubr.bf16.gmra.mrb[0].mxu0 %v1070
        %v1354 = vpop.f32.mrb[0].mxu0
        %v1355 = vadd.f32 0.0, %v1354
        %v1356 = vpop.f32.mrb[0].mxu0
        %v1357 = vadd.f32 0.0, %v1356
        %v1358 = vpop.f32.mrb[0].mxu0
        %v1359 = vadd.f32 0.0, %v1358
        %v1360 = vpop.f32.mrb[0].mxu0
        %v1361 = vadd.f32 0.0, %v1360
        %1362 = vmatprep.mubr.bf16.mxu0 0
        %1363 = vmatmul.mubr.bf16.gmra.mrb[0].mxu0 %v1073
        %v1364 = vpop.f32.mrb[0].mxu0
        %v1365 = vadd.f32 0.0, %v1364
        %v1366 = vpop.f32.mrb[0].mxu0
        %v1367 = vadd.f32 0.0, %v1366
        %v1368 = vpop.f32.mrb[0].mxu0
        %v1369 = vadd.f32 0.0, %v1368
        %v1370 = vpop.f32.mrb[0].mxu0
        %v1371 = vadd.f32 0.0, %v1370
        %1372 = vmatprep.mubr.bf16.mxu0 0
        %1373 = vmatmul.mubr.bf16.gmra.mrb[0].mxu0 %v1076
        %v1374 = vpop.f32.mrb[0].mxu0
        %v1375 = vadd.f32 0.0, %v1374
        %v1376 = vpop.f32.mrb[0].mxu0
        %v1377 = vadd.f32 0.0, %v1376
        %v1378 = vpop.f32.mrb[0].mxu0
        %v1379 = vadd.f32 0.0, %v1378
        %v1380 = vpop.f32.mrb[0].mxu0
        %v1381 = vadd.f32 0.0, %v1380
        %1382 = vmatprep.mubr.bf16.mxu0 0
        %1383 = vmatmul.mubr.bf16.gmra.mrb[0].mxu0 %v1252
        %v1384 = vpop.f32.mrb[0].mxu0
        %v1385 = vadd.f32 0.0, %v1384
        %v1386 = vpop.f32.mrb[0].mxu0
        %v1387 = vadd.f32 0.0, %v1386
        %v1388 = vpop.f32.mrb[0].mxu0
        %v1389 = vadd.f32 0.0, %v1388
        %v1390 = vpop.f32.mrb[0].mxu0
        %v1391 = vadd.f32 0.0, %v1390
        %1392 = vdwg.mxu0
        %v1393 = vadd.f32 %v1119, %v1295
        %v1394 = vadd.f32 %v1121, %v1297
        %v1395 = vadd.f32 %v1123, %v1299
        %v1396 = vadd.f32 %v1125, %v1301
        %v1397 = vadd.f32 %v1129, %v1305
        %v1398 = vadd.f32 %v1131, %v1307
        %v1399 = vadd.f32 %v1133, %v1309
        %v1400 = vadd.f32 %v1135, %v1311
        %v1401 = vadd.f32 %v1139, %v1315
        %v1402 = vadd.f32 %v1141, %v1317
        %v1403 = vadd.f32 %v1143, %v1319
        %v1404 = vadd.f32 %v1145, %v1321
        %v1405 = vadd.f32 %v1149, %v1325
        %v1406 = vadd.f32 %v1151, %v1327
        %v1407 = vadd.f32 %v1153, %v1329
        %v1408 = vadd.f32 %v1155, %v1331
        %v1409 = vadd.f32 %v1159, %v1335
        %v1410 = vadd.f32 %v1161, %v1337
        %v1411 = vadd.f32 %v1163, %v1339
        %v1412 = vadd.f32 %v1165, %v1341
        %v1413 = vadd.f32 %v1169, %v1345
        %v1414 = vadd.f32 %v1171, %v1347
        %v1415 = vadd.f32 %v1173, %v1349
        %v1416 = vadd.f32 %v1175, %v1351
        %v1417 = vadd.f32 %v1179, %v1355
        %v1418 = vadd.f32 %v1181, %v1357
        %v1419 = vadd.f32 %v1183, %v1359
        %v1420 = vadd.f32 %v1185, %v1361
        %v1421 = vadd.f32 %v1189, %v1365
        %v1422 = vadd.f32 %v1191, %v1367
        %v1423 = vadd.f32 %v1193, %v1369
        %v1424 = vadd.f32 %v1195, %v1371
        %v1425 = vadd.f32 %v1199, %v1375
        %v1426 = vadd.f32 %v1201, %v1377
        %v1427 = vadd.f32 %v1203, %v1379
        %v1428 = vadd.f32 %v1205, %v1381
        %v1429 = vadd.f32 %v1209, %v1385
        %v1430 = vadd.f32 %v1211, %v1387
        %v1431 = vadd.f32 %v1213, %v1389
        %v1432 = vadd.f32 %v1215, %v1391
        %v1433 = vld [vmem:[%s5] sm:$0x3]
        %v1435 = vlaneseq
        %v1436 = vshrl.u32 %v1435, 7
        %v1437 = vsub.s32 0, %v1436
        %v1438 = vrot.slane %v1433, %v1437
        %v1439 = vlaneseq
        %v1440 = vshrl.u32 %v1439, 7
        %v1441 = vsub.s32 1, %v1440
        %v1442 = vrot.slane %v1433, %v1441
        %v1445 = vadd.f32 %v1393, %v1438
        %v1446 = vadd.f32 %v1394, %v1442
        %v1447 = vadd.f32 %v1395, %v1438
        %v1448 = vadd.f32 %v1396, %v1442
        %v1449 = vadd.f32 %v1397, %v1438
        %v1450 = vadd.f32 %v1398, %v1442
        %v1451 = vadd.f32 %v1399, %v1438
        %v1452 = vadd.f32 %v1400, %v1442
        %v1453 = vadd.f32 %v1401, %v1438
        %v1454 = vadd.f32 %v1402, %v1442
        %v1455 = vadd.f32 %v1403, %v1438
        %v1456 = vadd.f32 %v1404, %v1442
        %v1457 = vadd.f32 %v1405, %v1438
        %v1458 = vadd.f32 %v1406, %v1442
        %v1459 = vadd.f32 %v1407, %v1438
        %v1460 = vadd.f32 %v1408, %v1442
        %v1461 = vadd.f32 %v1409, %v1438
        %v1462 = vadd.f32 %v1410, %v1442
        %v1463 = vadd.f32 %v1411, %v1438
        %v1464 = vadd.f32 %v1412, %v1442
        %v1465 = vadd.f32 %v1413, %v1438
        %v1466 = vadd.f32 %v1414, %v1442
        %v1467 = vadd.f32 %v1415, %v1438
        %v1468 = vadd.f32 %v1416, %v1442
        %v1469 = vadd.f32 %v1417, %v1438
        %v1470 = vadd.f32 %v1418, %v1442
        %v1471 = vadd.f32 %v1419, %v1438
        %v1472 = vadd.f32 %v1420, %v1442
        %v1473 = vadd.f32 %v1421, %v1438
        %v1474 = vadd.f32 %v1422, %v1442
        %v1475 = vadd.f32 %v1423, %v1438
        %v1476 = vadd.f32 %v1424, %v1442
        %v1477 = vadd.f32 %v1425, %v1438
        %v1478 = vadd.f32 %v1426, %v1442
        %v1479 = vadd.f32 %v1427, %v1438
        %v1480 = vadd.f32 %v1428, %v1442
        %v1481 = vadd.f32 %v1429, %v1438
        %v1482 = vadd.f32 %v1430, %v1442
        %v1483 = vadd.f32 %v1431, %v1438
        %v1484 = vadd.f32 %v1432, %v1442
        %v1485 = vxor.u32 %v1445, 2147483648
        %v1486 = vxor.u32 %v1447, 2147483648
        %v1487 = vxor.u32 %v1449, 2147483648
        %v1488 = vxor.u32 %v1451, 2147483648
        %v1489 = vxor.u32 %v1453, 2147483648
        %v1490 = vxor.u32 %v1455, 2147483648
        %v1491 = vxor.u32 %v1457, 2147483648
        %v1492 = vxor.u32 %v1459, 2147483648
        %v1493 = vxor.u32 %v1461, 2147483648
        %v1494 = vxor.u32 %v1463, 2147483648
        %v1495 = vxor.u32 %v1465, 2147483648
        %v1496 = vxor.u32 %v1467, 2147483648
        %v1497 = vxor.u32 %v1469, 2147483648
        %v1498 = vxor.u32 %v1471, 2147483648
        %v1499 = vxor.u32 %v1473, 2147483648
        %v1500 = vxor.u32 %v1475, 2147483648
        %v1501 = vxor.u32 %v1477, 2147483648
        %v1502 = vxor.u32 %v1479, 2147483648
        %v1503 = vxor.u32 %v1481, 2147483648
        %v1504 = vxor.u32 %v1483, 2147483648
        %v1505 = vmul.f32 %v1485, 1.442695
        %v1506 = vpow.pop %v1505
        %v1507 = vmul.f32 %v1486, 1.442695
        %v1508 = vpow.pop %v1507
        %v1509 = vmul.f32 %v1487, 1.442695
        %v1510 = vpow.pop %v1509
        %v1511 = vmul.f32 %v1488, 1.442695
        %v1512 = vpow.pop %v1511
        %v1513 = vmul.f32 %v1489, 1.442695
        %v1514 = vpow.pop %v1513
        %v1515 = vmul.f32 %v1490, 1.442695
        %v1516 = vpow.pop %v1515
        %v1517 = vmul.f32 %v1491, 1.442695
        %v1518 = vpow.pop %v1517
        %v1519 = vmul.f32 %v1492, 1.442695
        %v1520 = vpow.pop %v1519
        %v1521 = vmul.f32 %v1493, 1.442695
        %v1522 = vpow.pop %v1521
        %v1523 = vmul.f32 %v1494, 1.442695
        %v1524 = vpow.pop %v1523
        %v1525 = vmul.f32 %v1495, 1.442695
        %v1526 = vpow.pop %v1525
        %v1527 = vmul.f32 %v1496, 1.442695
        %v1528 = vpow.pop %v1527
        %v1529 = vmul.f32 %v1497, 1.442695
        %v1530 = vpow.pop %v1529
        %v1531 = vmul.f32 %v1498, 1.442695
        %v1532 = vpow.pop %v1531
        %v1533 = vmul.f32 %v1499, 1.442695
        %v1534 = vpow.pop %v1533
        %v1535 = vmul.f32 %v1500, 1.442695
        %v1536 = vpow.pop %v1535
        %v1537 = vmul.f32 %v1501, 1.442695
        %v1538 = vpow.pop %v1537
        %v1539 = vmul.f32 %v1502, 1.442695
        %v1540 = vpow.pop %v1539
        %v1541 = vmul.f32 %v1503, 1.442695
        %v1542 = vpow.pop %v1541
        %v1543 = vmul.f32 %v1504, 1.442695
        %v1544 = vpow.pop %v1543
        %v1545 = vadd.f32 %v1506, 1.0
        %v1546 = vadd.f32 %v1508, 1.0
        %v1547 = vadd.f32 %v1510, 1.0
        %v1548 = vadd.f32 %v1512, 1.0
        %v1549 = vadd.f32 %v1514, 1.0
        %v1550 = vadd.f32 %v1516, 1.0
        %v1551 = vadd.f32 %v1518, 1.0
        %v1552 = vadd.f32 %v1520, 1.0
        %v1553 = vadd.f32 %v1522, 1.0
        %v1554 = vadd.f32 %v1524, 1.0
        %v1555 = vadd.f32 %v1526, 1.0
        %v1556 = vadd.f32 %v1528, 1.0
        %v1557 = vadd.f32 %v1530, 1.0
        %v1558 = vadd.f32 %v1532, 1.0
        %v1559 = vadd.f32 %v1534, 1.0
        %v1560 = vadd.f32 %v1536, 1.0
        %v1561 = vadd.f32 %v1538, 1.0
        %v1562 = vadd.f32 %v1540, 1.0
        %v1563 = vadd.f32 %v1542, 1.0
        %v1564 = vadd.f32 %v1544, 1.0
        %v1565 = vrcp.pop %v1545
        %v1566 = vmul.f32 1.0, %v1565
        %v1567 = vrcp.pop %v1546
        %v1568 = vmul.f32 1.0, %v1567
        %v1569 = vrcp.pop %v1547
        %v1570 = vmul.f32 1.0, %v1569
        %v1571 = vrcp.pop %v1548
        %v1572 = vmul.f32 1.0, %v1571
        %v1573 = vrcp.pop %v1549
        %v1574 = vmul.f32 1.0, %v1573
        %v1575 = vrcp.pop %v1550
        %v1576 = vmul.f32 1.0, %v1575
        %v1577 = vrcp.pop %v1551
        %v1578 = vmul.f32 1.0, %v1577
        %v1579 = vrcp.pop %v1552
        %v1580 = vmul.f32 1.0, %v1579
        %v1581 = vrcp.pop %v1553
        %v1582 = vmul.f32 1.0, %v1581
        %v1583 = vrcp.pop %v1554
        %v1584 = vmul.f32 1.0, %v1583
        %v1585 = vrcp.pop %v1555
        %v1586 = vmul.f32 1.0, %v1585
        %v1587 = vrcp.pop %v1556
        %v1588 = vmul.f32 1.0, %v1587
        %v1589 = vrcp.pop %v1557
        %v1590 = vmul.f32 1.0, %v1589
        %v1591 = vrcp.pop %v1558
        %v1592 = vmul.f32 1.0, %v1591
        %v1593 = vrcp.pop %v1559
        %v1594 = vmul.f32 1.0, %v1593
        %v1595 = vrcp.pop %v1560
        %v1596 = vmul.f32 1.0, %v1595
        %v1597 = vrcp.pop %v1561
        %v1598 = vmul.f32 1.0, %v1597
        %v1599 = vrcp.pop %v1562
        %v1600 = vmul.f32 1.0, %v1599
        %v1601 = vrcp.pop %v1563
        %v1602 = vmul.f32 1.0, %v1601
        %v1603 = vrcp.pop %v1564
        %v1604 = vmul.f32 1.0, %v1603
        %1625 = vrot.lane.b32.xlu0 %v1566, 64
        %v1626 = vpop.permute.xlu0 %1625
        %1627 = vrot.lane.b32.xlu0 %v1568, 64
        %v1628 = vpop.permute.xlu0 %1627
        %1629 = vrot.lane.b32.xlu0 %v1570, 64
        %v1630 = vpop.permute.xlu0 %1629
        %1631 = vrot.lane.b32.xlu0 %v1572, 64
        %v1632 = vpop.permute.xlu0 %1631
        %1633 = vrot.lane.b32.xlu0 %v1574, 64
        %v1634 = vpop.permute.xlu0 %1633
        %1635 = vrot.lane.b32.xlu0 %v1576, 64
        %v1636 = vpop.permute.xlu0 %1635
        %1637 = vrot.lane.b32.xlu0 %v1578, 64
        %v1638 = vpop.permute.xlu0 %1637
        %1639 = vrot.lane.b32.xlu0 %v1580, 64
        %v1640 = vpop.permute.xlu0 %1639
        %1641 = vrot.lane.b32.xlu0 %v1582, 64
        %v1642 = vpop.permute.xlu0 %1641
        %1643 = vrot.lane.b32.xlu0 %v1584, 64
        %v1644 = vpop.permute.xlu0 %1643
        %1645 = vrot.lane.b32.xlu0 %v1586, 64
        %v1646 = vpop.permute.xlu0 %1645
        %1647 = vrot.lane.b32.xlu0 %v1588, 64
        %v1648 = vpop.permute.xlu0 %1647
        %1649 = vrot.lane.b32.xlu0 %v1590, 64
        %v1650 = vpop.permute.xlu0 %1649
        %1651 = vrot.lane.b32.xlu0 %v1592, 64
        %v1652 = vpop.permute.xlu0 %1651
        %1653 = vrot.lane.b32.xlu0 %v1594, 64
        %v1654 = vpop.permute.xlu0 %1653
        %1655 = vrot.lane.b32.xlu0 %v1596, 64
        %v1656 = vpop.permute.xlu0 %1655
        %1657 = vrot.lane.b32.xlu0 %v1598, 64
        %v1658 = vpop.permute.xlu0 %1657
        %1659 = vrot.lane.b32.xlu0 %v1600, 64
        %v1660 = vpop.permute.xlu0 %1659
        %1661 = vrot.lane.b32.xlu0 %v1602, 64
        %v1662 = vpop.permute.xlu0 %1661
        %1663 = vrot.lane.b32.xlu0 %v1604, 64
        %v1664 = vpop.permute.xlu0 %1663
        %v1685 = vmul.f32 %v1445, %v1626
        %v1686 = vmul.f32 %v1447, %v1628
        %v1687 = vmul.f32 %v1449, %v1630
        %v1688 = vmul.f32 %v1451, %v1632
        %v1689 = vmul.f32 %v1453, %v1634
        %v1690 = vmul.f32 %v1455, %v1636
        %v1691 = vmul.f32 %v1457, %v1638
        %v1692 = vmul.f32 %v1459, %v1640
        %v1693 = vmul.f32 %v1461, %v1642
        %v1694 = vmul.f32 %v1463, %v1644
        %v1695 = vmul.f32 %v1465, %v1646
        %v1696 = vmul.f32 %v1467, %v1648
        %v1697 = vmul.f32 %v1469, %v1650
        %v1698 = vmul.f32 %v1471, %v1652
        %v1699 = vmul.f32 %v1473, %v1654
        %v1700 = vmul.f32 %v1475, %v1656
        %v1701 = vmul.f32 %v1477, %v1658
        %v1702 = vmul.f32 %v1479, %v1660
        %v1703 = vmul.f32 %v1481, %v1662
        %v1704 = vmul.f32 %v1483, %v1664
        %v1705 = vadd.f32 %v1685, %v1446
        %v1706 = vadd.f32 %v1686, %v1448
        %v1707 = vadd.f32 %v1687, %v1450
        %v1708 = vadd.f32 %v1688, %v1452
        %v1709 = vadd.f32 %v1689, %v1454
        %v1710 = vadd.f32 %v1690, %v1456
        %v1711 = vadd.f32 %v1691, %v1458
        %v1712 = vadd.f32 %v1692, %v1460
        %v1713 = vadd.f32 %v1693, %v1462
        %v1714 = vadd.f32 %v1694, %v1464
        %v1715 = vadd.f32 %v1695, %v1466
        %v1716 = vadd.f32 %v1696, %v1468
        %v1717 = vadd.f32 %v1697, %v1470
        %v1718 = vadd.f32 %v1698, %v1472
        %v1719 = vadd.f32 %v1699, %v1474
        %v1720 = vadd.f32 %v1700, %v1476
        %v1721 = vadd.f32 %v1701, %v1478
        %v1722 = vadd.f32 %v1702, %v1480
        %v1723 = vadd.f32 %v1703, %v1482
        %v1724 = vadd.f32 %v1704, %v1484
        %v1725 = vmax.f32 %v1705, 0.0
        %v1726 = vmax.f32 %v1706, 0.0
        %v1727 = vmax.f32 %v1707, 0.0
        %v1728 = vmax.f32 %v1708, 0.0
        %v1729 = vmax.f32 %v1709, 0.0
        %v1730 = vmax.f32 %v1710, 0.0
        %v1731 = vmax.f32 %v1711, 0.0
        %v1732 = vmax.f32 %v1712, 0.0
        %v1733 = vmax.f32 %v1713, 0.0
        %v1734 = vmax.f32 %v1714, 0.0
        %v1735 = vmax.f32 %v1715, 0.0
        %v1736 = vmax.f32 %v1716, 0.0
        %v1737 = vmax.f32 %v1717, 0.0
        %v1738 = vmax.f32 %v1718, 0.0
        %v1739 = vmax.f32 %v1719, 0.0
        %v1740 = vmax.f32 %v1720, 0.0
        %v1741 = vmax.f32 %v1721, 0.0
        %v1742 = vmax.f32 %v1722, 0.0
        %v1743 = vmax.f32 %v1723, 0.0
        %v1744 = vmax.f32 %v1724, 0.0
        %v1745 = vpack.c.bf16 %v1725, %v1725
        %v1746 = vpack.c.bf16 %v1726, %v1726
        %v1747 = vpack.c.bf16 %v1727, %v1727
        %v1748 = vpack.c.bf16 %v1728, %v1728
        %v1749 = vpack.c.bf16 %v1729, %v1729
        %v1750 = vpack.c.bf16 %v1730, %v1730
        %v1751 = vpack.c.bf16 %v1731, %v1731
        %v1752 = vpack.c.bf16 %v1732, %v1732
        %v1753 = vpack.c.bf16 %v1733, %v1733
        %v1754 = vpack.c.bf16 %v1734, %v1734
        %v1755 = vpack.c.bf16 %v1735, %v1735
        %v1756 = vpack.c.bf16 %v1736, %v1736
        %v1757 = vpack.c.bf16 %v1737, %v1737
        %v1758 = vpack.c.bf16 %v1738, %v1738
        %v1759 = vpack.c.bf16 %v1739, %v1739
        %v1760 = vpack.c.bf16 %v1740, %v1740
        %v1761 = vpack.c.bf16 %v1741, %v1741
        %v1762 = vpack.c.bf16 %v1742, %v1742
        %v1763 = vpack.c.bf16 %v1743, %v1743
        %v1764 = vpack.c.bf16 %v1744, %v1744
        %v1765 = vld [vmem:[%s6] sm:$0xf]
        %v1766 = vld [vmem:[%s6 + $0x4] sm:$0xf]
        %v1767 = vld [vmem:[%s6 + $0x8] sm:$0xf]
        %v1768 = vld [vmem:[%s6 + $0xc] sm:$0xf]
        %v1769 = vld [vmem:[%s6 + $0x10] sm:$0xf]
        %v1770 = vld [vmem:[%s6 + $0x14] sm:$0xf]
        %v1771 = vld [vmem:[%s6 + $0x18] sm:$0xf]
        %v1772 = vld [vmem:[%s6 + $0x1c] sm:$0xf]
        %v1793 = vunpack.c.l.b16 %v1745
        %v1794 = vunpack.c.l.b16 %v1746
        %v1795 = vunpack.c.l.b16 %v1747
        %v1796 = vunpack.c.l.b16 %v1748
        %v1797 = vunpack.c.l.b16 %v1749
        %v1798 = vunpack.c.l.b16 %v1750
        %v1799 = vunpack.c.l.b16 %v1751
        %v1800 = vunpack.c.l.b16 %v1752
        %v1801 = vunpack.c.l.b16 %v1753
        %v1802 = vunpack.c.l.b16 %v1754
        %v1803 = vunpack.c.l.b16 %v1755
        %v1804 = vunpack.c.l.b16 %v1756
        %v1805 = vunpack.c.l.b16 %v1757
        %v1806 = vunpack.c.l.b16 %v1758
        %v1807 = vunpack.c.l.b16 %v1759
        %v1808 = vunpack.c.l.b16 %v1760
        %v1809 = vunpack.c.l.b16 %v1761
        %v1810 = vunpack.c.l.b16 %v1762
        %v1811 = vunpack.c.l.b16 %v1763
        %v1812 = vunpack.c.l.b16 %v1764
        %v1813 = vpack.c.b16 %v1794, %v1793
        %v1814 = vpack.c.b16 %v1796, %v1795
        %v1815 = vpack.c.b16 %v1798, %v1797
        %v1816 = vpack.c.b16 %v1800, %v1799
        %v1817 = vpack.c.b16 %v1802, %v1801
        %v1818 = vpack.c.b16 %v1804, %v1803
        %v1819 = vpack.c.b16 %v1806, %v1805
        %v1820 = vpack.c.b16 %v1808, %v1807
        %v1821 = vpack.c.b16 %v1810, %v1809
        %v1822 = vpack.c.b16 %v1812, %v1811
        %v1831 = vunpack.c.l.b16 %v1765
        %v1832 = vunpack.c.l.b16 %v1766
        %v1833 = vunpack.c.l.b16 %v1767
        %v1834 = vunpack.c.l.b16 %v1768
        %v1835 = vunpack.c.l.b16 %v1769
        %v1836 = vunpack.c.l.b16 %v1770
        %v1837 = vunpack.c.l.b16 %v1771
        %v1838 = vunpack.c.l.b16 %v1772
        %v1839 = vpack.c.b16 %v1832, %v1831
        %v1840 = vpack.c.b16 %v1834, %v1833
        %v1841 = vpack.c.b16 %v1836, %v1835
        %v1842 = vpack.c.b16 %v1838, %v1837
        %vm1847 = vcmask 523264
        %v1849 = vsel %vm1847, %v1813, 0
        %v1852 = vsel %vm1847, %v1814, 0
        %v1855 = vsel %vm1847, %v1815, 0
        %v1858 = vsel %vm1847, %v1816, 0
        %v1861 = vsel %vm1847, %v1817, 0
        %v1864 = vsel %vm1847, %v1818, 0
        %v1867 = vsel %vm1847, %v1819, 0
        %v1870 = vsel %vm1847, %v1820, 0
        %v1873 = vsel %vm1847, %v1821, 0
        %v1876 = vsel %vm1847, %v1822, 0
        %1878 = vmatprep.subr.bf16.mxu0 0
        %1879 = vmatpush1.bf16.msra.mxu0 %v1839
        %1880 = vmatprep.subr.bf16.mxu0 0
        %1881 = vmatpush1.bf16.msra.mxu0 %v1840
        %1882 = vmatprep.subr.bf16.mxu0 0
        %1883 = vmatpush1.bf16.msra.mxu0 %v1841
        %1884 = vmatprep.subr.bf16.mxu0 0
        %1885 = vmatpush1.bf16.msra.mxu0 %v1842
        %1886 = vmatprep.subr.bf16.mxu0 0
        %1887 = vmatpush1.bf16.msra.mxu0 0
        %1888 = vmatprep.subr.bf16.mxu0 0
        %1889 = vmatpush1.bf16.msra.mxu0 0
        %1890 = vmatprep.subr.bf16.mxu0 0
        %1891 = vmatpush1.bf16.msra.mxu0 0
        %1892 = vmatprep.subr.bf16.mxu0 0
        %1893 = vmatpush1.bf16.msra.mxu0 0
        %1894 = vmatprep.subr.bf16.mxu0 0
        %1895 = vmatpush1.bf16.msra.mxu0 0
        %1896 = vmatprep.subr.bf16.mxu0 0
        %1897 = vmatpush1.bf16.msra.mxu0 0
        %1898 = vmatprep.subr.bf16.mxu0 0
        %1899 = vmatpush1.bf16.msra.mxu0 0
        %1900 = vmatprep.subr.bf16.mxu0 0
        %1901 = vmatpush1.bf16.msra.mxu0 0
        %1902 = vmatprep.subr.bf16.mxu0 0
        %1903 = vmatpush1.bf16.msra.mxu0 0
        %1904 = vmatprep.subr.bf16.mxu0 0
        %1905 = vmatpush1.bf16.msra.mxu0 0
        %1906 = vmatprep.subr.bf16.mxu0 0
        %1907 = vmatpush1.bf16.msra.mxu0 0
        %1908 = vmatprep.subr.bf16.mxu0 0
        %1909 = vmatpush1.bf16.msra.mxu0 0
        %1910 = vmatprep.mubr.bf16.mxu0 0
        %1911 = vmatmul.mubr.bf16.gmra.mrb[0].mxu0 %v1849
        %v1912 = vpop.f32.mrb[0].mxu0
        %v1913 = vadd.f32 0.0, %v1912
        %v1914 = vpop.f32.mrb[0].mxu0
        %v1915 = vpop.f32.mrb[0].mxu0
        %v1916 = vadd.f32 0.0, %v1915
        %v1917 = vpop.f32.mrb[0].mxu0
        %1918 = vmatprep.mubr.bf16.mxu0 0
        %1919 = vmatmul.mubr.bf16.gmra.mrb[0].mxu0 %v1852
        %v1920 = vpop.f32.mrb[0].mxu0
        %v1921 = vadd.f32 0.0, %v1920
        %v1922 = vpop.f32.mrb[0].mxu0
        %v1923 = vpop.f32.mrb[0].mxu0
        %v1924 = vadd.f32 0.0, %v1923
        %v1925 = vpop.f32.mrb[0].mxu0
        %1926 = vmatprep.mubr.bf16.mxu0 0
        %1927 = vmatmul.mubr.bf16.gmra.mrb[0].mxu0 %v1855
        %v1928 = vpop.f32.mrb[0].mxu0
        %v1929 = vadd.f32 0.0, %v1928
        %v1930 = vpop.f32.mrb[0].mxu0
        %v1931 = vpop.f32.mrb[0].mxu0
        %v1932 = vadd.f32 0.0, %v1931
        %v1933 = vpop.f32.mrb[0].mxu0
        %1934 = vmatprep.mubr.bf16.mxu0 0
        %1935 = vmatmul.mubr.bf16.gmra.mrb[0].mxu0 %v1858
        %v1936 = vpop.f32.mrb[0].mxu0
        %v1937 = vadd.f32 0.0, %v1936
        %v1938 = vpop.f32.mrb[0].mxu0
        %v1939 = vpop.f32.mrb[0].mxu0
        %v1940 = vadd.f32 0.0, %v1939
        %v1941 = vpop.f32.mrb[0].mxu0
        %1942 = vmatprep.mubr.bf16.mxu0 0
        %1943 = vmatmul.mubr.bf16.gmra.mrb[0].mxu0 %v1861
        %v1944 = vpop.f32.mrb[0].mxu0
        %v1945 = vadd.f32 0.0, %v1944
        %v1946 = vpop.f32.mrb[0].mxu0
        %v1947 = vpop.f32.mrb[0].mxu0
        %v1948 = vadd.f32 0.0, %v1947
        %v1949 = vpop.f32.mrb[0].mxu0
        %1950 = vmatprep.mubr.bf16.mxu0 0
        %1951 = vmatmul.mubr.bf16.gmra.mrb[0].mxu0 %v1864
        %v1952 = vpop.f32.mrb[0].mxu0
        %v1953 = vadd.f32 0.0, %v1952
        %v1954 = vpop.f32.mrb[0].mxu0
        %v1955 = vpop.f32.mrb[0].mxu0
        %v1956 = vadd.f32 0.0, %v1955
        %v1957 = vpop.f32.mrb[0].mxu0
        %1958 = vmatprep.mubr.bf16.mxu0 0
        %1959 = vmatmul.mubr.bf16.gmra.mrb[0].mxu0 %v1867
        %v1960 = vpop.f32.mrb[0].mxu0
        %v1961 = vadd.f32 0.0, %v1960
        %v1962 = vpop.f32.mrb[0].mxu0
        %v1963 = vpop.f32.mrb[0].mxu0
        %v1964 = vadd.f32 0.0, %v1963
        %v1965 = vpop.f32.mrb[0].mxu0
        %1966 = vmatprep.mubr.bf16.mxu0 0
        %1967 = vmatmul.mubr.bf16.gmra.mrb[0].mxu0 %v1870
        %v1968 = vpop.f32.mrb[0].mxu0
        %v1969 = vadd.f32 0.0, %v1968
        %v1970 = vpop.f32.mrb[0].mxu0
        %v1971 = vpop.f32.mrb[0].mxu0
        %v1972 = vadd.f32 0.0, %v1971
        %v1973 = vpop.f32.mrb[0].mxu0
        %1974 = vmatprep.mubr.bf16.mxu0 0
        %1975 = vmatmul.mubr.bf16.gmra.mrb[0].mxu0 %v1873
        %v1976 = vpop.f32.mrb[0].mxu0
        %v1977 = vadd.f32 0.0, %v1976
        %v1978 = vpop.f32.mrb[0].mxu0
        %v1979 = vpop.f32.mrb[0].mxu0
        %v1980 = vadd.f32 0.0, %v1979
        %v1981 = vpop.f32.mrb[0].mxu0
        %1982 = vmatprep.mubr.bf16.mxu0 0
        %1983 = vmatmul.mubr.bf16.gmra.mrb[0].mxu0 %v1876
        %v1984 = vpop.f32.mrb[0].mxu0
        %v1985 = vadd.f32 0.0, %v1984
        %v1986 = vpop.f32.mrb[0].mxu0
        %v1987 = vpop.f32.mrb[0].mxu0
        %v1988 = vadd.f32 0.0, %v1987
        %v1989 = vpop.f32.mrb[0].mxu0
        %1990 = vdwg.mxu0
        %v1991 = vld [vmem:[%s7] sm:$0xff]
        %v1992 = vld [vmem:[%s7 + $0x8] sm:$0xff]
        %v1993 = vld [vmem:[%s7 + $0x10] sm:$0xff]
        %v1994 = vld [vmem:[%s7 + $0x18] sm:$0xff]
        %v1995 = vld [vmem:[%s7 + $0x20] sm:$0xff]
        %v1996 = vld [vmem:[%s7 + $0x28] sm:$0xff]
        %v1997 = vld [vmem:[%s7 + $0x30] sm:$0xff]
        %v1998 = vld [vmem:[%s7 + $0x38] sm:$0xff]
        %v1999 = vld [vmem:[%s7 + $0x40] sm:$0xff]
        %v2000 = vld [vmem:[%s7 + $0x48] sm:$0xff]
        %v2001 = vld [vmem:[%s7 + $0x50] sm:$0xff]
        %v2002 = vld [vmem:[%s7 + $0x58] sm:$0xff]
        %v2003 = vld [vmem:[%s7 + $0x60] sm:$0xff]
        %v2004 = vld [vmem:[%s7 + $0x68] sm:$0xff]
        %v2005 = vld [vmem:[%s7 + $0x70] sm:$0xff]
        %v2006 = vld [vmem:[%s7 + $0x78] sm:$0xff]
        %v2007 = vld [vmem:[%s7 + $0x80] sm:$0xff]
        %v2008 = vld [vmem:[%s7 + $0x88] sm:$0xff]
        %v2009 = vld [vmem:[%s7 + $0x90] sm:$0xff]
        %v2010 = vld [vmem:[%s7 + $0x98] sm:$0xff]
        %v2011 = vpack.c.bf16 %v1916, %v1913
        %v2012 = vpack.c.bf16 %v1924, %v1921
        %v2013 = vpack.c.bf16 %v1932, %v1929
        %v2014 = vpack.c.bf16 %v1940, %v1937
        %v2015 = vpack.c.bf16 %v1948, %v1945
        %v2016 = vpack.c.bf16 %v1956, %v1953
        %v2017 = vpack.c.bf16 %v1964, %v1961
        %v2018 = vpack.c.bf16 %v1972, %v1969
        %v2019 = vpack.c.bf16 %v1980, %v1977
        %v2020 = vpack.c.bf16 %v1988, %v1985
        %v2041 = vunpack.c.l.b16 %v1991
        %v2042 = vunpack.c.h.b16 %v1991
        %v2043 = vunpack.c.l.b16 %v1992
        %v2044 = vunpack.c.h.b16 %v1992
        %v2045 = vunpack.c.l.b16 %v1993
        %v2046 = vunpack.c.h.b16 %v1993
        %v2047 = vunpack.c.l.b16 %v1994
        %v2048 = vunpack.c.h.b16 %v1994
        %v2049 = vunpack.c.l.b16 %v1995
        %v2050 = vunpack.c.h.b16 %v1995
        %v2051 = vunpack.c.l.b16 %v1996
        %v2052 = vunpack.c.h.b16 %v1996
        %v2053 = vunpack.c.l.b16 %v1997
        %v2054 = vunpack.c.h.b16 %v1997
        %v2055 = vunpack.c.l.b16 %v1998
        %v2056 = vunpack.c.h.b16 %v1998
        %v2057 = vunpack.c.l.b16 %v1999
        %v2058 = vunpack.c.h.b16 %v1999
        %v2059 = vunpack.c.l.b16 %v2000
        %v2060 = vunpack.c.h.b16 %v2000
        %v2061 = vunpack.c.l.b16 %v2001
        %v2062 = vunpack.c.h.b16 %v2001
        %v2063 = vunpack.c.l.b16 %v2002
        %v2064 = vunpack.c.h.b16 %v2002
        %v2065 = vunpack.c.l.b16 %v2003
        %v2066 = vunpack.c.h.b16 %v2003
        %v2067 = vunpack.c.l.b16 %v2004
        %v2068 = vunpack.c.h.b16 %v2004
        %v2069 = vunpack.c.l.b16 %v2005
        %v2070 = vunpack.c.h.b16 %v2005
        %v2071 = vunpack.c.l.b16 %v2006
        %v2072 = vunpack.c.h.b16 %v2006
        %v2073 = vunpack.c.l.b16 %v2007
        %v2074 = vunpack.c.h.b16 %v2007
        %v2075 = vunpack.c.l.b16 %v2008
        %v2076 = vunpack.c.h.b16 %v2008
        %v2077 = vunpack.c.l.b16 %v2009
        %v2078 = vunpack.c.h.b16 %v2009
        %v2079 = vunpack.c.l.b16 %v2010
        %v2080 = vunpack.c.h.b16 %v2010
        %v2081 = vpack.c.b16 %v2043, %v2041
        %v2082 = vpack.c.b16 %v2044, %v2042
        %v2083 = vpack.c.b16 %v2047, %v2045
        %v2084 = vpack.c.b16 %v2048, %v2046
        %v2085 = vpack.c.b16 %v2051, %v2049
        %v2086 = vpack.c.b16 %v2052, %v2050
        %v2087 = vpack.c.b16 %v2055, %v2053
        %v2088 = vpack.c.b16 %v2056, %v2054
        %v2089 = vpack.c.b16 %v2059, %v2057
        %v2090 = vpack.c.b16 %v2060, %v2058
        %v2091 = vpack.c.b16 %v2063, %v2061
        %v2092 = vpack.c.b16 %v2064, %v2062
        %v2093 = vpack.c.b16 %v2067, %v2065
        %v2094 = vpack.c.b16 %v2068, %v2066
        %v2095 = vpack.c.b16 %v2071, %v2069
        %v2096 = vpack.c.b16 %v2072, %v2070
        %v2097 = vpack.c.b16 %v2075, %v2073
        %v2098 = vpack.c.b16 %v2076, %v2074
        %v2099 = vpack.c.b16 %v2079, %v2077
        %v2100 = vpack.c.b16 %v2080, %v2078
        %vm2111 = vcmask 261120
        %v2113 = vsel %vm2111, %v2082, 0
        %v2116 = vsel %vm2111, %v2084, 0
        %v2119 = vsel %vm2111, %v2086, 0
        %v2122 = vsel %vm2111, %v2088, 0
        %v2125 = vsel %vm2111, %v2090, 0
        %v2128 = vsel %vm2111, %v2092, 0
        %v2131 = vsel %vm2111, %v2094, 0
        %v2134 = vsel %vm2111, %v2096, 0
        %v2137 = vsel %vm2111, %v2098, 0
        %v2140 = vsel %vm2111, %v2100, 0
        %2142 = vmatprep.subr.bf16.mxu0 0
        %2143 = vmatpush1.bf16.msra.mxu0 %v2011
        %2144 = vmatprep.subr.bf16.mxu0 0
        %2145 = vmatpush1.bf16.msra.mxu0 %v2012
        %2146 = vmatprep.subr.bf16.mxu0 0
        %2147 = vmatpush1.bf16.msra.mxu0 %v2013
        %2148 = vmatprep.subr.bf16.mxu0 0
        %2149 = vmatpush1.bf16.msra.mxu0 %v2014
        %2150 = vmatprep.subr.bf16.mxu0 0
        %2151 = vmatpush1.bf16.msra.mxu0 %v2015
        %2152 = vmatprep.subr.bf16.mxu0 0
        %2153 = vmatpush1.bf16.msra.mxu0 %v2016
        %2154 = vmatprep.subr.bf16.mxu0 0
        %2155 = vmatpush1.bf16.msra.mxu0 %v2017
        %2156 = vmatprep.subr.bf16.mxu0 0
        %2157 = vmatpush1.bf16.msra.mxu0 %v2018
        %2158 = vmatprep.subr.bf16.mxu0 0
        %2159 = vmatpush1.bf16.msra.mxu0 %v2019
        %2160 = vmatprep.subr.bf16.mxu0 0
        %2161 = vmatpush1.bf16.msra.mxu0 %v2020
        %2162 = vmatprep.subr.bf16.mxu0 0
        %2163 = vmatpush1.bf16.msra.mxu0 0
        %2164 = vmatprep.subr.bf16.mxu0 0
        %2165 = vmatpush1.bf16.msra.mxu0 0
        %2166 = vmatprep.subr.bf16.mxu0 0
        %2167 = vmatpush1.bf16.msra.mxu0 0
        %2168 = vmatprep.subr.bf16.mxu0 0
        %2169 = vmatpush1.bf16.msra.mxu0 0
        %2170 = vmatprep.subr.bf16.mxu0 0
        %2171 = vmatpush1.bf16.msra.mxu0 0
        %2172 = vmatprep.subr.bf16.mxu0 0
        %2173 = vmatpush1.bf16.msra.mxu0 0
        %2174 = vmatprep.mubr.bf16.mxu0 %v2113
        %2175 = vmatmul.mubr.bf16.gmra.mrb[0].mxu0 %v2081
        %v2176 = vpop.f32.mrb[0].mxu0
        %v2177 = vadd.f32 0.0, %v2176
        %v2178 = vpop.f32.mrb[0].mxu0
        %v2179 = vpop.f32.mrb[0].mxu0
        %v2180 = vadd.f32 0.0, %v2179
        %v2181 = vpop.f32.mrb[0].mxu0
        %2182 = vmatprep.mubr.bf16.mxu0 %v2116
        %2183 = vmatmul.mubr.bf16.gmra.mrb[0].mxu0 %v2083
        %v2184 = vpop.f32.mrb[0].mxu0
        %v2185 = vadd.f32 0.0, %v2184
        %v2186 = vpop.f32.mrb[0].mxu0
        %v2187 = vpop.f32.mrb[0].mxu0
        %v2188 = vadd.f32 0.0, %v2187
        %v2189 = vpop.f32.mrb[0].mxu0
        %2190 = vmatprep.mubr.bf16.mxu0 %v2119
        %2191 = vmatmul.mubr.bf16.gmra.mrb[0].mxu0 %v2085
        %v2192 = vpop.f32.mrb[0].mxu0
        %v2193 = vadd.f32 0.0, %v2192
        %v2194 = vpop.f32.mrb[0].mxu0
        %v2195 = vpop.f32.mrb[0].mxu0
        %v2196 = vadd.f32 0.0, %v2195
        %v2197 = vpop.f32.mrb[0].mxu0
        %2198 = vmatprep.mubr.bf16.mxu0 %v2122
        %2199 = vmatmul.mubr.bf16.gmra.mrb[0].mxu0 %v2087
        %v2200 = vpop.f32.mrb[0].mxu0
        %v2201 = vadd.f32 0.0, %v2200
        %v2202 = vpop.f32.mrb[0].mxu0
        %v2203 = vpop.f32.mrb[0].mxu0
        %v2204 = vadd.f32 0.0, %v2203
        %v2205 = vpop.f32.mrb[0].mxu0
        %2206 = vmatprep.mubr.bf16.mxu0 %v2125
        %2207 = vmatmul.mubr.bf16.gmra.mrb[0].mxu0 %v2089
        %v2208 = vpop.f32.mrb[0].mxu0
        %v2209 = vadd.f32 0.0, %v2208
        %v2210 = vpop.f32.mrb[0].mxu0
        %v2211 = vpop.f32.mrb[0].mxu0
        %v2212 = vadd.f32 0.0, %v2211
        %v2213 = vpop.f32.mrb[0].mxu0
        %2214 = vmatprep.mubr.bf16.mxu0 %v2128
        %2215 = vmatmul.mubr.bf16.gmra.mrb[0].mxu0 %v2091
        %v2216 = vpop.f32.mrb[0].mxu0
        %v2217 = vadd.f32 0.0, %v2216
        %v2218 = vpop.f32.mrb[0].mxu0
        %v2219 = vpop.f32.mrb[0].mxu0
        %v2220 = vadd.f32 0.0, %v2219
        %v2221 = vpop.f32.mrb[0].mxu0
        %2222 = vmatprep.mubr.bf16.mxu0 %v2131
        %2223 = vmatmul.mubr.bf16.gmra.mrb[0].mxu0 %v2093
        %v2224 = vpop.f32.mrb[0].mxu0
        %v2225 = vadd.f32 0.0, %v2224
        %v2226 = vpop.f32.mrb[0].mxu0
        %v2227 = vpop.f32.mrb[0].mxu0
        %v2228 = vadd.f32 0.0, %v2227
        %v2229 = vpop.f32.mrb[0].mxu0
        %2230 = vmatprep.mubr.bf16.mxu0 %v2134
        %2231 = vmatmul.mubr.bf16.gmra.mrb[0].mxu0 %v2095
        %v2232 = vpop.f32.mrb[0].mxu0
        %v2233 = vadd.f32 0.0, %v2232
        %v2234 = vpop.f32.mrb[0].mxu0
        %v2235 = vpop.f32.mrb[0].mxu0
        %v2236 = vadd.f32 0.0, %v2235
        %v2237 = vpop.f32.mrb[0].mxu0
        %2238 = vmatprep.mubr.bf16.mxu0 %v2137
        %2239 = vmatmul.mubr.bf16.gmra.mrb[0].mxu0 %v2097
        %v2240 = vpop.f32.mrb[0].mxu0
        %v2241 = vadd.f32 0.0, %v2240
        %v2242 = vpop.f32.mrb[0].mxu0
        %v2243 = vpop.f32.mrb[0].mxu0
        %v2244 = vadd.f32 0.0, %v2243
        %v2245 = vpop.f32.mrb[0].mxu0
        %2246 = vmatprep.mubr.bf16.mxu0 %v2140
        %2247 = vmatmul.mubr.bf16.gmra.mrb[0].mxu0 %v2099
        %v2248 = vpop.f32.mrb[0].mxu0
        %v2249 = vadd.f32 0.0, %v2248
        %v2250 = vpop.f32.mrb[0].mxu0
        %v2251 = vpop.f32.mrb[0].mxu0
        %v2252 = vadd.f32 0.0, %v2251
        %v2253 = vpop.f32.mrb[0].mxu0
        %2254 = vdwg.mxu0
        %v2255 = vmax.f32 %v2177, 0.0
        %v2256 = vmax.f32 %v2180, 0.0
        %v2257 = vmax.f32 %v2185, 0.0
        %v2258 = vmax.f32 %v2188, 0.0
        %v2259 = vmax.f32 %v2193, 0.0
        %v2260 = vmax.f32 %v2196, 0.0
        %v2261 = vmax.f32 %v2201, 0.0
        %v2262 = vmax.f32 %v2204, 0.0
        %v2263 = vmax.f32 %v2209, 0.0
        %v2264 = vmax.f32 %v2212, 0.0
        %v2265 = vmax.f32 %v2217, 0.0
        %v2266 = vmax.f32 %v2220, 0.0
        %v2267 = vmax.f32 %v2225, 0.0
        %v2268 = vmax.f32 %v2228, 0.0
        %v2269 = vmax.f32 %v2233, 0.0
        %v2270 = vmax.f32 %v2236, 0.0
        %v2271 = vmax.f32 %v2241, 0.0
        %v2272 = vmax.f32 %v2244, 0.0
        %v2273 = vmax.f32 %v2249, 0.0
        %v2274 = vmax.f32 %v2252, 0.0
        %v2275 = vpack.c.bf16 %v2255, %v2255
        %v2276 = vpack.c.bf16 %v2256, %v2256
        %v2277 = vpack.c.bf16 %v2257, %v2257
        %v2278 = vpack.c.bf16 %v2258, %v2258
        %v2279 = vpack.c.bf16 %v2259, %v2259
        %v2280 = vpack.c.bf16 %v2260, %v2260
        %v2281 = vpack.c.bf16 %v2261, %v2261
        %v2282 = vpack.c.bf16 %v2262, %v2262
        %v2283 = vpack.c.bf16 %v2263, %v2263
        %v2284 = vpack.c.bf16 %v2264, %v2264
        %v2285 = vpack.c.bf16 %v2265, %v2265
        %v2286 = vpack.c.bf16 %v2266, %v2266
        %v2287 = vpack.c.bf16 %v2267, %v2267
        %v2288 = vpack.c.bf16 %v2268, %v2268
        %v2289 = vpack.c.bf16 %v2269, %v2269
        %v2290 = vpack.c.bf16 %v2270, %v2270
        %v2291 = vpack.c.bf16 %v2271, %v2271
        %v2292 = vpack.c.bf16 %v2272, %v2272
        %v2293 = vpack.c.bf16 %v2273, %v2273
        %v2294 = vpack.c.bf16 %v2274, %v2274
        %v2295 = vld [vmem:[%s8] sm:$0xff]
        %v2296 = vld [vmem:[%s8 + $0x8] sm:$0xff]
        %s2297 = scalar_lea.vmem %s8, 16
        %v2298 = vld [vmem:[%s2297] sm:$0xff]
        %v2299 = vld [vmem:[%s2297 + $0x8] sm:$0xff]
        %v2316 = vunpack.c.l.b16 %v2276
        %v2317 = vunpack.c.l.b16 %v2277
        %v2318 = vunpack.c.l.b16 %v2278
        %v2319 = vunpack.c.l.b16 %v2279
        %v2320 = vunpack.c.l.b16 %v2280
        %v2321 = vunpack.c.l.b16 %v2281
        %v2322 = vunpack.c.l.b16 %v2282
        %v2323 = vunpack.c.l.b16 %v2283
        %v2324 = vunpack.c.l.b16 %v2286
        %v2325 = vunpack.c.l.b16 %v2287
        %v2326 = vunpack.c.l.b16 %v2288
        %v2327 = vunpack.c.l.b16 %v2289
        %v2328 = vunpack.c.l.b16 %v2290
        %v2329 = vunpack.c.l.b16 %v2291
        %v2330 = vunpack.c.l.b16 %v2292
        %v2331 = vunpack.c.l.b16 %v2293
        %v2332 = vpack.c.b16 %v2317, %v2316
        %v2333 = vpack.c.b16 %v2319, %v2318
        %v2334 = vpack.c.b16 %v2321, %v2320
        %v2335 = vpack.c.b16 %v2323, %v2322
        %v2336 = vpack.c.b16 %v2325, %v2324
        %v2337 = vpack.c.b16 %v2327, %v2326
        %v2338 = vpack.c.b16 %v2329, %v2328
        %v2339 = vpack.c.b16 %v2331, %v2330
        %v2342 = vunpack.c.l.b16 %v2298
        %v2343 = vunpack.c.h.b16 %v2298
        %v2344 = vunpack.c.l.b16 %v2299
        %v2345 = vunpack.c.h.b16 %v2299
        %v2346 = vpack.c.b16 %v2344, %v2342
        %v2347 = vpack.c.b16 %v2345, %v2343
        %vm2350 = vcmask 130048
        %v2352 = vsel %vm2350, %v2332, 0
        %v2355 = vsel %vm2350, %v2333, 0
        %v2358 = vsel %vm2350, %v2334, 0
        %v2361 = vsel %vm2350, %v2335, 0
        %v2364 = vsel %vm2350, %v2336, 0
        %v2367 = vsel %vm2350, %v2337, 0
        %v2370 = vsel %vm2350, %v2338, 0
        %v2373 = vsel %vm2350, %v2339, 0
        %2375 = vmatprep.subr.bf16.mxu0 %v2347
        %2376 = vmatpush1.bf16.msra.mxu0 %v2346
        %2377 = vmatprep.subr.bf16.mxu0 0
        %2378 = vmatpush1.bf16.msra.mxu0 0
        %2379 = vmatprep.subr.bf16.mxu0 0
        %2380 = vmatpush1.bf16.msra.mxu0 0
        %2381 = vmatprep.subr.bf16.mxu0 0
        %2382 = vmatpush1.bf16.msra.mxu0 0
        %2383 = vmatprep.subr.bf16.mxu0 0
        %2384 = vmatpush1.bf16.msra.mxu0 0
        %2385 = vmatprep.subr.bf16.mxu0 0
        %2386 = vmatpush1.bf16.msra.mxu0 0
        %2387 = vmatprep.subr.bf16.mxu0 0
        %2388 = vmatpush1.bf16.msra.mxu0 0
        %2389 = vmatprep.subr.bf16.mxu0 0
        %2390 = vmatpush1.bf16.msra.mxu0 0
        %2391 = vmatprep.subr.bf16.mxu0 0
        %2392 = vmatpush1.bf16.msra.mxu0 0
        %2393 = vmatprep.subr.bf16.mxu0 0
        %2394 = vmatpush1.bf16.msra.mxu0 0
        %2395 = vmatprep.subr.bf16.mxu0 0
        %2396 = vmatpush1.bf16.msra.mxu0 0
        %2397 = vmatprep.subr.bf16.mxu0 0
        %2398 = vmatpush1.bf16.msra.mxu0 0
        %2399 = vmatprep.subr.bf16.mxu0 0
        %2400 = vmatpush1.bf16.msra.mxu0 0
        %2401 = vmatprep.subr.bf16.mxu0 0
        %2402 = vmatpush1.bf16.msra.mxu0 0
        %2403 = vmatprep.subr.bf16.mxu0 0
        %2404 = vmatpush1.bf16.msra.mxu0 0
        %2405 = vmatprep.subr.bf16.mxu0 0
        %2406 = vmatpush1.bf16.msra.mxu0 0
        %2407 = vmatprep.mubr.bf16.mxu0 0
        %2408 = vmatmul.mubr.bf16.gmra.mrb[0].mxu0 %v2352
        %v2409 = vpop.f32.mrb[0].mxu0
        %v2410 = vadd.f32 0.0, %v2409
        %v2411 = vpop.f32.mrb[0].mxu0
        %v2412 = vadd.f32 0.0, %v2411
        %v2413 = vpop.f32.mrb[0].mxu0
        %v2414 = vadd.f32 0.0, %v2413
        %v2415 = vpop.f32.mrb[0].mxu0
        %v2416 = vadd.f32 0.0, %v2415
        %2417 = vmatprep.mubr.bf16.mxu0 0
        %2418 = vmatmul.mubr.bf16.gmra.mrb[0].mxu0 %v2355
        %v2419 = vpop.f32.mrb[0].mxu0
        %v2420 = vadd.f32 0.0, %v2419
        %v2421 = vpop.f32.mrb[0].mxu0
        %v2422 = vadd.f32 0.0, %v2421
        %v2423 = vpop.f32.mrb[0].mxu0
        %v2424 = vadd.f32 0.0, %v2423
        %v2425 = vpop.f32.mrb[0].mxu0
        %v2426 = vadd.f32 0.0, %v2425
        %2427 = vmatprep.mubr.bf16.mxu0 0
        %2428 = vmatmul.mubr.bf16.gmra.mrb[0].mxu0 %v2358
        %v2429 = vpop.f32.mrb[0].mxu0
        %v2430 = vadd.f32 0.0, %v2429
        %v2431 = vpop.f32.mrb[0].mxu0
        %v2432 = vadd.f32 0.0, %v2431
        %v2433 = vpop.f32.mrb[0].mxu0
        %v2434 = vadd.f32 0.0, %v2433
        %v2435 = vpop.f32.mrb[0].mxu0
        %v2436 = vadd.f32 0.0, %v2435
        %2437 = vmatprep.mubr.bf16.mxu0 0
        %2438 = vmatmul.mubr.bf16.gmra.mrb[0].mxu0 %v2361
        %v2439 = vpop.f32.mrb[0].mxu0
        %v2440 = vadd.f32 0.0, %v2439
        %v2441 = vpop.f32.mrb[0].mxu0
        %v2442 = vadd.f32 0.0, %v2441
        %v2443 = vpop.f32.mrb[0].mxu0
        %v2444 = vadd.f32 0.0, %v2443
        %v2445 = vpop.f32.mrb[0].mxu0
        %v2446 = vadd.f32 0.0, %v2445
        %2447 = vmatprep.mubr.bf16.mxu0 0
        %2448 = vmatmul.mubr.bf16.gmra.mrb[0].mxu0 %v2364
        %v2449 = vpop.f32.mrb[0].mxu0
        %v2450 = vadd.f32 0.0, %v2449
        %v2451 = vpop.f32.mrb[0].mxu0
        %v2452 = vadd.f32 0.0, %v2451
        %v2453 = vpop.f32.mrb[0].mxu0
        %v2454 = vadd.f32 0.0, %v2453
        %v2455 = vpop.f32.mrb[0].mxu0
        %v2456 = vadd.f32 0.0, %v2455
        %2457 = vmatprep.mubr.bf16.mxu0 0
        %2458 = vmatmul.mubr.bf16.gmra.mrb[0].mxu0 %v2367
        %v2459 = vpop.f32.mrb[0].mxu0
        %v2460 = vadd.f32 0.0, %v2459
        %v2461 = vpop.f32.mrb[0].mxu0
        %v2462 = vadd.f32 0.0, %v2461
        %v2463 = vpop.f32.mrb[0].mxu0
        %v2464 = vadd.f32 0.0, %v2463
        %v2465 = vpop.f32.mrb[0].mxu0
        %v2466 = vadd.f32 0.0, %v2465
        %2467 = vmatprep.mubr.bf16.mxu0 0
        %2468 = vmatmul.mubr.bf16.gmra.mrb[0].mxu0 %v2370
        %v2469 = vpop.f32.mrb[0].mxu0
        %v2470 = vadd.f32 0.0, %v2469
        %v2471 = vpop.f32.mrb[0].mxu0
        %v2472 = vadd.f32 0.0, %v2471
        %v2473 = vpop.f32.mrb[0].mxu0
        %v2474 = vadd.f32 0.0, %v2473
        %v2475 = vpop.f32.mrb[0].mxu0
        %v2476 = vadd.f32 0.0, %v2475
        %2477 = vmatprep.mubr.bf16.mxu0 0
        %2478 = vmatmul.mubr.bf16.gmra.mrb[0].mxu0 %v2373
        %v2479 = vpop.f32.mrb[0].mxu0
        %v2480 = vadd.f32 0.0, %v2479
        %v2481 = vpop.f32.mrb[0].mxu0
        %v2482 = vadd.f32 0.0, %v2481
        %v2483 = vpop.f32.mrb[0].mxu0
        %v2484 = vadd.f32 0.0, %v2483
        %v2485 = vpop.f32.mrb[0].mxu0
        %v2486 = vadd.f32 0.0, %v2485
        %2487 = vdwg.mxu0
        %v2490 = vunpack.c.l.b16 %v2275
        %v2491 = vunpack.c.l.b16 %v2285
        %v2492 = vpack.c.b16 %v2316, %v2490
        %v2493 = vpack.c.b16 %v2318, %v2317
        %v2494 = vpack.c.b16 %v2320, %v2319
        %v2495 = vpack.c.b16 %v2322, %v2321
        %v2496 = vpack.c.b16 %v2324, %v2491
        %v2497 = vpack.c.b16 %v2326, %v2325
        %v2498 = vpack.c.b16 %v2328, %v2327
        %v2499 = vpack.c.b16 %v2330, %v2329
        %v2502 = vunpack.c.l.b16 %v2295
        %v2503 = vunpack.c.h.b16 %v2295
        %v2504 = vunpack.c.l.b16 %v2296
        %v2505 = vunpack.c.h.b16 %v2296
        %v2506 = vpack.c.b16 %v2504, %v2502
        %v2507 = vpack.c.b16 %v2505, %v2503
        %v2511 = vsel %vm2350, %v2492, 0
        %v2514 = vsel %vm2350, %v2493, 0
        %v2517 = vsel %vm2350, %v2494, 0
        %v2520 = vsel %vm2350, %v2495, 0
        %v2523 = vsel %vm2350, %v2496, 0
        %v2526 = vsel %vm2350, %v2497, 0
        %v2529 = vsel %vm2350, %v2498, 0
        %v2532 = vsel %vm2350, %v2499, 0
        %2534 = vmatprep.subr.bf16.mxu0 %v2507
        %2535 = vmatpush1.bf16.msra.mxu0 %v2506
        %2536 = vmatprep.subr.bf16.mxu0 0
        %2537 = vmatpush1.bf16.msra.mxu0 0
        %2538 = vmatprep.subr.bf16.mxu0 0
        %2539 = vmatpush1.bf16.msra.mxu0 0
        %2540 = vmatprep.subr.bf16.mxu0 0
        %2541 = vmatpush1.bf16.msra.mxu0 0
        %2542 = vmatprep.subr.bf16.mxu0 0
        %2543 = vmatpush1.bf16.msra.mxu0 0
        %2544 = vmatprep.subr.bf16.mxu0 0
        %2545 = vmatpush1.bf16.msra.mxu0 0
        %2546 = vmatprep.subr.bf16.mxu0 0
        %2547 = vmatpush1.bf16.msra.mxu0 0
        %2548 = vmatprep.subr.bf16.mxu0 0
        %2549 = vmatpush1.bf16.msra.mxu0 0
        %2550 = vmatprep.subr.bf16.mxu0 0
        %2551 = vmatpush1.bf16.msra.mxu0 0
        %2552 = vmatprep.subr.bf16.mxu0 0
        %2553 = vmatpush1.bf16.msra.mxu0 0
        %2554 = vmatprep.subr.bf16.mxu0 0
        %2555 = vmatpush1.bf16.msra.mxu0 0
        %2556 = vmatprep.subr.bf16.mxu0 0
        %2557 = vmatpush1.bf16.msra.mxu0 0
        %2558 = vmatprep.subr.bf16.mxu0 0
        %2559 = vmatpush1.bf16.msra.mxu0 0
        %2560 = vmatprep.subr.bf16.mxu0 0
        %2561 = vmatpush1.bf16.msra.mxu0 0
        %2562 = vmatprep.subr.bf16.mxu0 0
        %2563 = vmatpush1.bf16.msra.mxu0 0
        %2564 = vmatprep.subr.bf16.mxu0 0
        %2565 = vmatpush1.bf16.msra.mxu0 0
        %2566 = vmatprep.mubr.bf16.mxu0 0
        %2567 = vmatmul.mubr.bf16.gmra.mrb[0].mxu0 %v2511
        %v2568 = vpop.f32.mrb[0].mxu0
        %v2569 = vadd.f32 %v2410, %v2568
        %v2570 = vpop.f32.mrb[0].mxu0
        %v2571 = vadd.f32 %v2412, %v2570
        %v2572 = vpop.f32.mrb[0].mxu0
        %v2573 = vadd.f32 %v2414, %v2572
        %v2574 = vpop.f32.mrb[0].mxu0
        %v2575 = vadd.f32 %v2416, %v2574
        %2576 = vmatprep.mubr.bf16.mxu0 0
        %2577 = vmatmul.mubr.bf16.gmra.mrb[0].mxu0 %v2514
        %v2578 = vpop.f32.mrb[0].mxu0
        %v2579 = vadd.f32 %v2420, %v2578
        %v2580 = vpop.f32.mrb[0].mxu0
        %v2581 = vadd.f32 %v2422, %v2580
        %v2582 = vpop.f32.mrb[0].mxu0
        %v2583 = vadd.f32 %v2424, %v2582
        %v2584 = vpop.f32.mrb[0].mxu0
        %v2585 = vadd.f32 %v2426, %v2584
        %2586 = vmatprep.mubr.bf16.mxu0 0
        %2587 = vmatmul.mubr.bf16.gmra.mrb[0].mxu0 %v2517
        %v2588 = vpop.f32.mrb[0].mxu0
        %v2589 = vadd.f32 %v2430, %v2588
        %v2590 = vpop.f32.mrb[0].mxu0
        %v2591 = vadd.f32 %v2432, %v2590
        %v2592 = vpop.f32.mrb[0].mxu0
        %v2593 = vadd.f32 %v2434, %v2592
        %v2594 = vpop.f32.mrb[0].mxu0
        %v2595 = vadd.f32 %v2436, %v2594
        %2596 = vmatprep.mubr.bf16.mxu0 0
        %2597 = vmatmul.mubr.bf16.gmra.mrb[0].mxu0 %v2520
        %v2598 = vpop.f32.mrb[0].mxu0
        %v2599 = vadd.f32 %v2440, %v2598
        %v2600 = vpop.f32.mrb[0].mxu0
        %v2601 = vadd.f32 %v2442, %v2600
        %v2602 = vpop.f32.mrb[0].mxu0
        %v2603 = vadd.f32 %v2444, %v2602
        %v2604 = vpop.f32.mrb[0].mxu0
        %v2605 = vadd.f32 %v2446, %v2604
        %2606 = vmatprep.mubr.bf16.mxu0 0
        %2607 = vmatmul.mubr.bf16.gmra.mrb[0].mxu0 %v2523
        %v2608 = vpop.f32.mrb[0].mxu0
        %v2609 = vadd.f32 %v2450, %v2608
        %v2610 = vpop.f32.mrb[0].mxu0
        %v2611 = vadd.f32 %v2452, %v2610
        %v2612 = vpop.f32.mrb[0].mxu0
        %v2613 = vadd.f32 %v2454, %v2612
        %v2614 = vpop.f32.mrb[0].mxu0
        %v2615 = vadd.f32 %v2456, %v2614
        %2616 = vmatprep.mubr.bf16.mxu0 0
        %2617 = vmatmul.mubr.bf16.gmra.mrb[0].mxu0 %v2526
        %v2618 = vpop.f32.mrb[0].mxu0
        %v2619 = vadd.f32 %v2460, %v2618
        %v2620 = vpop.f32.mrb[0].mxu0
        %v2621 = vadd.f32 %v2462, %v2620
        %v2622 = vpop.f32.mrb[0].mxu0
        %v2623 = vadd.f32 %v2464, %v2622
        %v2624 = vpop.f32.mrb[0].mxu0
        %v2625 = vadd.f32 %v2466, %v2624
        %2626 = vmatprep.mubr.bf16.mxu0 0
        %2627 = vmatmul.mubr.bf16.gmra.mrb[0].mxu0 %v2529
        %v2628 = vpop.f32.mrb[0].mxu0
        %v2629 = vadd.f32 %v2470, %v2628
        %v2630 = vpop.f32.mrb[0].mxu0
        %v2631 = vadd.f32 %v2472, %v2630
        %v2632 = vpop.f32.mrb[0].mxu0
        %v2633 = vadd.f32 %v2474, %v2632
        %v2634 = vpop.f32.mrb[0].mxu0
        %v2635 = vadd.f32 %v2476, %v2634
        %2636 = vmatprep.mubr.bf16.mxu0 0
        %2637 = vmatmul.mubr.bf16.gmra.mrb[0].mxu0 %v2532
        %v2638 = vpop.f32.mrb[0].mxu0
        %v2639 = vadd.f32 %v2480, %v2638
        %v2640 = vpop.f32.mrb[0].mxu0
        %v2641 = vadd.f32 %v2482, %v2640
        %v2642 = vpop.f32.mrb[0].mxu0
        %v2643 = vadd.f32 %v2484, %v2642
        %v2644 = vpop.f32.mrb[0].mxu0
        %v2645 = vadd.f32 %v2486, %v2644
        %2646 = vdwg.mxu0
        %s2647 = scalar_lea.vmem %s8, 32
        %v2648 = vld [vmem:[%s2647] sm:$0xff]
        %v2649 = vld [vmem:[%s2647 + $0x8] sm:$0xff]
        %v2652 = vunpack.c.l.b16 %v2284
        %v2653 = vunpack.c.l.b16 %v2294
        %v2654 = vpack.c.b16 %v2652, %v2323
        %v2655 = vpack.c.b16 %v2653, %v2331
        %v2658 = vunpack.c.l.b16 %v2648
        %v2659 = vunpack.c.h.b16 %v2648
        %v2660 = vunpack.c.l.b16 %v2649
        %v2661 = vunpack.c.h.b16 %v2649
        %v2662 = vpack.c.b16 %v2660, %v2658
        %v2663 = vpack.c.b16 %v2661, %v2659
        %v2667 = vsel %vm2350, %v2654, 0
        %v2670 = vsel %vm2350, %v2655, 0
        %2672 = vmatprep.subr.bf16.mxu0 %v2663
        %2673 = vmatpush1.bf16.msra.mxu0 %v2662
        %2674 = vmatprep.subr.bf16.mxu0 0
        %2675 = vmatpush1.bf16.msra.mxu0 0
        %2676 = vmatprep.subr.bf16.mxu0 0
        %2677 = vmatpush1.bf16.msra.mxu0 0
        %2678 = vmatprep.subr.bf16.mxu0 0
        %2679 = vmatpush1.bf16.msra.mxu0 0
        %2680 = vmatprep.subr.bf16.mxu0 0
        %2681 = vmatpush1.bf16.msra.mxu0 0
        %2682 = vmatprep.subr.bf16.mxu0 0
        %2683 = vmatpush1.bf16.msra.mxu0 0
        %2684 = vmatprep.subr.bf16.mxu0 0
        %2685 = vmatpush1.bf16.msra.mxu0 0
        %2686 = vmatprep.subr.bf16.mxu0 0
        %2687 = vmatpush1.bf16.msra.mxu0 0
        %2688 = vmatprep.subr.bf16.mxu0 0
        %2689 = vmatpush1.bf16.msra.mxu0 0
        %2690 = vmatprep.subr.bf16.mxu0 0
        %2691 = vmatpush1.bf16.msra.mxu0 0
        %2692 = vmatprep.subr.bf16.mxu0 0
        %2693 = vmatpush1.bf16.msra.mxu0 0
        %2694 = vmatprep.subr.bf16.mxu0 0
        %2695 = vmatpush1.bf16.msra.mxu0 0
        %2696 = vmatprep.subr.bf16.mxu0 0
        %2697 = vmatpush1.bf16.msra.mxu0 0
        %2698 = vmatprep.subr.bf16.mxu0 0
        %2699 = vmatpush1.bf16.msra.mxu0 0
        %2700 = vmatprep.subr.bf16.mxu0 0
        %2701 = vmatpush1.bf16.msra.mxu0 0
        %2702 = vmatprep.subr.bf16.mxu0 0
        %2703 = vmatpush1.bf16.msra.mxu0 0
        %2704 = vmatprep.mubr.bf16.mxu0 0
        %2705 = vmatmul.mubr.bf16.gmra.mrb[0].mxu0 %v2514
        %v2706 = vpop.f32.mrb[0].mxu0
        %v2707 = vadd.f32 0.0, %v2706
        %v2708 = vpop.f32.mrb[0].mxu0
        %v2709 = vadd.f32 0.0, %v2708
        %v2710 = vpop.f32.mrb[0].mxu0
        %v2711 = vadd.f32 0.0, %v2710
        %v2712 = vpop.f32.mrb[0].mxu0
        %v2713 = vadd.f32 0.0, %v2712
        %2714 = vmatprep.mubr.bf16.mxu0 0
        %2715 = vmatmul.mubr.bf16.gmra.mrb[0].mxu0 %v2517
        %v2716 = vpop.f32.mrb[0].mxu0
        %v2717 = vadd.f32 0.0, %v2716
        %v2718 = vpop.f32.mrb[0].mxu0
        %v2719 = vadd.f32 0.0, %v2718
        %v2720 = vpop.f32.mrb[0].mxu0
        %v2721 = vadd.f32 0.0, %v2720
        %v2722 = vpop.f32.mrb[0].mxu0
        %v2723 = vadd.f32 0.0, %v2722
        %2724 = vmatprep.mubr.bf16.mxu0 0
        %2725 = vmatmul.mubr.bf16.gmra.mrb[0].mxu0 %v2520
        %v2726 = vpop.f32.mrb[0].mxu0
        %v2727 = vadd.f32 0.0, %v2726
        %v2728 = vpop.f32.mrb[0].mxu0
        %v2729 = vadd.f32 0.0, %v2728
        %v2730 = vpop.f32.mrb[0].mxu0
        %v2731 = vadd.f32 0.0, %v2730
        %v2732 = vpop.f32.mrb[0].mxu0
        %v2733 = vadd.f32 0.0, %v2732
        %2734 = vmatprep.mubr.bf16.mxu0 0
        %2735 = vmatmul.mubr.bf16.gmra.mrb[0].mxu0 %v2667
        %v2736 = vpop.f32.mrb[0].mxu0
        %v2737 = vadd.f32 0.0, %v2736
        %v2738 = vpop.f32.mrb[0].mxu0
        %v2739 = vadd.f32 0.0, %v2738
        %v2740 = vpop.f32.mrb[0].mxu0
        %v2741 = vadd.f32 0.0, %v2740
        %v2742 = vpop.f32.mrb[0].mxu0
        %v2743 = vadd.f32 0.0, %v2742
        %2744 = vmatprep.mubr.bf16.mxu0 0
        %2745 = vmatmul.mubr.bf16.gmra.mrb[0].mxu0 %v2526
        %v2746 = vpop.f32.mrb[0].mxu0
        %v2747 = vadd.f32 0.0, %v2746
        %v2748 = vpop.f32.mrb[0].mxu0
        %v2749 = vadd.f32 0.0, %v2748
        %v2750 = vpop.f32.mrb[0].mxu0
        %v2751 = vadd.f32 0.0, %v2750
        %v2752 = vpop.f32.mrb[0].mxu0
        %v2753 = vadd.f32 0.0, %v2752
        %2754 = vmatprep.mubr.bf16.mxu0 0
        %2755 = vmatmul.mubr.bf16.gmra.mrb[0].mxu0 %v2529
        %v2756 = vpop.f32.mrb[0].mxu0
        %v2757 = vadd.f32 0.0, %v2756
        %v2758 = vpop.f32.mrb[0].mxu0
        %v2759 = vadd.f32 0.0, %v2758
        %v2760 = vpop.f32.mrb[0].mxu0
        %v2761 = vadd.f32 0.0, %v2760
        %v2762 = vpop.f32.mrb[0].mxu0
        %v2763 = vadd.f32 0.0, %v2762
        %2764 = vmatprep.mubr.bf16.mxu0 0
        %2765 = vmatmul.mubr.bf16.gmra.mrb[0].mxu0 %v2532
        %v2766 = vpop.f32.mrb[0].mxu0
        %v2767 = vadd.f32 0.0, %v2766
        %v2768 = vpop.f32.mrb[0].mxu0
        %v2769 = vadd.f32 0.0, %v2768
        %v2770 = vpop.f32.mrb[0].mxu0
        %v2771 = vadd.f32 0.0, %v2770
        %v2772 = vpop.f32.mrb[0].mxu0
        %v2773 = vadd.f32 0.0, %v2772
        %2774 = vmatprep.mubr.bf16.mxu0 0
        %2775 = vmatmul.mubr.bf16.gmra.mrb[0].mxu0 %v2670
        %v2776 = vpop.f32.mrb[0].mxu0
        %v2777 = vadd.f32 0.0, %v2776
        %v2778 = vpop.f32.mrb[0].mxu0
        %v2779 = vadd.f32 0.0, %v2778
        %v2780 = vpop.f32.mrb[0].mxu0
        %v2781 = vadd.f32 0.0, %v2780
        %v2782 = vpop.f32.mrb[0].mxu0
        %v2783 = vadd.f32 0.0, %v2782
        %2784 = vdwg.mxu0
        %v2785 = vadd.f32 %v2569, %v2707
        %v2786 = vadd.f32 %v2571, %v2709
        %v2787 = vadd.f32 %v2573, %v2711
        %v2788 = vadd.f32 %v2575, %v2713
        %v2789 = vadd.f32 %v2579, %v2717
        %v2790 = vadd.f32 %v2581, %v2719
        %v2791 = vadd.f32 %v2583, %v2721
        %v2792 = vadd.f32 %v2585, %v2723
        %v2793 = vadd.f32 %v2589, %v2727
        %v2794 = vadd.f32 %v2591, %v2729
        %v2795 = vadd.f32 %v2593, %v2731
        %v2796 = vadd.f32 %v2595, %v2733
        %v2797 = vadd.f32 %v2599, %v2737
        %v2798 = vadd.f32 %v2601, %v2739
        %v2799 = vadd.f32 %v2603, %v2741
        %v2800 = vadd.f32 %v2605, %v2743
        %v2801 = vadd.f32 %v2609, %v2747
        %v2802 = vadd.f32 %v2611, %v2749
        %v2803 = vadd.f32 %v2613, %v2751
        %v2804 = vadd.f32 %v2615, %v2753
        %v2805 = vadd.f32 %v2619, %v2757
        %v2806 = vadd.f32 %v2621, %v2759
        %v2807 = vadd.f32 %v2623, %v2761
        %v2808 = vadd.f32 %v2625, %v2763
        %v2809 = vadd.f32 %v2629, %v2767
        %v2810 = vadd.f32 %v2631, %v2769
        %v2811 = vadd.f32 %v2633, %v2771
        %v2812 = vadd.f32 %v2635, %v2773
        %v2813 = vadd.f32 %v2639, %v2777
        %v2814 = vadd.f32 %v2641, %v2779
        %v2815 = vadd.f32 %v2643, %v2781
        %v2816 = vadd.f32 %v2645, %v2783
        %v2817 = vld [vmem:[%s9] sm:$0x3]
        %v2819 = vlaneseq
        %v2820 = vshrl.u32 %v2819, 7
        %v2821 = vsub.s32 0, %v2820
        %v2822 = vrot.slane %v2817, %v2821
        %v2823 = vlaneseq
        %v2824 = vshrl.u32 %v2823, 7
        %v2825 = vsub.s32 1, %v2824
        %v2826 = vrot.slane %v2817, %v2825
        %v2829 = vadd.f32 %v2785, %v2822
        %v2830 = vadd.f32 %v2786, %v2826
        %v2831 = vadd.f32 %v2787, %v2822
        %v2832 = vadd.f32 %v2788, %v2826
        %v2833 = vadd.f32 %v2789, %v2822
        %v2834 = vadd.f32 %v2790, %v2826
        %v2835 = vadd.f32 %v2791, %v2822
        %v2836 = vadd.f32 %v2792, %v2826
        %v2837 = vadd.f32 %v2793, %v2822
        %v2838 = vadd.f32 %v2794, %v2826
        %v2839 = vadd.f32 %v2795, %v2822
        %v2840 = vadd.f32 %v2796, %v2826
        %v2841 = vadd.f32 %v2797, %v2822
        %v2842 = vadd.f32 %v2798, %v2826
        %v2843 = vadd.f32 %v2799, %v2822
        %v2844 = vadd.f32 %v2800, %v2826
        %v2845 = vadd.f32 %v2801, %v2822
        %v2846 = vadd.f32 %v2802, %v2826
        %v2847 = vadd.f32 %v2803, %v2822
        %v2848 = vadd.f32 %v2804, %v2826
        %v2849 = vadd.f32 %v2805, %v2822
        %v2850 = vadd.f32 %v2806, %v2826
        %v2851 = vadd.f32 %v2807, %v2822
        %v2852 = vadd.f32 %v2808, %v2826
        %v2853 = vadd.f32 %v2809, %v2822
        %v2854 = vadd.f32 %v2810, %v2826
        %v2855 = vadd.f32 %v2811, %v2822
        %v2856 = vadd.f32 %v2812, %v2826
        %v2857 = vadd.f32 %v2813, %v2822
        %v2858 = vadd.f32 %v2814, %v2826
        %v2859 = vadd.f32 %v2815, %v2822
        %v2860 = vadd.f32 %v2816, %v2826
        %v2861 = vxor.u32 %v2829, 2147483648
        %v2862 = vxor.u32 %v2831, 2147483648
        %v2863 = vxor.u32 %v2833, 2147483648
        %v2864 = vxor.u32 %v2835, 2147483648
        %v2865 = vxor.u32 %v2837, 2147483648
        %v2866 = vxor.u32 %v2839, 2147483648
        %v2867 = vxor.u32 %v2841, 2147483648
        %v2868 = vxor.u32 %v2843, 2147483648
        %v2869 = vxor.u32 %v2845, 2147483648
        %v2870 = vxor.u32 %v2847, 2147483648
        %v2871 = vxor.u32 %v2849, 2147483648
        %v2872 = vxor.u32 %v2851, 2147483648
        %v2873 = vxor.u32 %v2853, 2147483648
        %v2874 = vxor.u32 %v2855, 2147483648
        %v2875 = vxor.u32 %v2857, 2147483648
        %v2876 = vxor.u32 %v2859, 2147483648
        %v2877 = vmul.f32 %v2861, 1.442695
        %v2878 = vpow.pop %v2877
        %v2879 = vmul.f32 %v2862, 1.442695
        %v2880 = vpow.pop %v2879
        %v2881 = vmul.f32 %v2863, 1.442695
        %v2882 = vpow.pop %v2881
        %v2883 = vmul.f32 %v2864, 1.442695
        %v2884 = vpow.pop %v2883
        %v2885 = vmul.f32 %v2865, 1.442695
        %v2886 = vpow.pop %v2885
        %v2887 = vmul.f32 %v2866, 1.442695
        %v2888 = vpow.pop %v2887
        %v2889 = vmul.f32 %v2867, 1.442695
        %v2890 = vpow.pop %v2889
        %v2891 = vmul.f32 %v2868, 1.442695
        %v2892 = vpow.pop %v2891
        %v2893 = vmul.f32 %v2869, 1.442695
        %v2894 = vpow.pop %v2893
        %v2895 = vmul.f32 %v2870, 1.442695
        %v2896 = vpow.pop %v2895
        %v2897 = vmul.f32 %v2871, 1.442695
        %v2898 = vpow.pop %v2897
        %v2899 = vmul.f32 %v2872, 1.442695
        %v2900 = vpow.pop %v2899
        %v2901 = vmul.f32 %v2873, 1.442695
        %v2902 = vpow.pop %v2901
        %v2903 = vmul.f32 %v2874, 1.442695
        %v2904 = vpow.pop %v2903
        %v2905 = vmul.f32 %v2875, 1.442695
        %v2906 = vpow.pop %v2905
        %v2907 = vmul.f32 %v2876, 1.442695
        %v2908 = vpow.pop %v2907
        %v2909 = vadd.f32 %v2878, 1.0
        %v2910 = vadd.f32 %v2880, 1.0
        %v2911 = vadd.f32 %v2882, 1.0
        %v2912 = vadd.f32 %v2884, 1.0
        %v2913 = vadd.f32 %v2886, 1.0
        %v2914 = vadd.f32 %v2888, 1.0
        %v2915 = vadd.f32 %v2890, 1.0
        %v2916 = vadd.f32 %v2892, 1.0
        %v2917 = vadd.f32 %v2894, 1.0
        %v2918 = vadd.f32 %v2896, 1.0
        %v2919 = vadd.f32 %v2898, 1.0
        %v2920 = vadd.f32 %v2900, 1.0
        %v2921 = vadd.f32 %v2902, 1.0
        %v2922 = vadd.f32 %v2904, 1.0
        %v2923 = vadd.f32 %v2906, 1.0
        %v2924 = vadd.f32 %v2908, 1.0
        %v2925 = vrcp.pop %v2909
        %v2926 = vmul.f32 1.0, %v2925
        %v2927 = vrcp.pop %v2910
        %v2928 = vmul.f32 1.0, %v2927
        %v2929 = vrcp.pop %v2911
        %v2930 = vmul.f32 1.0, %v2929
        %v2931 = vrcp.pop %v2912
        %v2932 = vmul.f32 1.0, %v2931
        %v2933 = vrcp.pop %v2913
        %v2934 = vmul.f32 1.0, %v2933
        %v2935 = vrcp.pop %v2914
        %v2936 = vmul.f32 1.0, %v2935
        %v2937 = vrcp.pop %v2915
        %v2938 = vmul.f32 1.0, %v2937
        %v2939 = vrcp.pop %v2916
        %v2940 = vmul.f32 1.0, %v2939
        %v2941 = vrcp.pop %v2917
        %v2942 = vmul.f32 1.0, %v2941
        %v2943 = vrcp.pop %v2918
        %v2944 = vmul.f32 1.0, %v2943
        %v2945 = vrcp.pop %v2919
        %v2946 = vmul.f32 1.0, %v2945
        %v2947 = vrcp.pop %v2920
        %v2948 = vmul.f32 1.0, %v2947
        %v2949 = vrcp.pop %v2921
        %v2950 = vmul.f32 1.0, %v2949
        %v2951 = vrcp.pop %v2922
        %v2952 = vmul.f32 1.0, %v2951
        %v2953 = vrcp.pop %v2923
        %v2954 = vmul.f32 1.0, %v2953
        %v2955 = vrcp.pop %v2924
        %v2956 = vmul.f32 1.0, %v2955
        %2973 = vrot.lane.b32.xlu0 %v2926, 64
        %v2974 = vpop.permute.xlu0 %2973
        %2975 = vrot.lane.b32.xlu0 %v2928, 64
        %v2976 = vpop.permute.xlu0 %2975
        %2977 = vrot.lane.b32.xlu0 %v2930, 64
        %v2978 = vpop.permute.xlu0 %2977
        %2979 = vrot.lane.b32.xlu0 %v2932, 64
        %v2980 = vpop.permute.xlu0 %2979
        %2981 = vrot.lane.b32.xlu0 %v2934, 64
        %v2982 = vpop.permute.xlu0 %2981
        %2983 = vrot.lane.b32.xlu0 %v2936, 64
        %v2984 = vpop.permute.xlu0 %2983
        %2985 = vrot.lane.b32.xlu0 %v2938, 64
        %v2986 = vpop.permute.xlu0 %2985
        %2987 = vrot.lane.b32.xlu0 %v2940, 64
        %v2988 = vpop.permute.xlu0 %2987
        %2989 = vrot.lane.b32.xlu0 %v2942, 64
        %v2990 = vpop.permute.xlu0 %2989
        %2991 = vrot.lane.b32.xlu0 %v2944, 64
        %v2992 = vpop.permute.xlu0 %2991
        %2993 = vrot.lane.b32.xlu0 %v2946, 64
        %v2994 = vpop.permute.xlu0 %2993
        %2995 = vrot.lane.b32.xlu0 %v2948, 64
        %v2996 = vpop.permute.xlu0 %2995
        %2997 = vrot.lane.b32.xlu0 %v2950, 64
        %v2998 = vpop.permute.xlu0 %2997
        %2999 = vrot.lane.b32.xlu0 %v2952, 64
        %v3000 = vpop.permute.xlu0 %2999
        %3001 = vrot.lane.b32.xlu0 %v2954, 64
        %v3002 = vpop.permute.xlu0 %3001
        %3003 = vrot.lane.b32.xlu0 %v2956, 64
        %v3004 = vpop.permute.xlu0 %3003
        %v3021 = vmul.f32 %v2829, %v2974
        %v3022 = vmul.f32 %v2831, %v2976
        %v3023 = vmul.f32 %v2833, %v2978
        %v3024 = vmul.f32 %v2835, %v2980
        %v3025 = vmul.f32 %v2837, %v2982
        %v3026 = vmul.f32 %v2839, %v2984
        %v3027 = vmul.f32 %v2841, %v2986
        %v3028 = vmul.f32 %v2843, %v2988
        %v3029 = vmul.f32 %v2845, %v2990
        %v3030 = vmul.f32 %v2847, %v2992
        %v3031 = vmul.f32 %v2849, %v2994
        %v3032 = vmul.f32 %v2851, %v2996
        %v3033 = vmul.f32 %v2853, %v2998
        %v3034 = vmul.f32 %v2855, %v3000
        %v3035 = vmul.f32 %v2857, %v3002
        %v3036 = vmul.f32 %v2859, %v3004
        %v3037 = vadd.f32 %v3021, %v2830
        %v3038 = vadd.f32 %v3022, %v2832
        %v3039 = vadd.f32 %v3023, %v2834
        %v3040 = vadd.f32 %v3024, %v2836
        %v3041 = vadd.f32 %v3025, %v2838
        %v3042 = vadd.f32 %v3026, %v2840
        %v3043 = vadd.f32 %v3027, %v2842
        %v3044 = vadd.f32 %v3028, %v2844
        %v3045 = vadd.f32 %v3029, %v2846
        %v3046 = vadd.f32 %v3030, %v2848
        %v3047 = vadd.f32 %v3031, %v2850
        %v3048 = vadd.f32 %v3032, %v2852
        %v3049 = vadd.f32 %v3033, %v2854
        %v3050 = vadd.f32 %v3034, %v2856
        %v3051 = vadd.f32 %v3035, %v2858
        %v3052 = vadd.f32 %v3036, %v2860
        %v3053 = vmax.f32 %v3037, 0.0
        %v3054 = vmax.f32 %v3038, 0.0
        %v3055 = vmax.f32 %v3039, 0.0
        %v3056 = vmax.f32 %v3040, 0.0
        %v3057 = vmax.f32 %v3041, 0.0
        %v3058 = vmax.f32 %v3042, 0.0
        %v3059 = vmax.f32 %v3043, 0.0
        %v3060 = vmax.f32 %v3044, 0.0
        %v3061 = vmax.f32 %v3045, 0.0
        %v3062 = vmax.f32 %v3046, 0.0
        %v3063 = vmax.f32 %v3047, 0.0
        %v3064 = vmax.f32 %v3048, 0.0
        %v3065 = vmax.f32 %v3049, 0.0
        %v3066 = vmax.f32 %v3050, 0.0
        %v3067 = vmax.f32 %v3051, 0.0
        %v3068 = vmax.f32 %v3052, 0.0
        %v3069 = vsel %vm1847, %v3053, 0.0
        %3070 = vadd.xlane.f32.xlu0 %v3069
        %v3071 = vpop.xlane.xlu0 %3070
        %v3072 = vsel %vm1847, %v3054, 0.0
        %3073 = vadd.xlane.f32.xlu0 %v3072
        %v3074 = vpop.xlane.xlu0 %3073
        %v3075 = vsel %vm1847, %v3055, 0.0
        %3076 = vadd.xlane.f32.xlu0 %v3075
        %v3077 = vpop.xlane.xlu0 %3076
        %v3078 = vsel %vm1847, %v3056, 0.0
        %3079 = vadd.xlane.f32.xlu0 %v3078
        %v3080 = vpop.xlane.xlu0 %3079
        %v3081 = vsel %vm1847, %v3057, 0.0
        %3082 = vadd.xlane.f32.xlu0 %v3081
        %v3083 = vpop.xlane.xlu0 %3082
        %v3084 = vsel %vm1847, %v3058, 0.0
        %3085 = vadd.xlane.f32.xlu0 %v3084
        %v3086 = vpop.xlane.xlu0 %3085
        %v3087 = vsel %vm1847, %v3059, 0.0
        %3088 = vadd.xlane.f32.xlu0 %v3087
        %v3089 = vpop.xlane.xlu0 %3088
        %v3090 = vsel %vm1847, %v3060, 0.0
        %3091 = vadd.xlane.f32.xlu0 %v3090
        %v3092 = vpop.xlane.xlu0 %3091
        %v3093 = vsel %vm1847, %v3061, 0.0
        %3094 = vadd.xlane.f32.xlu0 %v3093
        %v3095 = vpop.xlane.xlu0 %3094
        %v3096 = vsel %vm1847, %v3062, 0.0
        %3097 = vadd.xlane.f32.xlu0 %v3096
        %v3098 = vpop.xlane.xlu0 %3097
        %v3099 = vsel %vm1847, %v3063, 0.0
        %3100 = vadd.xlane.f32.xlu0 %v3099
        %v3101 = vpop.xlane.xlu0 %3100
        %v3102 = vsel %vm1847, %v3064, 0.0
        %3103 = vadd.xlane.f32.xlu0 %v3102
        %v3104 = vpop.xlane.xlu0 %3103
        %v3105 = vsel %vm1847, %v3065, 0.0
        %3106 = vadd.xlane.f32.xlu0 %v3105
        %v3107 = vpop.xlane.xlu0 %3106
        %v3108 = vsel %vm1847, %v3066, 0.0
        %3109 = vadd.xlane.f32.xlu0 %v3108
        %v3110 = vpop.xlane.xlu0 %3109
        %v3111 = vsel %vm1847, %v3067, 0.0
        %3112 = vadd.xlane.f32.xlu0 %v3111
        %v3113 = vpop.xlane.xlu0 %3112
        %v3114 = vsel %vm1847, %v3068, 0.0
        %3115 = vadd.xlane.f32.xlu0 %v3114
        %v3116 = vpop.xlane.xlu0 %3115
        %v3117 = vadd.f32 %v3071, %v3074
        %v3118 = vadd.f32 %v3117, %v3077
        %v3119 = vadd.f32 %v3118, %v3080
        %v3120 = vadd.f32 %v3119, %v3083
        %v3121 = vadd.f32 %v3120, %v3086
        %v3122 = vadd.f32 %v3121, %v3089
        %v3123 = vadd.f32 %v3122, %v3092
        %v3124 = vadd.f32 %v3095, %v3098
        %v3125 = vadd.f32 %v3124, %v3101
        %v3126 = vadd.f32 %v3125, %v3104
        %v3127 = vadd.f32 %v3126, %v3107
        %v3128 = vadd.f32 %v3127, %v3110
        %v3129 = vadd.f32 %v3128, %v3113
        %v3130 = vadd.f32 %v3129, %v3116
        %v3131 = vadd.f32 %v3123, %v3130
        %v3132 = vmul.f32 %v3053, %v3053
        %v3133 = vmul.f32 %v3054, %v3054
        %v3134 = vmul.f32 %v3055, %v3055
        %v3135 = vmul.f32 %v3056, %v3056
        %v3136 = vmul.f32 %v3057, %v3057
        %v3137 = vmul.f32 %v3058, %v3058
        %v3138 = vmul.f32 %v3059, %v3059
        %v3139 = vmul.f32 %v3060, %v3060
        %v3140 = vmul.f32 %v3061, %v3061
        %v3141 = vmul.f32 %v3062, %v3062
        %v3142 = vmul.f32 %v3063, %v3063
        %v3143 = vmul.f32 %v3064, %v3064
        %v3144 = vmul.f32 %v3065, %v3065
        %v3145 = vmul.f32 %v3066, %v3066
        %v3146 = vmul.f32 %v3067, %v3067
        %v3147 = vmul.f32 %v3068, %v3068
        %v3148 = vsel %vm1847, %v3132, 0.0
        %3149 = vadd.xlane.f32.xlu0 %v3148
        %v3150 = vpop.xlane.xlu0 %3149
        %v3151 = vsel %vm1847, %v3133, 0.0
        %3152 = vadd.xlane.f32.xlu0 %v3151
        %v3153 = vpop.xlane.xlu0 %3152
        %v3154 = vsel %vm1847, %v3134, 0.0
        %3155 = vadd.xlane.f32.xlu0 %v3154
        %v3156 = vpop.xlane.xlu0 %3155
        %v3157 = vsel %vm1847, %v3135, 0.0
        %3158 = vadd.xlane.f32.xlu0 %v3157
        %v3159 = vpop.xlane.xlu0 %3158
        %v3160 = vsel %vm1847, %v3136, 0.0
        %3161 = vadd.xlane.f32.xlu0 %v3160
        %v3162 = vpop.xlane.xlu0 %3161
        %v3163 = vsel %vm1847, %v3137, 0.0
        %3164 = vadd.xlane.f32.xlu0 %v3163
        %v3165 = vpop.xlane.xlu0 %3164
        %v3166 = vsel %vm1847, %v3138, 0.0
        %3167 = vadd.xlane.f32.xlu0 %v3166
        %v3168 = vpop.xlane.xlu0 %3167
        %v3169 = vsel %vm1847, %v3139, 0.0
        %3170 = vadd.xlane.f32.xlu0 %v3169
        %v3171 = vpop.xlane.xlu0 %3170
        %v3172 = vsel %vm1847, %v3140, 0.0
        %3173 = vadd.xlane.f32.xlu0 %v3172
        %v3174 = vpop.xlane.xlu0 %3173
        %v3175 = vsel %vm1847, %v3141, 0.0
        %3176 = vadd.xlane.f32.xlu0 %v3175
        %v3177 = vpop.xlane.xlu0 %3176
        %v3178 = vsel %vm1847, %v3142, 0.0
        %3179 = vadd.xlane.f32.xlu0 %v3178
        %v3180 = vpop.xlane.xlu0 %3179
        %v3181 = vsel %vm1847, %v3143, 0.0
        %3182 = vadd.xlane.f32.xlu0 %v3181
        %v3183 = vpop.xlane.xlu0 %3182
        %v3184 = vsel %vm1847, %v3144, 0.0
        %3185 = vadd.xlane.f32.xlu0 %v3184
        %v3186 = vpop.xlane.xlu0 %3185
        %v3187 = vsel %vm1847, %v3145, 0.0
        %3188 = vadd.xlane.f32.xlu0 %v3187
        %v3189 = vpop.xlane.xlu0 %3188
        %v3190 = vsel %vm1847, %v3146, 0.0
        %3191 = vadd.xlane.f32.xlu0 %v3190
        %v3192 = vpop.xlane.xlu0 %3191
        %v3193 = vsel %vm1847, %v3147, 0.0
        %3194 = vadd.xlane.f32.xlu0 %v3193
        %v3195 = vpop.xlane.xlu0 %3194
        %v3196 = vadd.f32 %v3150, %v3153
        %v3197 = vadd.f32 %v3196, %v3156
        %v3198 = vadd.f32 %v3197, %v3159
        %v3199 = vadd.f32 %v3198, %v3162
        %v3200 = vadd.f32 %v3199, %v3165
        %v3201 = vadd.f32 %v3200, %v3168
        %v3202 = vadd.f32 %v3201, %v3171
        %v3203 = vadd.f32 %v3174, %v3177
        %v3204 = vadd.f32 %v3203, %v3180
        %v3205 = vadd.f32 %v3204, %v3183
        %v3206 = vadd.f32 %v3205, %v3186
        %v3207 = vadd.f32 %v3206, %v3189
        %v3208 = vadd.f32 %v3207, %v3192
        %v3209 = vadd.f32 %v3208, %v3195
        %v3210 = vadd.f32 %v3202, %v3209
        %v3211 = vrcp.pop 1024.0
        %v3212 = vmul.f32 %v3131, %v3211
        %v3213 = vmul.f32 %v3210, %v3211
        %v3214 = vmul.f32 %v3212, %v3212
        %v3215 = vsub.f32 %v3213, %v3214
        %v3216 = vmax.f32 %v3215, 0.0
        %v3217 = vsub.f32 %v3053, %v3212
        %v3218 = vsub.f32 %v3054, %v3212
        %v3219 = vsub.f32 %v3055, %v3212
        %v3220 = vsub.f32 %v3056, %v3212
        %v3221 = vsub.f32 %v3057, %v3212
        %v3222 = vsub.f32 %v3058, %v3212
        %v3223 = vsub.f32 %v3059, %v3212
        %v3224 = vsub.f32 %v3060, %v3212
        %v3225 = vsub.f32 %v3061, %v3212
        %v3226 = vsub.f32 %v3062, %v3212
        %v3227 = vsub.f32 %v3063, %v3212
        %v3228 = vsub.f32 %v3064, %v3212
        %v3229 = vsub.f32 %v3065, %v3212
        %v3230 = vsub.f32 %v3066, %v3212
        %v3231 = vsub.f32 %v3067, %v3212
        %v3232 = vsub.f32 %v3068, %v3212
        %v3233 = vadd.f32 %v3216, 1e-05
        %v3234 = vrsqrt.pop %v3233
        %v3235 = vmul.f32 %v3217, %v3234
        %v3236 = vmul.f32 %v3218, %v3234
        %v3237 = vmul.f32 %v3219, %v3234
        %v3238 = vmul.f32 %v3220, %v3234
        %v3239 = vmul.f32 %v3221, %v3234
        %v3240 = vmul.f32 %v3222, %v3234
        %v3241 = vmul.f32 %v3223, %v3234
        %v3242 = vmul.f32 %v3224, %v3234
        %v3243 = vmul.f32 %v3225, %v3234
        %v3244 = vmul.f32 %v3226, %v3234
        %v3245 = vmul.f32 %v3227, %v3234
        %v3246 = vmul.f32 %v3228, %v3234
        %v3247 = vmul.f32 %v3229, %v3234
        %v3248 = vmul.f32 %v3230, %v3234
        %v3249 = vmul.f32 %v3231, %v3234
        %v3250 = vmul.f32 %v3232, %v3234
        %v3251 = vpack.c.bf16 %v3235, %v3235
        %v3252 = vpack.c.bf16 %v3236, %v3236
        %v3253 = vpack.c.bf16 %v3237, %v3237
        %v3254 = vpack.c.bf16 %v3238, %v3238
        %v3255 = vpack.c.bf16 %v3239, %v3239
        %v3256 = vpack.c.bf16 %v3240, %v3240
        %v3257 = vpack.c.bf16 %v3241, %v3241
        %v3258 = vpack.c.bf16 %v3242, %v3242
        %v3259 = vpack.c.bf16 %v3243, %v3243
        %v3260 = vpack.c.bf16 %v3244, %v3244
        %v3261 = vpack.c.bf16 %v3245, %v3245
        %v3262 = vpack.c.bf16 %v3246, %v3246
        %v3263 = vpack.c.bf16 %v3247, %v3247
        %v3264 = vpack.c.bf16 %v3248, %v3248
        %v3265 = vpack.c.bf16 %v3249, %v3249
        %v3266 = vpack.c.bf16 %v3250, %v3250
        %v3267 = vld [vmem:[%s10] sm:$0xff]
        %v3268 = vld [vmem:[%s10 + $0x8] sm:$0xff]
        %v3269 = vld [vmem:[%s10 + $0x10] sm:$0xff]
        %v3270 = vld [vmem:[%s10 + $0x18] sm:$0xff]
        %v3271 = vld [vmem:[%s10 + $0x20] sm:$0xff]
        %v3272 = vld [vmem:[%s10 + $0x28] sm:$0xff]
        %v3273 = vld [vmem:[%s10 + $0x30] sm:$0xff]
        %v3274 = vld [vmem:[%s10 + $0x38] sm:$0xff]
        %s3275 = scalar_lea.vmem %s10, 64
        %v3276 = vld [vmem:[%s3275] sm:$0xff]
        %v3277 = vld [vmem:[%s3275 + $0x8] sm:$0xff]
        %v3278 = vld [vmem:[%s3275 + $0x10] sm:$0xff]
        %v3279 = vld [vmem:[%s3275 + $0x18] sm:$0xff]
        %v3280 = vld [vmem:[%s3275 + $0x20] sm:$0xff]
        %v3281 = vld [vmem:[%s3275 + $0x28] sm:$0xff]
        %v3282 = vld [vmem:[%s3275 + $0x30] sm:$0xff]
        %v3283 = vld [vmem:[%s3275 + $0x38] sm:$0xff]
        %v3296 = vunpack.c.l.b16 %v3252
        %v3297 = vunpack.c.l.b16 %v3253
        %v3298 = vunpack.c.l.b16 %v3254
        %v3299 = vunpack.c.l.b16 %v3255
        %v3300 = vunpack.c.l.b16 %v3256
        %v3301 = vunpack.c.l.b16 %v3257
        %v3302 = vunpack.c.l.b16 %v3260
        %v3303 = vunpack.c.l.b16 %v3261
        %v3304 = vunpack.c.l.b16 %v3262
        %v3305 = vunpack.c.l.b16 %v3263
        %v3306 = vunpack.c.l.b16 %v3264
        %v3307 = vunpack.c.l.b16 %v3265
        %v3308 = vpack.c.b16 %v3297, %v3296
        %v3309 = vpack.c.b16 %v3299, %v3298
        %v3310 = vpack.c.b16 %v3301, %v3300
        %v3311 = vpack.c.b16 %v3303, %v3302
        %v3312 = vpack.c.b16 %v3305, %v3304
        %v3313 = vpack.c.b16 %v3307, %v3306
        %v3322 = vunpack.c.l.b16 %v3276
        %v3323 = vunpack.c.h.b16 %v3276
        %v3324 = vunpack.c.l.b16 %v3277
        %v3325 = vunpack.c.h.b16 %v3277
        %v3326 = vunpack.c.l.b16 %v3278
        %v3327 = vunpack.c.h.b16 %v3278
        %v3328 = vunpack.c.l.b16 %v3279
        %v3329 = vunpack.c.h.b16 %v3279
        %v3330 = vunpack.c.l.b16 %v3280
        %v3331 = vunpack.c.h.b16 %v3280
        %v3332 = vunpack.c.l.b16 %v3281
        %v3333 = vunpack.c.h.b16 %v3281
        %v3334 = vunpack.c.l.b16 %v3282
        %v3335 = vunpack.c.h.b16 %v3282
        %v3336 = vunpack.c.l.b16 %v3283
        %v3337 = vunpack.c.h.b16 %v3283
        %v3338 = vpack.c.b16 %v3324, %v3322
        %v3339 = vpack.c.b16 %v3325, %v3323
        %v3340 = vpack.c.b16 %v3328, %v3326
        %v3341 = vpack.c.b16 %v3329, %v3327
        %v3342 = vpack.c.b16 %v3332, %v3330
        %v3343 = vpack.c.b16 %v3333, %v3331
        %v3344 = vpack.c.b16 %v3336, %v3334
        %v3345 = vpack.c.b16 %v3337, %v3335
        %v3355 = vsel %vm1847, %v3308, 0
        %v3358 = vsel %vm1847, %v3309, 0
        %v3361 = vsel %vm1847, %v3310, 0
        %v3364 = vsel %vm1847, %v3311, 0
        %v3367 = vsel %vm1847, %v3312, 0
        %v3370 = vsel %vm1847, %v3313, 0
        %3372 = vmatprep.subr.bf16.mxu0 %v3339
        %3373 = vmatpush1.bf16.msra.mxu0 %v3338
        %3374 = vmatprep.subr.bf16.mxu0 %v3341
        %3375 = vmatpush1.bf16.msra.mxu0 %v3340
        %3376 = vmatprep.subr.bf16.mxu0 %v3343
        %3377 = vmatpush1.bf16.msra.mxu0 %v3342
        %3378 = vmatprep.subr.bf16.mxu0 %v3345
        %3379 = vmatpush1.bf16.msra.mxu0 %v3344
        %3380 = vmatprep.subr.bf16.mxu0 0
        %3381 = vmatpush1.bf16.msra.mxu0 0
        %3382 = vmatprep.subr.bf16.mxu0 0
        %3383 = vmatpush1.bf16.msra.mxu0 0
        %3384 = vmatprep.subr.bf16.mxu0 0
        %3385 = vmatpush1.bf16.msra.mxu0 0
        %3386 = vmatprep.subr.bf16.mxu0 0
        %3387 = vmatpush1.bf16.msra.mxu0 0
        %3388 = vmatprep.subr.bf16.mxu0 0
        %3389 = vmatpush1.bf16.msra.mxu0 0
        %3390 = vmatprep.subr.bf16.mxu0 0
        %3391 = vmatpush1.bf16.msra.mxu0 0
        %3392 = vmatprep.subr.bf16.mxu0 0
        %3393 = vmatpush1.bf16.msra.mxu0 0
        %3394 = vmatprep.subr.bf16.mxu0 0
        %3395 = vmatpush1.bf16.msra.mxu0 0
        %3396 = vmatprep.subr.bf16.mxu0 0
        %3397 = vmatpush1.bf16.msra.mxu0 0
        %3398 = vmatprep.subr.bf16.mxu0 0
        %3399 = vmatpush1.bf16.msra.mxu0 0
        %3400 = vmatprep.subr.bf16.mxu0 0
        %3401 = vmatpush1.bf16.msra.mxu0 0
        %3402 = vmatprep.subr.bf16.mxu0 0
        %3403 = vmatpush1.bf16.msra.mxu0 0
        %3404 = vmatprep.mubr.bf16.mxu0 0
        %3405 = vmatmul.mubr.bf16.gmra.mrb[0].mxu0 %v3355
        %v3406 = vpop.f32.mrb[0].mxu0
        %v3407 = vadd.f32 0.0, %v3406
        %v3408 = vpop.f32.mrb[0].mxu0
        %v3409 = vadd.f32 0.0, %v3408
        %v3410 = vpop.f32.mrb[0].mxu0
        %v3411 = vadd.f32 0.0, %v3410
        %v3412 = vpop.f32.mrb[0].mxu0
        %v3413 = vadd.f32 0.0, %v3412
        %3414 = vmatprep.mubr.bf16.mxu0 0
        %3415 = vmatmul.mubr.bf16.gmra.mrb[0].mxu0 %v3358
        %v3416 = vpop.f32.mrb[0].mxu0
        %v3417 = vadd.f32 0.0, %v3416
        %v3418 = vpop.f32.mrb[0].mxu0
        %v3419 = vadd.f32 0.0, %v3418
        %v3420 = vpop.f32.mrb[0].mxu0
        %v3421 = vadd.f32 0.0, %v3420
        %v3422 = vpop.f32.mrb[0].mxu0
        %v3423 = vadd.f32 0.0, %v3422
        %3424 = vmatprep.mubr.bf16.mxu0 0
        %3425 = vmatmul.mubr.bf16.gmra.mrb[0].mxu0 %v3361
        %v3426 = vpop.f32.mrb[0].mxu0
        %v3427 = vadd.f32 0.0, %v3426
        %v3428 = vpop.f32.mrb[0].mxu0
        %v3429 = vadd.f32 0.0, %v3428
        %v3430 = vpop.f32.mrb[0].mxu0
        %v3431 = vadd.f32 0.0, %v3430
        %v3432 = vpop.f32.mrb[0].mxu0
        %v3433 = vadd.f32 0.0, %v3432
        %3434 = vmatprep.mubr.bf16.mxu0 0
        %3435 = vmatmul.mubr.bf16.gmra.mrb[0].mxu0 %v3364
        %v3436 = vpop.f32.mrb[0].mxu0
        %v3437 = vadd.f32 0.0, %v3436
        %v3438 = vpop.f32.mrb[0].mxu0
        %v3439 = vadd.f32 0.0, %v3438
        %v3440 = vpop.f32.mrb[0].mxu0
        %v3441 = vadd.f32 0.0, %v3440
        %v3442 = vpop.f32.mrb[0].mxu0
        %v3443 = vadd.f32 0.0, %v3442
        %3444 = vmatprep.mubr.bf16.mxu0 0
        %3445 = vmatmul.mubr.bf16.gmra.mrb[0].mxu0 %v3367
        %v3446 = vpop.f32.mrb[0].mxu0
        %v3447 = vadd.f32 0.0, %v3446
        %v3448 = vpop.f32.mrb[0].mxu0
        %v3449 = vadd.f32 0.0, %v3448
        %v3450 = vpop.f32.mrb[0].mxu0
        %v3451 = vadd.f32 0.0, %v3450
        %v3452 = vpop.f32.mrb[0].mxu0
        %v3453 = vadd.f32 0.0, %v3452
        %3454 = vmatprep.mubr.bf16.mxu0 0
        %3455 = vmatmul.mubr.bf16.gmra.mrb[0].mxu0 %v3370
        %v3456 = vpop.f32.mrb[0].mxu0
        %v3457 = vadd.f32 0.0, %v3456
        %v3458 = vpop.f32.mrb[0].mxu0
        %v3459 = vadd.f32 0.0, %v3458
        %v3460 = vpop.f32.mrb[0].mxu0
        %v3461 = vadd.f32 0.0, %v3460
        %v3462 = vpop.f32.mrb[0].mxu0
        %v3463 = vadd.f32 0.0, %v3462
        %3464 = vdwg.mxu0
        %v3467 = vunpack.c.l.b16 %v3251
        %v3468 = vunpack.c.l.b16 %v3259
        %v3469 = vpack.c.b16 %v3296, %v3467
        %v3470 = vpack.c.b16 %v3298, %v3297
        %v3471 = vpack.c.b16 %v3300, %v3299
        %v3472 = vpack.c.b16 %v3302, %v3468
        %v3473 = vpack.c.b16 %v3304, %v3303
        %v3474 = vpack.c.b16 %v3306, %v3305
        %v3483 = vunpack.c.l.b16 %v3267
        %v3484 = vunpack.c.h.b16 %v3267
        %v3485 = vunpack.c.l.b16 %v3268
        %v3486 = vunpack.c.h.b16 %v3268
        %v3487 = vunpack.c.l.b16 %v3269
        %v3488 = vunpack.c.h.b16 %v3269
        %v3489 = vunpack.c.l.b16 %v3270
        %v3490 = vunpack.c.h.b16 %v3270
        %v3491 = vunpack.c.l.b16 %v3271
        %v3492 = vunpack.c.h.b16 %v3271
        %v3493 = vunpack.c.l.b16 %v3272
        %v3494 = vunpack.c.h.b16 %v3272
        %v3495 = vunpack.c.l.b16 %v3273
        %v3496 = vunpack.c.h.b16 %v3273
        %v3497 = vunpack.c.l.b16 %v3274
        %v3498 = vunpack.c.h.b16 %v3274
        %v3499 = vpack.c.b16 %v3485, %v3483
        %v3500 = vpack.c.b16 %v3486, %v3484
        %v3501 = vpack.c.b16 %v3489, %v3487
        %v3502 = vpack.c.b16 %v3490, %v3488
        %v3503 = vpack.c.b16 %v3493, %v3491
        %v3504 = vpack.c.b16 %v3494, %v3492
        %v3505 = vpack.c.b16 %v3497, %v3495
        %v3506 = vpack.c.b16 %v3498, %v3496
        %v3516 = vsel %vm1847, %v3469, 0
        %v3519 = vsel %vm1847, %v3470, 0
        %v3522 = vsel %vm1847, %v3471, 0
        %v3525 = vsel %vm1847, %v3472, 0
        %v3528 = vsel %vm1847, %v3473, 0
        %v3531 = vsel %vm1847, %v3474, 0
        %3533 = vmatprep.subr.bf16.mxu0 %v3500
        %3534 = vmatpush1.bf16.msra.mxu0 %v3499
        %3535 = vmatprep.subr.bf16.mxu0 %v3502
        %3536 = vmatpush1.bf16.msra.mxu0 %v3501
        %3537 = vmatprep.subr.bf16.mxu0 %v3504
        %3538 = vmatpush1.bf16.msra.mxu0 %v3503
        %3539 = vmatprep.subr.bf16.mxu0 %v3506
        %3540 = vmatpush1.bf16.msra.mxu0 %v3505
        %3541 = vmatprep.subr.bf16.mxu0 0
        %3542 = vmatpush1.bf16.msra.mxu0 0
        %3543 = vmatprep.subr.bf16.mxu0 0
        %3544 = vmatpush1.bf16.msra.mxu0 0
        %3545 = vmatprep.subr.bf16.mxu0 0
        %3546 = vmatpush1.bf16.msra.mxu0 0
        %3547 = vmatprep.subr.bf16.mxu0 0
        %3548 = vmatpush1.bf16.msra.mxu0 0
        %3549 = vmatprep.subr.bf16.mxu0 0
        %3550 = vmatpush1.bf16.msra.mxu0 0
        %3551 = vmatprep.subr.bf16.mxu0 0
        %3552 = vmatpush1.bf16.msra.mxu0 0
        %3553 = vmatprep.subr.bf16.mxu0 0
        %3554 = vmatpush1.bf16.msra.mxu0 0
        %3555 = vmatprep.subr.bf16.mxu0 0
        %3556 = vmatpush1.bf16.msra.mxu0 0
        %3557 = vmatprep.subr.bf16.mxu0 0
        %3558 = vmatpush1.bf16.msra.mxu0 0
        %3559 = vmatprep.subr.bf16.mxu0 0
        %3560 = vmatpush1.bf16.msra.mxu0 0
        %3561 = vmatprep.subr.bf16.mxu0 0
        %3562 = vmatpush1.bf16.msra.mxu0 0
        %3563 = vmatprep.subr.bf16.mxu0 0
        %3564 = vmatpush1.bf16.msra.mxu0 0
        %3565 = vmatprep.mubr.bf16.mxu0 0
        %3566 = vmatmul.mubr.bf16.gmra.mrb[0].mxu0 %v3516
        %v3567 = vpop.f32.mrb[0].mxu0
        %v3568 = vadd.f32 %v3407, %v3567
        %v3569 = vpop.f32.mrb[0].mxu0
        %v3570 = vadd.f32 %v3409, %v3569
        %v3571 = vpop.f32.mrb[0].mxu0
        %v3572 = vadd.f32 %v3411, %v3571
        %v3573 = vpop.f32.mrb[0].mxu0
        %v3574 = vadd.f32 %v3413, %v3573
        %3575 = vmatprep.mubr.bf16.mxu0 0
        %3576 = vmatmul.mubr.bf16.gmra.mrb[0].mxu0 %v3519
        %v3577 = vpop.f32.mrb[0].mxu0
        %v3578 = vadd.f32 %v3417, %v3577
        %v3579 = vpop.f32.mrb[0].mxu0
        %v3580 = vadd.f32 %v3419, %v3579
        %v3581 = vpop.f32.mrb[0].mxu0
        %v3582 = vadd.f32 %v3421, %v3581
        %v3583 = vpop.f32.mrb[0].mxu0
        %v3584 = vadd.f32 %v3423, %v3583
        %3585 = vmatprep.mubr.bf16.mxu0 0
        %3586 = vmatmul.mubr.bf16.gmra.mrb[0].mxu0 %v3522
        %v3587 = vpop.f32.mrb[0].mxu0
        %v3588 = vadd.f32 %v3427, %v3587
        %v3589 = vpop.f32.mrb[0].mxu0
        %v3590 = vadd.f32 %v3429, %v3589
        %v3591 = vpop.f32.mrb[0].mxu0
        %v3592 = vadd.f32 %v3431, %v3591
        %v3593 = vpop.f32.mrb[0].mxu0
        %v3594 = vadd.f32 %v3433, %v3593
        %3595 = vmatprep.mubr.bf16.mxu0 0
        %3596 = vmatmul.mubr.bf16.gmra.mrb[0].mxu0 %v3525
        %v3597 = vpop.f32.mrb[0].mxu0
        %v3598 = vadd.f32 %v3437, %v3597
        %v3599 = vpop.f32.mrb[0].mxu0
        %v3600 = vadd.f32 %v3439, %v3599
        %v3601 = vpop.f32.mrb[0].mxu0
        %v3602 = vadd.f32 %v3441, %v3601
        %v3603 = vpop.f32.mrb[0].mxu0
        %v3604 = vadd.f32 %v3443, %v3603
        %3605 = vmatprep.mubr.bf16.mxu0 0
        %3606 = vmatmul.mubr.bf16.gmra.mrb[0].mxu0 %v3528
        %v3607 = vpop.f32.mrb[0].mxu0
        %v3608 = vadd.f32 %v3447, %v3607
        %v3609 = vpop.f32.mrb[0].mxu0
        %v3610 = vadd.f32 %v3449, %v3609
        %v3611 = vpop.f32.mrb[0].mxu0
        %v3612 = vadd.f32 %v3451, %v3611
        %v3613 = vpop.f32.mrb[0].mxu0
        %v3614 = vadd.f32 %v3453, %v3613
        %3615 = vmatprep.mubr.bf16.mxu0 0
        %3616 = vmatmul.mubr.bf16.gmra.mrb[0].mxu0 %v3531
        %v3617 = vpop.f32.mrb[0].mxu0
        %v3618 = vadd.f32 %v3457, %v3617
        %v3619 = vpop.f32.mrb[0].mxu0
        %v3620 = vadd.f32 %v3459, %v3619
        %v3621 = vpop.f32.mrb[0].mxu0
        %v3622 = vadd.f32 %v3461, %v3621
        %v3623 = vpop.f32.mrb[0].mxu0
        %v3624 = vadd.f32 %v3463, %v3623
        %3625 = vdwg.mxu0
        %s3626 = scalar_lea.vmem %s10, 128
        %v3627 = vld [vmem:[%s3626] sm:$0xff]
        %v3628 = vld [vmem:[%s3626 + $0x8] sm:$0xff]
        %v3629 = vld [vmem:[%s3626 + $0x10] sm:$0xff]
        %v3630 = vld [vmem:[%s3626 + $0x18] sm:$0xff]
        %v3631 = vld [vmem:[%s3626 + $0x20] sm:$0xff]
        %v3632 = vld [vmem:[%s3626 + $0x28] sm:$0xff]
        %v3633 = vld [vmem:[%s3626 + $0x30] sm:$0xff]
        %v3634 = vld [vmem:[%s3626 + $0x38] sm:$0xff]
        %v3637 = vunpack.c.l.b16 %v3258
        %v3638 = vunpack.c.l.b16 %v3266
        %v3639 = vpack.c.b16 %v3637, %v3301
        %v3640 = vpack.c.b16 %v3638, %v3307
        %v3649 = vunpack.c.l.b16 %v3627
        %v3650 = vunpack.c.h.b16 %v3627
        %v3651 = vunpack.c.l.b16 %v3628
        %v3652 = vunpack.c.h.b16 %v3628
        %v3653 = vunpack.c.l.b16 %v3629
        %v3654 = vunpack.c.h.b16 %v3629
        %v3655 = vunpack.c.l.b16 %v3630
        %v3656 = vunpack.c.h.b16 %v3630
        %v3657 = vunpack.c.l.b16 %v3631
        %v3658 = vunpack.c.h.b16 %v3631
        %v3659 = vunpack.c.l.b16 %v3632
        %v3660 = vunpack.c.h.b16 %v3632
        %v3661 = vunpack.c.l.b16 %v3633
        %v3662 = vunpack.c.h.b16 %v3633
        %v3663 = vunpack.c.l.b16 %v3634
        %v3664 = vunpack.c.h.b16 %v3634
        %v3665 = vpack.c.b16 %v3651, %v3649
        %v3666 = vpack.c.b16 %v3652, %v3650
        %v3667 = vpack.c.b16 %v3655, %v3653
        %v3668 = vpack.c.b16 %v3656, %v3654
        %v3669 = vpack.c.b16 %v3659, %v3657
        %v3670 = vpack.c.b16 %v3660, %v3658
        %v3671 = vpack.c.b16 %v3663, %v3661
        %v3672 = vpack.c.b16 %v3664, %v3662
        %v3682 = vsel %vm1847, %v3639, 0
        %v3685 = vsel %vm1847, %v3640, 0
        %3687 = vmatprep.subr.bf16.mxu0 %v3666
        %3688 = vmatpush1.bf16.msra.mxu0 %v3665
        %3689 = vmatprep.subr.bf16.mxu0 %v3668
        %3690 = vmatpush1.bf16.msra.mxu0 %v3667
        %3691 = vmatprep.subr.bf16.mxu0 %v3670
        %3692 = vmatpush1.bf16.msra.mxu0 %v3669
        %3693 = vmatprep.subr.bf16.mxu0 %v3672
        %3694 = vmatpush1.bf16.msra.mxu0 %v3671
        %3695 = vmatprep.subr.bf16.mxu0 0
        %3696 = vmatpush1.bf16.msra.mxu0 0
        %3697 = vmatprep.subr.bf16.mxu0 0
        %3698 = vmatpush1.bf16.msra.mxu0 0
        %3699 = vmatprep.subr.bf16.mxu0 0
        %3700 = vmatpush1.bf16.msra.mxu0 0
        %3701 = vmatprep.subr.bf16.mxu0 0
        %3702 = vmatpush1.bf16.msra.mxu0 0
        %3703 = vmatprep.subr.bf16.mxu0 0
        %3704 = vmatpush1.bf16.msra.mxu0 0
        %3705 = vmatprep.subr.bf16.mxu0 0
        %3706 = vmatpush1.bf16.msra.mxu0 0
        %3707 = vmatprep.subr.bf16.mxu0 0
        %3708 = vmatpush1.bf16.msra.mxu0 0
        %3709 = vmatprep.subr.bf16.mxu0 0
        %3710 = vmatpush1.bf16.msra.mxu0 0
        %3711 = vmatprep.subr.bf16.mxu0 0
        %3712 = vmatpush1.bf16.msra.mxu0 0
        %3713 = vmatprep.subr.bf16.mxu0 0
        %3714 = vmatpush1.bf16.msra.mxu0 0
        %3715 = vmatprep.subr.bf16.mxu0 0
        %3716 = vmatpush1.bf16.msra.mxu0 0
        %3717 = vmatprep.subr.bf16.mxu0 0
        %3718 = vmatpush1.bf16.msra.mxu0 0
        %3719 = vmatprep.mubr.bf16.mxu0 0
        %3720 = vmatmul.mubr.bf16.gmra.mrb[0].mxu0 %v3519
        %v3721 = vpop.f32.mrb[0].mxu0
        %v3722 = vadd.f32 0.0, %v3721
        %v3723 = vpop.f32.mrb[0].mxu0
        %v3724 = vadd.f32 0.0, %v3723
        %v3725 = vpop.f32.mrb[0].mxu0
        %v3726 = vadd.f32 0.0, %v3725
        %v3727 = vpop.f32.mrb[0].mxu0
        %v3728 = vadd.f32 0.0, %v3727
        %3729 = vmatprep.mubr.bf16.mxu0 0
        %3730 = vmatmul.mubr.bf16.gmra.mrb[0].mxu0 %v3522
        %v3731 = vpop.f32.mrb[0].mxu0
        %v3732 = vadd.f32 0.0, %v3731
        %v3733 = vpop.f32.mrb[0].mxu0
        %v3734 = vadd.f32 0.0, %v3733
        %v3735 = vpop.f32.mrb[0].mxu0
        %v3736 = vadd.f32 0.0, %v3735
        %v3737 = vpop.f32.mrb[0].mxu0
        %v3738 = vadd.f32 0.0, %v3737
        %3739 = vmatprep.mubr.bf16.mxu0 0
        %3740 = vmatmul.mubr.bf16.gmra.mrb[0].mxu0 %v3682
        %v3741 = vpop.f32.mrb[0].mxu0
        %v3742 = vadd.f32 0.0, %v3741
        %v3743 = vpop.f32.mrb[0].mxu0
        %v3744 = vadd.f32 0.0, %v3743
        %v3745 = vpop.f32.mrb[0].mxu0
        %v3746 = vadd.f32 0.0, %v3745
        %v3747 = vpop.f32.mrb[0].mxu0
        %v3748 = vadd.f32 0.0, %v3747
        %3749 = vmatprep.mubr.bf16.mxu0 0
        %3750 = vmatmul.mubr.bf16.gmra.mrb[0].mxu0 %v3528
        %v3751 = vpop.f32.mrb[0].mxu0
        %v3752 = vadd.f32 0.0, %v3751
        %v3753 = vpop.f32.mrb[0].mxu0
        %v3754 = vadd.f32 0.0, %v3753
        %v3755 = vpop.f32.mrb[0].mxu0
        %v3756 = vadd.f32 0.0, %v3755
        %v3757 = vpop.f32.mrb[0].mxu0
        %v3758 = vadd.f32 0.0, %v3757
        %3759 = vmatprep.mubr.bf16.mxu0 0
        %3760 = vmatmul.mubr.bf16.gmra.mrb[0].mxu0 %v3531
        %v3761 = vpop.f32.mrb[0].mxu0
        %v3762 = vadd.f32 0.0, %v3761
        %v3763 = vpop.f32.mrb[0].mxu0
        %v3764 = vadd.f32 0.0, %v3763
        %v3765 = vpop.f32.mrb[0].mxu0
        %v3766 = vadd.f32 0.0, %v3765
        %v3767 = vpop.f32.mrb[0].mxu0
        %v3768 = vadd.f32 0.0, %v3767
        %3769 = vmatprep.mubr.bf16.mxu0 0
        %3770 = vmatmul.mubr.bf16.gmra.mrb[0].mxu0 %v3685
        %v3771 = vpop.f32.mrb[0].mxu0
        %v3772 = vadd.f32 0.0, %v3771
        %v3773 = vpop.f32.mrb[0].mxu0
        %v3774 = vadd.f32 0.0, %v3773
        %v3775 = vpop.f32.mrb[0].mxu0
        %v3776 = vadd.f32 0.0, %v3775
        %v3777 = vpop.f32.mrb[0].mxu0
        %v3778 = vadd.f32 0.0, %v3777
        %3779 = vdwg.mxu0
        %v3780 = vadd.f32 %v3568, %v3722
        %v3781 = vadd.f32 %v3570, %v3724
        %v3782 = vadd.f32 %v3572, %v3726
        %v3783 = vadd.f32 %v3574, %v3728
        %v3784 = vadd.f32 %v3578, %v3732
        %v3785 = vadd.f32 %v3580, %v3734
        %v3786 = vadd.f32 %v3582, %v3736
        %v3787 = vadd.f32 %v3584, %v3738
        %v3788 = vadd.f32 %v3588, %v3742
        %v3789 = vadd.f32 %v3590, %v3744
        %v3790 = vadd.f32 %v3592, %v3746
        %v3791 = vadd.f32 %v3594, %v3748
        %v3792 = vadd.f32 %v3598, %v3752
        %v3793 = vadd.f32 %v3600, %v3754
        %v3794 = vadd.f32 %v3602, %v3756
        %v3795 = vadd.f32 %v3604, %v3758
        %v3796 = vadd.f32 %v3608, %v3762
        %v3797 = vadd.f32 %v3610, %v3764
        %v3798 = vadd.f32 %v3612, %v3766
        %v3799 = vadd.f32 %v3614, %v3768
        %v3800 = vadd.f32 %v3618, %v3772
        %v3801 = vadd.f32 %v3620, %v3774
        %v3802 = vadd.f32 %v3622, %v3776
        %v3803 = vadd.f32 %v3624, %v3778
        %v3804 = vld [vmem:[%s11] sm:$0x3]
        %v3806 = vlaneseq
        %v3807 = vshrl.u32 %v3806, 7
        %v3808 = vsub.s32 0, %v3807
        %v3809 = vrot.slane %v3804, %v3808
        %v3810 = vlaneseq
        %v3811 = vshrl.u32 %v3810, 7
        %v3812 = vsub.s32 1, %v3811
        %v3813 = vrot.slane %v3804, %v3812
        %v3816 = vadd.f32 %v3780, %v3809
        %v3817 = vadd.f32 %v3781, %v3813
        %v3818 = vadd.f32 %v3782, %v3809
        %v3819 = vadd.f32 %v3783, %v3813
        %v3820 = vadd.f32 %v3784, %v3809
        %v3821 = vadd.f32 %v3785, %v3813
        %v3822 = vadd.f32 %v3786, %v3809
        %v3823 = vadd.f32 %v3787, %v3813
        %v3824 = vadd.f32 %v3788, %v3809
        %v3825 = vadd.f32 %v3789, %v3813
        %v3826 = vadd.f32 %v3790, %v3809
        %v3827 = vadd.f32 %v3791, %v3813
        %v3828 = vadd.f32 %v3792, %v3809
        %v3829 = vadd.f32 %v3793, %v3813
        %v3830 = vadd.f32 %v3794, %v3809
        %v3831 = vadd.f32 %v3795, %v3813
        %v3832 = vadd.f32 %v3796, %v3809
        %v3833 = vadd.f32 %v3797, %v3813
        %v3834 = vadd.f32 %v3798, %v3809
        %v3835 = vadd.f32 %v3799, %v3813
        %v3836 = vadd.f32 %v3800, %v3809
        %v3837 = vadd.f32 %v3801, %v3813
        %v3838 = vadd.f32 %v3802, %v3809
        %v3839 = vadd.f32 %v3803, %v3813
        %v3840 = vxor.u32 %v3816, 2147483648
        %v3841 = vxor.u32 %v3818, 2147483648
        %v3842 = vxor.u32 %v3820, 2147483648
        %v3843 = vxor.u32 %v3822, 2147483648
        %v3844 = vxor.u32 %v3824, 2147483648
        %v3845 = vxor.u32 %v3826, 2147483648
        %v3846 = vxor.u32 %v3828, 2147483648
        %v3847 = vxor.u32 %v3830, 2147483648
        %v3848 = vxor.u32 %v3832, 2147483648
        %v3849 = vxor.u32 %v3834, 2147483648
        %v3850 = vxor.u32 %v3836, 2147483648
        %v3851 = vxor.u32 %v3838, 2147483648
        %v3852 = vmul.f32 %v3840, 1.442695
        %v3853 = vpow.pop %v3852
        %v3854 = vmul.f32 %v3841, 1.442695
        %v3855 = vpow.pop %v3854
        %v3856 = vmul.f32 %v3842, 1.442695
        %v3857 = vpow.pop %v3856
        %v3858 = vmul.f32 %v3843, 1.442695
        %v3859 = vpow.pop %v3858
        %v3860 = vmul.f32 %v3844, 1.442695
        %v3861 = vpow.pop %v3860
        %v3862 = vmul.f32 %v3845, 1.442695
        %v3863 = vpow.pop %v3862
        %v3864 = vmul.f32 %v3846, 1.442695
        %v3865 = vpow.pop %v3864
        %v3866 = vmul.f32 %v3847, 1.442695
        %v3867 = vpow.pop %v3866
        %v3868 = vmul.f32 %v3848, 1.442695
        %v3869 = vpow.pop %v3868
        %v3870 = vmul.f32 %v3849, 1.442695
        %v3871 = vpow.pop %v3870
        %v3872 = vmul.f32 %v3850, 1.442695
        %v3873 = vpow.pop %v3872
        %v3874 = vmul.f32 %v3851, 1.442695
        %v3875 = vpow.pop %v3874
        %v3876 = vadd.f32 %v3853, 1.0
        %v3877 = vadd.f32 %v3855, 1.0
        %v3878 = vadd.f32 %v3857, 1.0
        %v3879 = vadd.f32 %v3859, 1.0
        %v3880 = vadd.f32 %v3861, 1.0
        %v3881 = vadd.f32 %v3863, 1.0
        %v3882 = vadd.f32 %v3865, 1.0
        %v3883 = vadd.f32 %v3867, 1.0
        %v3884 = vadd.f32 %v3869, 1.0
        %v3885 = vadd.f32 %v3871, 1.0
        %v3886 = vadd.f32 %v3873, 1.0
        %v3887 = vadd.f32 %v3875, 1.0
        %v3888 = vrcp.pop %v3876
        %v3889 = vmul.f32 1.0, %v3888
        %v3890 = vrcp.pop %v3877
        %v3891 = vmul.f32 1.0, %v3890
        %v3892 = vrcp.pop %v3878
        %v3893 = vmul.f32 1.0, %v3892
        %v3894 = vrcp.pop %v3879
        %v3895 = vmul.f32 1.0, %v3894
        %v3896 = vrcp.pop %v3880
        %v3897 = vmul.f32 1.0, %v3896
        %v3898 = vrcp.pop %v3881
        %v3899 = vmul.f32 1.0, %v3898
        %v3900 = vrcp.pop %v3882
        %v3901 = vmul.f32 1.0, %v3900
        %v3902 = vrcp.pop %v3883
        %v3903 = vmul.f32 1.0, %v3902
        %v3904 = vrcp.pop %v3884
        %v3905 = vmul.f32 1.0, %v3904
        %v3906 = vrcp.pop %v3885
        %v3907 = vmul.f32 1.0, %v3906
        %v3908 = vrcp.pop %v3886
        %v3909 = vmul.f32 1.0, %v3908
        %v3910 = vrcp.pop %v3887
        %v3911 = vmul.f32 1.0, %v3910
        %3924 = vrot.lane.b32.xlu0 %v3889, 64
        %v3925 = vpop.permute.xlu0 %3924
        %3926 = vrot.lane.b32.xlu0 %v3891, 64
        %v3927 = vpop.permute.xlu0 %3926
        %3928 = vrot.lane.b32.xlu0 %v3893, 64
        %v3929 = vpop.permute.xlu0 %3928
        %3930 = vrot.lane.b32.xlu0 %v3895, 64
        %v3931 = vpop.permute.xlu0 %3930
        %3932 = vrot.lane.b32.xlu0 %v3897, 64
        %v3933 = vpop.permute.xlu0 %3932
        %3934 = vrot.lane.b32.xlu0 %v3899, 64
        %v3935 = vpop.permute.xlu0 %3934
        %3936 = vrot.lane.b32.xlu0 %v3901, 64
        %v3937 = vpop.permute.xlu0 %3936
        %3938 = vrot.lane.b32.xlu0 %v3903, 64
        %v3939 = vpop.permute.xlu0 %3938
        %3940 = vrot.lane.b32.xlu0 %v3905, 64
        %v3941 = vpop.permute.xlu0 %3940
        %3942 = vrot.lane.b32.xlu0 %v3907, 64
        %v3943 = vpop.permute.xlu0 %3942
        %3944 = vrot.lane.b32.xlu0 %v3909, 64
        %v3945 = vpop.permute.xlu0 %3944
        %3946 = vrot.lane.b32.xlu0 %v3911, 64
        %v3947 = vpop.permute.xlu0 %3946
        %v3960 = vmul.f32 %v3816, %v3925
        %v3961 = vmul.f32 %v3818, %v3927
        %v3962 = vmul.f32 %v3820, %v3929
        %v3963 = vmul.f32 %v3822, %v3931
        %v3964 = vmul.f32 %v3824, %v3933
        %v3965 = vmul.f32 %v3826, %v3935
        %v3966 = vmul.f32 %v3828, %v3937
        %v3967 = vmul.f32 %v3830, %v3939
        %v3968 = vmul.f32 %v3832, %v3941
        %v3969 = vmul.f32 %v3834, %v3943
        %v3970 = vmul.f32 %v3836, %v3945
        %v3971 = vmul.f32 %v3838, %v3947
        %v3972 = vadd.f32 %v3960, %v3817
        %v3973 = vadd.f32 %v3961, %v3819
        %v3974 = vadd.f32 %v3962, %v3821
        %v3975 = vadd.f32 %v3963, %v3823
        %v3976 = vadd.f32 %v3964, %v3825
        %v3977 = vadd.f32 %v3965, %v3827
        %v3978 = vadd.f32 %v3966, %v3829
        %v3979 = vadd.f32 %v3967, %v3831
        %v3980 = vadd.f32 %v3968, %v3833
        %v3981 = vadd.f32 %v3969, %v3835
        %v3982 = vadd.f32 %v3970, %v3837
        %v3983 = vadd.f32 %v3971, %v3839
        %v3984 = vmax.f32 %v3972, 0.0
        %v3985 = vmax.f32 %v3973, 0.0
        %v3986 = vmax.f32 %v3974, 0.0
        %v3987 = vmax.f32 %v3975, 0.0
        %v3988 = vmax.f32 %v3976, 0.0
        %v3989 = vmax.f32 %v3977, 0.0
        %v3990 = vmax.f32 %v3978, 0.0
        %v3991 = vmax.f32 %v3979, 0.0
        %v3992 = vmax.f32 %v3980, 0.0
        %v3993 = vmax.f32 %v3981, 0.0
        %v3994 = vmax.f32 %v3982, 0.0
        %v3995 = vmax.f32 %v3983, 0.0
        %v3996 = vpack.c.bf16 %v3984, %v3984
        %v3997 = vpack.c.bf16 %v3985, %v3985
        %v3998 = vpack.c.bf16 %v3986, %v3986
        %v3999 = vpack.c.bf16 %v3987, %v3987
        %v4000 = vpack.c.bf16 %v3988, %v3988
        %v4001 = vpack.c.bf16 %v3989, %v3989
        %v4002 = vpack.c.bf16 %v3990, %v3990
        %v4003 = vpack.c.bf16 %v3991, %v3991
        %v4004 = vpack.c.bf16 %v3992, %v3992
        %v4005 = vpack.c.bf16 %v3993, %v3993
        %v4006 = vpack.c.bf16 %v3994, %v3994
        %v4007 = vpack.c.bf16 %v3995, %v3995
        %v4008 = vld [vmem:[%s12] sm:$0xf]
        %v4009 = vld [vmem:[%s12 + $0x4] sm:$0xf]
        %v4010 = vld [vmem:[%s12 + $0x8] sm:$0xf]
        %v4011 = vld [vmem:[%s12 + $0xc] sm:$0xf]
        %v4012 = vld [vmem:[%s12 + $0x10] sm:$0xf]
        %v4013 = vld [vmem:[%s12 + $0x14] sm:$0xf]
        %v4014 = vld [vmem:[%s12 + $0x18] sm:$0xf]
        %v4015 = vld [vmem:[%s12 + $0x1c] sm:$0xf]
        %v4028 = vunpack.c.l.b16 %v3996
        %v4029 = vunpack.c.l.b16 %v3997
        %v4030 = vunpack.c.l.b16 %v3998
        %v4031 = vunpack.c.l.b16 %v3999
        %v4032 = vunpack.c.l.b16 %v4000
        %v4033 = vunpack.c.l.b16 %v4001
        %v4034 = vunpack.c.l.b16 %v4002
        %v4035 = vunpack.c.l.b16 %v4003
        %v4036 = vunpack.c.l.b16 %v4004
        %v4037 = vunpack.c.l.b16 %v4005
        %v4038 = vunpack.c.l.b16 %v4006
        %v4039 = vunpack.c.l.b16 %v4007
        %v4040 = vpack.c.b16 %v4029, %v4028
        %v4041 = vpack.c.b16 %v4031, %v4030
        %v4042 = vpack.c.b16 %v4033, %v4032
        %v4043 = vpack.c.b16 %v4035, %v4034
        %v4044 = vpack.c.b16 %v4037, %v4036
        %v4045 = vpack.c.b16 %v4039, %v4038
        %v4054 = vunpack.c.l.b16 %v4008
        %v4055 = vunpack.c.l.b16 %v4009
        %v4056 = vunpack.c.l.b16 %v4010
        %v4057 = vunpack.c.l.b16 %v4011
        %v4058 = vunpack.c.l.b16 %v4012
        %v4059 = vunpack.c.l.b16 %v4013
        %v4060 = vunpack.c.l.b16 %v4014
        %v4061 = vunpack.c.l.b16 %v4015
        %v4062 = vpack.c.b16 %v4055, %v4054
        %v4063 = vpack.c.b16 %v4057, %v4056
        %v4064 = vpack.c.b16 %v4059, %v4058
        %v4065 = vpack.c.b16 %v4061, %v4060
        %v4071 = vsel %vm1847, %v4040, 0
        %v4074 = vsel %vm1847, %v4041, 0
        %v4077 = vsel %vm1847, %v4042, 0
        %v4080 = vsel %vm1847, %v4043, 0
        %v4083 = vsel %vm1847, %v4044, 0
        %v4086 = vsel %vm1847, %v4045, 0
        %4088 = vmatprep.subr.bf16.mxu0 0
        %4089 = vmatpush1.bf16.msra.mxu0 %v4062
        %4090 = vmatprep.subr.bf16.mxu0 0
        %4091 = vmatpush1.bf16.msra.mxu0 %v4063
        %4092 = vmatprep.subr.bf16.mxu0 0
        %4093 = vmatpush1.bf16.msra.mxu0 %v4064
        %4094 = vmatprep.subr.bf16.mxu0 0
        %4095 = vmatpush1.bf16.msra.mxu0 %v4065
        %4096 = vmatprep.subr.bf16.mxu0 0
        %4097 = vmatpush1.bf16.msra.mxu0 0
        %4098 = vmatprep.subr.bf16.mxu0 0
        %4099 = vmatpush1.bf16.msra.mxu0 0
        %4100 = vmatprep.subr.bf16.mxu0 0
        %4101 = vmatpush1.bf16.msra.mxu0 0
        %4102 = vmatprep.subr.bf16.mxu0 0
        %4103 = vmatpush1.bf16.msra.mxu0 0
        %4104 = vmatprep.subr.bf16.mxu0 0
        %4105 = vmatpush1.bf16.msra.mxu0 0
        %4106 = vmatprep.subr.bf16.mxu0 0
        %4107 = vmatpush1.bf16.msra.mxu0 0
        %4108 = vmatprep.subr.bf16.mxu0 0
        %4109 = vmatpush1.bf16.msra.mxu0 0
        %4110 = vmatprep.subr.bf16.mxu0 0
        %4111 = vmatpush1.bf16.msra.mxu0 0
        %4112 = vmatprep.subr.bf16.mxu0 0
        %4113 = vmatpush1.bf16.msra.mxu0 0
        %4114 = vmatprep.subr.bf16.mxu0 0
        %4115 = vmatpush1.bf16.msra.mxu0 0
        %4116 = vmatprep.subr.bf16.mxu0 0
        %4117 = vmatpush1.bf16.msra.mxu0 0
        %4118 = vmatprep.subr.bf16.mxu0 0
        %4119 = vmatpush1.bf16.msra.mxu0 0
        %4120 = vmatprep.mubr.bf16.mxu0 0
        %4121 = vmatmul.mubr.bf16.gmra.mrb[0].mxu0 %v4071
        %v4122 = vpop.f32.mrb[0].mxu0
        %v4123 = vadd.f32 0.0, %v4122
        %v4124 = vpop.f32.mrb[0].mxu0
        %v4125 = vpop.f32.mrb[0].mxu0
        %v4126 = vadd.f32 0.0, %v4125
        %v4127 = vpop.f32.mrb[0].mxu0
        %4128 = vmatprep.mubr.bf16.mxu0 0
        %4129 = vmatmul.mubr.bf16.gmra.mrb[0].mxu0 %v4074
        %v4130 = vpop.f32.mrb[0].mxu0
        %v4131 = vadd.f32 0.0, %v4130
        %v4132 = vpop.f32.mrb[0].mxu0
        %v4133 = vpop.f32.mrb[0].mxu0
        %v4134 = vadd.f32 0.0, %v4133
        %v4135 = vpop.f32.mrb[0].mxu0
        %4136 = vmatprep.mubr.bf16.mxu0 0
        %4137 = vmatmul.mubr.bf16.gmra.mrb[0].mxu0 %v4077
        %v4138 = vpop.f32.mrb[0].mxu0
        %v4139 = vadd.f32 0.0, %v4138
        %v4140 = vpop.f32.mrb[0].mxu0
        %v4141 = vpop.f32.mrb[0].mxu0
        %v4142 = vadd.f32 0.0, %v4141
        %v4143 = vpop.f32.mrb[0].mxu0
        %4144 = vmatprep.mubr.bf16.mxu0 0
        %4145 = vmatmul.mubr.bf16.gmra.mrb[0].mxu0 %v4080
        %v4146 = vpop.f32.mrb[0].mxu0
        %v4147 = vadd.f32 0.0, %v4146
        %v4148 = vpop.f32.mrb[0].mxu0
        %v4149 = vpop.f32.mrb[0].mxu0
        %v4150 = vadd.f32 0.0, %v4149
        %v4151 = vpop.f32.mrb[0].mxu0
        %4152 = vmatprep.mubr.bf16.mxu0 0
        %4153 = vmatmul.mubr.bf16.gmra.mrb[0].mxu0 %v4083
        %v4154 = vpop.f32.mrb[0].mxu0
        %v4155 = vadd.f32 0.0, %v4154
        %v4156 = vpop.f32.mrb[0].mxu0
        %v4157 = vpop.f32.mrb[0].mxu0
        %v4158 = vadd.f32 0.0, %v4157
        %v4159 = vpop.f32.mrb[0].mxu0
        %4160 = vmatprep.mubr.bf16.mxu0 0
        %4161 = vmatmul.mubr.bf16.gmra.mrb[0].mxu0 %v4086
        %v4162 = vpop.f32.mrb[0].mxu0
        %v4163 = vadd.f32 0.0, %v4162
        %v4164 = vpop.f32.mrb[0].mxu0
        %v4165 = vpop.f32.mrb[0].mxu0
        %v4166 = vadd.f32 0.0, %v4165
        %v4167 = vpop.f32.mrb[0].mxu0
        %4168 = vdwg.mxu0
        %v4169 = vld [vmem:[%s13] sm:$0xf]
        %v4170 = vld [vmem:[%s13 + $0x4] sm:$0xf]
        %v4171 = vld [vmem:[%s13 + $0x8] sm:$0xf]
        %v4172 = vld [vmem:[%s13 + $0xc] sm:$0xf]
        %v4173 = vld [vmem:[%s13 + $0x10] sm:$0xf]
        %v4174 = vld [vmem:[%s13 + $0x14] sm:$0xf]
        %v4175 = vld [vmem:[%s13 + $0x18] sm:$0xf]
        %v4176 = vld [vmem:[%s13 + $0x1c] sm:$0xf]
        %v4177 = vld [vmem:[%s13 + $0x20] sm:$0xf]
        %v4178 = vld [vmem:[%s13 + $0x24] sm:$0xf]
        %v4179 = vld [vmem:[%s13 + $0x28] sm:$0xf]
        %v4180 = vld [vmem:[%s13 + $0x2c] sm:$0xf]
        %v4181 = vpack.c.bf16 %v4126, %v4123
        %v4182 = vpack.c.bf16 %v4134, %v4131
        %v4183 = vpack.c.bf16 %v4142, %v4139
        %v4184 = vpack.c.bf16 %v4150, %v4147
        %v4185 = vpack.c.bf16 %v4158, %v4155
        %v4186 = vpack.c.bf16 %v4166, %v4163
        %v4199 = vunpack.c.l.b16 %v4169
        %v4200 = vunpack.c.l.b16 %v4170
        %v4201 = vunpack.c.l.b16 %v4171
        %v4202 = vunpack.c.l.b16 %v4172
        %v4203 = vunpack.c.l.b16 %v4173
        %v4204 = vunpack.c.l.b16 %v4174
        %v4205 = vunpack.c.l.b16 %v4175
        %v4206 = vunpack.c.l.b16 %v4176
        %v4207 = vunpack.c.l.b16 %v4177
        %v4208 = vunpack.c.l.b16 %v4178
        %v4209 = vunpack.c.l.b16 %v4179
        %v4210 = vunpack.c.l.b16 %v4180
        %v4211 = vpack.c.b16 %v4200, %v4199
        %v4212 = vpack.c.b16 %v4202, %v4201
        %v4213 = vpack.c.b16 %v4204, %v4203
        %v4214 = vpack.c.b16 %v4206, %v4205
        %v4215 = vpack.c.b16 %v4208, %v4207
        %v4216 = vpack.c.b16 %v4210, %v4209
        %vm4217 = vcmask 785408
        %v4219 = vsel %vm4217, %v4211, 0
        %v4222 = vsel %vm4217, %v4212, 0
        %v4225 = vsel %vm4217, %v4213, 0
        %v4228 = vsel %vm4217, %v4214, 0
        %v4231 = vsel %vm4217, %v4215, 0
        %v4234 = vsel %vm4217, %v4216, 0
        %4236 = vmatprep.subr.bf16.mxu0 0
        %4237 = vmatpush1.bf16.msra.mxu0 %v4181
        %4238 = vmatprep.subr.bf16.mxu0 0
        %4239 = vmatpush1.bf16.msra.mxu0 %v4182
        %4240 = vmatprep.subr.bf16.mxu0 0
        %4241 = vmatpush1.bf16.msra.mxu0 %v4183
        %4242 = vmatprep.subr.bf16.mxu0 0
        %4243 = vmatpush1.bf16.msra.mxu0 %v4184
        %4244 = vmatprep.subr.bf16.mxu0 0
        %4245 = vmatpush1.bf16.msra.mxu0 %v4185
        %4246 = vmatprep.subr.bf16.mxu0 0
        %4247 = vmatpush1.bf16.msra.mxu0 %v4186
        %4248 = vmatprep.subr.bf16.mxu0 0
        %4249 = vmatpush1.bf16.msra.mxu0 0
        %4250 = vmatprep.subr.bf16.mxu0 0
        %4251 = vmatpush1.bf16.msra.mxu0 0
        %4252 = vmatprep.subr.bf16.mxu0 0
        %4253 = vmatpush1.bf16.msra.mxu0 0
        %4254 = vmatprep.subr.bf16.mxu0 0
        %4255 = vmatpush1.bf16.msra.mxu0 0
        %4256 = vmatprep.subr.bf16.mxu0 0
        %4257 = vmatpush1.bf16.msra.mxu0 0
        %4258 = vmatprep.subr.bf16.mxu0 0
        %4259 = vmatpush1.bf16.msra.mxu0 0
        %4260 = vmatprep.subr.bf16.mxu0 0
        %4261 = vmatpush1.bf16.msra.mxu0 0
        %4262 = vmatprep.subr.bf16.mxu0 0
        %4263 = vmatpush1.bf16.msra.mxu0 0
        %4264 = vmatprep.subr.bf16.mxu0 0
        %4265 = vmatpush1.bf16.msra.mxu0 0
        %4266 = vmatprep.subr.bf16.mxu0 0
        %4267 = vmatpush1.bf16.msra.mxu0 0
        %4268 = vmatprep.mubr.bf16.mxu0 0
        %4269 = vmatmul.mubr.bf16.gmra.mrb[0].mxu0 %v4219
        %v4270 = vpop.f32.mrb[0].mxu0
        %v4271 = vadd.f32 0.0, %v4270
        %v4272 = vpop.f32.mrb[0].mxu0
        %v4273 = vpop.f32.mrb[0].mxu0
        %v4274 = vadd.f32 0.0, %v4273
        %v4275 = vpop.f32.mrb[0].mxu0
        %4276 = vmatprep.mubr.bf16.mxu0 0
        %4277 = vmatmul.mubr.bf16.gmra.mrb[0].mxu0 %v4222
        %v4278 = vpop.f32.mrb[0].mxu0
        %v4279 = vadd.f32 0.0, %v4278
        %v4280 = vpop.f32.mrb[0].mxu0
        %v4281 = vpop.f32.mrb[0].mxu0
        %v4282 = vadd.f32 0.0, %v4281
        %v4283 = vpop.f32.mrb[0].mxu0
        %4284 = vmatprep.mubr.bf16.mxu0 0
        %4285 = vmatmul.mubr.bf16.gmra.mrb[0].mxu0 %v4225
        %v4286 = vpop.f32.mrb[0].mxu0
        %v4287 = vadd.f32 0.0, %v4286
        %v4288 = vpop.f32.mrb[0].mxu0
        %v4289 = vpop.f32.mrb[0].mxu0
        %v4290 = vadd.f32 0.0, %v4289
        %v4291 = vpop.f32.mrb[0].mxu0
        %4292 = vmatprep.mubr.bf16.mxu0 0
        %4293 = vmatmul.mubr.bf16.gmra.mrb[0].mxu0 %v4228
        %v4294 = vpop.f32.mrb[0].mxu0
        %v4295 = vadd.f32 0.0, %v4294
        %v4296 = vpop.f32.mrb[0].mxu0
        %v4297 = vpop.f32.mrb[0].mxu0
        %v4298 = vadd.f32 0.0, %v4297
        %v4299 = vpop.f32.mrb[0].mxu0
        %4300 = vmatprep.mubr.bf16.mxu0 0
        %4301 = vmatmul.mubr.bf16.gmra.mrb[0].mxu0 %v4231
        %v4302 = vpop.f32.mrb[0].mxu0
        %v4303 = vadd.f32 0.0, %v4302
        %v4304 = vpop.f32.mrb[0].mxu0
        %v4305 = vpop.f32.mrb[0].mxu0
        %v4306 = vadd.f32 0.0, %v4305
        %v4307 = vpop.f32.mrb[0].mxu0
        %4308 = vmatprep.mubr.bf16.mxu0 0
        %4309 = vmatmul.mubr.bf16.gmra.mrb[0].mxu0 %v4234
        %v4310 = vpop.f32.mrb[0].mxu0
        %v4311 = vadd.f32 0.0, %v4310
        %v4312 = vpop.f32.mrb[0].mxu0
        %v4313 = vpop.f32.mrb[0].mxu0
        %v4314 = vadd.f32 0.0, %v4313
        %v4315 = vpop.f32.mrb[0].mxu0
        %4316 = vdwg.mxu0
        %v4317 = vmax.f32 %v4271, 0.0
        %v4318 = vmax.f32 %v4274, 0.0
        %v4319 = vmax.f32 %v4279, 0.0
        %v4320 = vmax.f32 %v4282, 0.0
        %v4321 = vmax.f32 %v4287, 0.0
        %v4322 = vmax.f32 %v4290, 0.0
        %v4323 = vmax.f32 %v4295, 0.0
        %v4324 = vmax.f32 %v4298, 0.0
        %v4325 = vmax.f32 %v4303, 0.0
        %v4326 = vmax.f32 %v4306, 0.0
        %v4327 = vmax.f32 %v4311, 0.0
        %v4328 = vmax.f32 %v4314, 0.0
        %v4329 = vpack.c.bf16 %v4317, %v4317
        %v4330 = vpack.c.bf16 %v4318, %v4318
        %v4331 = vpack.c.bf16 %v4319, %v4319
        %v4332 = vpack.c.bf16 %v4320, %v4320
        %v4333 = vpack.c.bf16 %v4321, %v4321
        %v4334 = vpack.c.bf16 %v4322, %v4322
        %v4335 = vpack.c.bf16 %v4323, %v4323
        %v4336 = vpack.c.bf16 %v4324, %v4324
        %v4337 = vpack.c.bf16 %v4325, %v4325
        %v4338 = vpack.c.bf16 %v4326, %v4326
        %v4339 = vpack.c.bf16 %v4327, %v4327
        %v4340 = vpack.c.bf16 %v4328, %v4328
        %v4341 = vld [vmem:[%s14] sm:$0xff]
        %v4342 = vld [vmem:[%s14 + $0x8] sm:$0xff]
        %s4343 = scalar_lea.vmem %s14, 16
        %v4344 = vld [vmem:[%s4343] sm:$0xff]
        %v4345 = vld [vmem:[%s4343 + $0x8] sm:$0xff]
        %v4354 = vunpack.c.l.b16 %v4330
        %v4355 = vunpack.c.l.b16 %v4331
        %v4356 = vunpack.c.l.b16 %v4332
        %v4357 = vunpack.c.l.b16 %v4333
        %v4358 = vunpack.c.l.b16 %v4336
        %v4359 = vunpack.c.l.b16 %v4337
        %v4360 = vunpack.c.l.b16 %v4338
        %v4361 = vunpack.c.l.b16 %v4339
        %v4362 = vpack.c.b16 %v4355, %v4354
        %v4363 = vpack.c.b16 %v4357, %v4356
        %v4364 = vpack.c.b16 %v4359, %v4358
        %v4365 = vpack.c.b16 %v4361, %v4360
        %v4368 = vunpack.c.l.b16 %v4344
        %v4369 = vunpack.c.h.b16 %v4344
        %v4370 = vunpack.c.l.b16 %v4345
        %v4371 = vunpack.c.h.b16 %v4345
        %v4372 = vpack.c.b16 %v4370, %v4368
        %v4373 = vpack.c.b16 %v4371, %v4369
        %v4377 = vsel %vm2350, %v4362, 0
        %v4380 = vsel %vm2350, %v4363, 0
        %v4383 = vsel %vm2350, %v4364, 0
        %v4386 = vsel %vm2350, %v4365, 0
        %4388 = vmatprep.subr.bf16.mxu0 %v4373
        %4389 = vmatpush1.bf16.msra.mxu0 %v4372
        %4390 = vmatprep.subr.bf16.mxu0 0
        %4391 = vmatpush1.bf16.msra.mxu0 0
        %4392 = vmatprep.subr.bf16.mxu0 0
        %4393 = vmatpush1.bf16.msra.mxu0 0
        %4394 = vmatprep.subr.bf16.mxu0 0
        %4395 = vmatpush1.bf16.msra.mxu0 0
        %4396 = vmatprep.subr.bf16.mxu0 0
        %4397 = vmatpush1.bf16.msra.mxu0 0
        %4398 = vmatprep.subr.bf16.mxu0 0
        %4399 = vmatpush1.bf16.msra.mxu0 0
        %4400 = vmatprep.subr.bf16.mxu0 0
        %4401 = vmatpush1.bf16.msra.mxu0 0
        %4402 = vmatprep.subr.bf16.mxu0 0
        %4403 = vmatpush1.bf16.msra.mxu0 0
        %4404 = vmatprep.subr.bf16.mxu0 0
        %4405 = vmatpush1.bf16.msra.mxu0 0
        %4406 = vmatprep.subr.bf16.mxu0 0
        %4407 = vmatpush1.bf16.msra.mxu0 0
        %4408 = vmatprep.subr.bf16.mxu0 0
        %4409 = vmatpush1.bf16.msra.mxu0 0
        %4410 = vmatprep.subr.bf16.mxu0 0
        %4411 = vmatpush1.bf16.msra.mxu0 0
        %4412 = vmatprep.subr.bf16.mxu0 0
        %4413 = vmatpush1.bf16.msra.mxu0 0
        %4414 = vmatprep.subr.bf16.mxu0 0
        %4415 = vmatpush1.bf16.msra.mxu0 0
        %4416 = vmatprep.subr.bf16.mxu0 0
        %4417 = vmatpush1.bf16.msra.mxu0 0
        %4418 = vmatprep.subr.bf16.mxu0 0
        %4419 = vmatpush1.bf16.msra.mxu0 0
        %4420 = vmatprep.mubr.bf16.mxu0 0
        %4421 = vmatmul.mubr.bf16.gmra.mrb[0].mxu0 %v4377
        %v4422 = vpop.f32.mrb[0].mxu0
        %v4423 = vadd.f32 0.0, %v4422
        %v4424 = vpop.f32.mrb[0].mxu0
        %v4425 = vadd.f32 0.0, %v4424
        %v4426 = vpop.f32.mrb[0].mxu0
        %v4427 = vadd.f32 0.0, %v4426
        %v4428 = vpop.f32.mrb[0].mxu0
        %v4429 = vadd.f32 0.0, %v4428
        %4430 = vmatprep.mubr.bf16.mxu0 0
        %4431 = vmatmul.mubr.bf16.gmra.mrb[0].mxu0 %v4380
        %v4432 = vpop.f32.mrb[0].mxu0
        %v4433 = vadd.f32 0.0, %v4432
        %v4434 = vpop.f32.mrb[0].mxu0
        %v4435 = vadd.f32 0.0, %v4434
        %v4436 = vpop.f32.mrb[0].mxu0
        %v4437 = vadd.f32 0.0, %v4436
        %v4438 = vpop.f32.mrb[0].mxu0
        %v4439 = vadd.f32 0.0, %v4438
        %4440 = vmatprep.mubr.bf16.mxu0 0
        %4441 = vmatmul.mubr.bf16.gmra.mrb[0].mxu0 %v4383
        %v4442 = vpop.f32.mrb[0].mxu0
        %v4443 = vadd.f32 0.0, %v4442
        %v4444 = vpop.f32.mrb[0].mxu0
        %v4445 = vadd.f32 0.0, %v4444
        %v4446 = vpop.f32.mrb[0].mxu0
        %v4447 = vadd.f32 0.0, %v4446
        %v4448 = vpop.f32.mrb[0].mxu0
        %v4449 = vadd.f32 0.0, %v4448
        %4450 = vmatprep.mubr.bf16.mxu0 0
        %4451 = vmatmul.mubr.bf16.gmra.mrb[0].mxu0 %v4386
        %v4452 = vpop.f32.mrb[0].mxu0
        %v4453 = vadd.f32 0.0, %v4452
        %v4454 = vpop.f32.mrb[0].mxu0
        %v4455 = vadd.f32 0.0, %v4454
        %v4456 = vpop.f32.mrb[0].mxu0
        %v4457 = vadd.f32 0.0, %v4456
        %v4458 = vpop.f32.mrb[0].mxu0
        %v4459 = vadd.f32 0.0, %v4458
        %4460 = vdwg.mxu0
        %v4463 = vunpack.c.l.b16 %v4329
        %v4464 = vunpack.c.l.b16 %v4335
        %v4465 = vpack.c.b16 %v4354, %v4463
        %v4466 = vpack.c.b16 %v4356, %v4355
        %v4467 = vpack.c.b16 %v4358, %v4464
        %v4468 = vpack.c.b16 %v4360, %v4359
        %v4471 = vunpack.c.l.b16 %v4341
        %v4472 = vunpack.c.h.b16 %v4341
        %v4473 = vunpack.c.l.b16 %v4342
        %v4474 = vunpack.c.h.b16 %v4342
        %v4475 = vpack.c.b16 %v4473, %v4471
        %v4476 = vpack.c.b16 %v4474, %v4472
        %v4480 = vsel %vm2350, %v4465, 0
        %v4483 = vsel %vm2350, %v4466, 0
        %v4486 = vsel %vm2350, %v4467, 0
        %v4489 = vsel %vm2350, %v4468, 0
        %4491 = vmatprep.subr.bf16.mxu0 %v4476
        %4492 = vmatpush1.bf16.msra.mxu0 %v4475
        %4493 = vmatprep.subr.bf16.mxu0 0
        %4494 = vmatpush1.bf16.msra.mxu0 0
        %4495 = vmatprep.subr.bf16.mxu0 0
        %4496 = vmatpush1.bf16.msra.mxu0 0
        %4497 = vmatprep.subr.bf16.mxu0 0
        %4498 = vmatpush1.bf16.msra.mxu0 0
        %4499 = vmatprep.subr.bf16.mxu0 0
        %4500 = vmatpush1.bf16.msra.mxu0 0
        %4501 = vmatprep.subr.bf16.mxu0 0
        %4502 = vmatpush1.bf16.msra.mxu0 0
        %4503 = vmatprep.subr.bf16.mxu0 0
        %4504 = vmatpush1.bf16.msra.mxu0 0
        %4505 = vmatprep.subr.bf16.mxu0 0
        %4506 = vmatpush1.bf16.msra.mxu0 0
        %4507 = vmatprep.subr.bf16.mxu0 0
        %4508 = vmatpush1.bf16.msra.mxu0 0
        %4509 = vmatprep.subr.bf16.mxu0 0
        %4510 = vmatpush1.bf16.msra.mxu0 0
        %4511 = vmatprep.subr.bf16.mxu0 0
        %4512 = vmatpush1.bf16.msra.mxu0 0
        %4513 = vmatprep.subr.bf16.mxu0 0
        %4514 = vmatpush1.bf16.msra.mxu0 0
        %4515 = vmatprep.subr.bf16.mxu0 0
        %4516 = vmatpush1.bf16.msra.mxu0 0
        %4517 = vmatprep.subr.bf16.mxu0 0
        %4518 = vmatpush1.bf16.msra.mxu0 0
        %4519 = vmatprep.subr.bf16.mxu0 0
        %4520 = vmatpush1.bf16.msra.mxu0 0
        %4521 = vmatprep.subr.bf16.mxu0 0
        %4522 = vmatpush1.bf16.msra.mxu0 0
        %4523 = vmatprep.mubr.bf16.mxu0 0
        %4524 = vmatmul.mubr.bf16.gmra.mrb[0].mxu0 %v4480
        %v4525 = vpop.f32.mrb[0].mxu0
        %v4526 = vadd.f32 %v4423, %v4525
        %v4527 = vpop.f32.mrb[0].mxu0
        %v4528 = vadd.f32 %v4425, %v4527
        %v4529 = vpop.f32.mrb[0].mxu0
        %v4530 = vadd.f32 %v4427, %v4529
        %v4531 = vpop.f32.mrb[0].mxu0
        %v4532 = vadd.f32 %v4429, %v4531
        %4533 = vmatprep.mubr.bf16.mxu0 0
        %4534 = vmatmul.mubr.bf16.gmra.mrb[0].mxu0 %v4483
        %v4535 = vpop.f32.mrb[0].mxu0
        %v4536 = vadd.f32 %v4433, %v4535
        %v4537 = vpop.f32.mrb[0].mxu0
        %v4538 = vadd.f32 %v4435, %v4537
        %v4539 = vpop.f32.mrb[0].mxu0
        %v4540 = vadd.f32 %v4437, %v4539
        %v4541 = vpop.f32.mrb[0].mxu0
        %v4542 = vadd.f32 %v4439, %v4541
        %4543 = vmatprep.mubr.bf16.mxu0 0
        %4544 = vmatmul.mubr.bf16.gmra.mrb[0].mxu0 %v4486
        %v4545 = vpop.f32.mrb[0].mxu0
        %v4546 = vadd.f32 %v4443, %v4545
        %v4547 = vpop.f32.mrb[0].mxu0
        %v4548 = vadd.f32 %v4445, %v4547
        %v4549 = vpop.f32.mrb[0].mxu0
        %v4550 = vadd.f32 %v4447, %v4549
        %v4551 = vpop.f32.mrb[0].mxu0
        %v4552 = vadd.f32 %v4449, %v4551
        %4553 = vmatprep.mubr.bf16.mxu0 0
        %4554 = vmatmul.mubr.bf16.gmra.mrb[0].mxu0 %v4489
        %v4555 = vpop.f32.mrb[0].mxu0
        %v4556 = vadd.f32 %v4453, %v4555
        %v4557 = vpop.f32.mrb[0].mxu0
        %v4558 = vadd.f32 %v4455, %v4557
        %v4559 = vpop.f32.mrb[0].mxu0
        %v4560 = vadd.f32 %v4457, %v4559
        %v4561 = vpop.f32.mrb[0].mxu0
        %v4562 = vadd.f32 %v4459, %v4561
        %4563 = vdwg.mxu0
        %s4564 = scalar_lea.vmem %s14, 32
        %v4565 = vld [vmem:[%s4564] sm:$0xff]
        %v4566 = vld [vmem:[%s4564 + $0x8] sm:$0xff]
        %v4569 = vunpack.c.l.b16 %v4334
        %v4570 = vunpack.c.l.b16 %v4340
        %v4571 = vpack.c.b16 %v4569, %v4357
        %v4572 = vpack.c.b16 %v4570, %v4361
        %v4575 = vunpack.c.l.b16 %v4565
        %v4576 = vunpack.c.h.b16 %v4565
        %v4577 = vunpack.c.l.b16 %v4566
        %v4578 = vunpack.c.h.b16 %v4566
        %v4579 = vpack.c.b16 %v4577, %v4575
        %v4580 = vpack.c.b16 %v4578, %v4576
        %v4584 = vsel %vm2350, %v4571, 0
        %v4587 = vsel %vm2350, %v4572, 0
        %4589 = vmatprep.subr.bf16.mxu0 %v4580
        %4590 = vmatpush1.bf16.msra.mxu0 %v4579
        %4591 = vmatprep.subr.bf16.mxu0 0
        %4592 = vmatpush1.bf16.msra.mxu0 0
        %4593 = vmatprep.subr.bf16.mxu0 0
        %4594 = vmatpush1.bf16.msra.mxu0 0
        %4595 = vmatprep.subr.bf16.mxu0 0
        %4596 = vmatpush1.bf16.msra.mxu0 0
        %4597 = vmatprep.subr.bf16.mxu0 0
        %4598 = vmatpush1.bf16.msra.mxu0 0
        %4599 = vmatprep.subr.bf16.mxu0 0
        %4600 = vmatpush1.bf16.msra.mxu0 0
        %4601 = vmatprep.subr.bf16.mxu0 0
        %4602 = vmatpush1.bf16.msra.mxu0 0
        %4603 = vmatprep.subr.bf16.mxu0 0
        %4604 = vmatpush1.bf16.msra.mxu0 0
        %4605 = vmatprep.subr.bf16.mxu0 0
        %4606 = vmatpush1.bf16.msra.mxu0 0
        %4607 = vmatprep.subr.bf16.mxu0 0
        %4608 = vmatpush1.bf16.msra.mxu0 0
        %4609 = vmatprep.subr.bf16.mxu0 0
        %4610 = vmatpush1.bf16.msra.mxu0 0
        %4611 = vmatprep.subr.bf16.mxu0 0
        %4612 = vmatpush1.bf16.msra.mxu0 0
        %4613 = vmatprep.subr.bf16.mxu0 0
        %4614 = vmatpush1.bf16.msra.mxu0 0
        %4615 = vmatprep.subr.bf16.mxu0 0
        %4616 = vmatpush1.bf16.msra.mxu0 0
        %4617 = vmatprep.subr.bf16.mxu0 0
        %4618 = vmatpush1.bf16.msra.mxu0 0
        %4619 = vmatprep.subr.bf16.mxu0 0
        %4620 = vmatpush1.bf16.msra.mxu0 0
        %4621 = vmatprep.mubr.bf16.mxu0 0
        %4622 = vmatmul.mubr.bf16.gmra.mrb[0].mxu0 %v4483
        %v4623 = vpop.f32.mrb[0].mxu0
        %v4624 = vadd.f32 0.0, %v4623
        %v4625 = vpop.f32.mrb[0].mxu0
        %v4626 = vadd.f32 0.0, %v4625
        %v4627 = vpop.f32.mrb[0].mxu0
        %v4628 = vadd.f32 0.0, %v4627
        %v4629 = vpop.f32.mrb[0].mxu0
        %v4630 = vadd.f32 0.0, %v4629
        %4631 = vmatprep.mubr.bf16.mxu0 0
        %4632 = vmatmul.mubr.bf16.gmra.mrb[0].mxu0 %v4584
        %v4633 = vpop.f32.mrb[0].mxu0
        %v4634 = vadd.f32 0.0, %v4633
        %v4635 = vpop.f32.mrb[0].mxu0
        %v4636 = vadd.f32 0.0, %v4635
        %v4637 = vpop.f32.mrb[0].mxu0
        %v4638 = vadd.f32 0.0, %v4637
        %v4639 = vpop.f32.mrb[0].mxu0
        %v4640 = vadd.f32 0.0, %v4639
        %4641 = vmatprep.mubr.bf16.mxu0 0
        %4642 = vmatmul.mubr.bf16.gmra.mrb[0].mxu0 %v4489
        %v4643 = vpop.f32.mrb[0].mxu0
        %v4644 = vadd.f32 0.0, %v4643
        %v4645 = vpop.f32.mrb[0].mxu0
        %v4646 = vadd.f32 0.0, %v4645
        %v4647 = vpop.f32.mrb[0].mxu0
        %v4648 = vadd.f32 0.0, %v4647
        %v4649 = vpop.f32.mrb[0].mxu0
        %v4650 = vadd.f32 0.0, %v4649
        %4651 = vmatprep.mubr.bf16.mxu0 0
        %4652 = vmatmul.mubr.bf16.gmra.mrb[0].mxu0 %v4587
        %v4653 = vpop.f32.mrb[0].mxu0
        %v4654 = vadd.f32 0.0, %v4653
        %v4655 = vpop.f32.mrb[0].mxu0
        %v4656 = vadd.f32 0.0, %v4655
        %v4657 = vpop.f32.mrb[0].mxu0
        %v4658 = vadd.f32 0.0, %v4657
        %v4659 = vpop.f32.mrb[0].mxu0
        %v4660 = vadd.f32 0.0, %v4659
        %4661 = vdwg.mxu0
        %v4662 = vadd.f32 %v4526, %v4624
        %v4663 = vadd.f32 %v4528, %v4626
        %v4664 = vadd.f32 %v4530, %v4628
        %v4665 = vadd.f32 %v4532, %v4630
        %v4666 = vadd.f32 %v4536, %v4634
        %v4667 = vadd.f32 %v4538, %v4636
        %v4668 = vadd.f32 %v4540, %v4638
        %v4669 = vadd.f32 %v4542, %v4640
        %v4670 = vadd.f32 %v4546, %v4644
        %v4671 = vadd.f32 %v4548, %v4646
        %v4672 = vadd.f32 %v4550, %v4648
        %v4673 = vadd.f32 %v4552, %v4650
        %v4674 = vadd.f32 %v4556, %v4654
        %v4675 = vadd.f32 %v4558, %v4656
        %v4676 = vadd.f32 %v4560, %v4658
        %v4677 = vadd.f32 %v4562, %v4660
        %v4678 = vld [vmem:[%s15] sm:$0x3]
        %v4680 = vlaneseq
        %v4681 = vshrl.u32 %v4680, 7
        %v4682 = vsub.s32 0, %v4681
        %v4683 = vrot.slane %v4678, %v4682
        %v4684 = vlaneseq
        %v4685 = vshrl.u32 %v4684, 7
        %v4686 = vsub.s32 1, %v4685
        %v4687 = vrot.slane %v4678, %v4686
        %v4690 = vadd.f32 %v4662, %v4683
        %v4691 = vadd.f32 %v4663, %v4687
        %v4692 = vadd.f32 %v4664, %v4683
        %v4693 = vadd.f32 %v4665, %v4687
        %v4694 = vadd.f32 %v4666, %v4683
        %v4695 = vadd.f32 %v4667, %v4687
        %v4696 = vadd.f32 %v4668, %v4683
        %v4697 = vadd.f32 %v4669, %v4687
        %v4698 = vadd.f32 %v4670, %v4683
        %v4699 = vadd.f32 %v4671, %v4687
        %v4700 = vadd.f32 %v4672, %v4683
        %v4701 = vadd.f32 %v4673, %v4687
        %v4702 = vadd.f32 %v4674, %v4683
        %v4703 = vadd.f32 %v4675, %v4687
        %v4704 = vadd.f32 %v4676, %v4683
        %v4705 = vadd.f32 %v4677, %v4687
        %v4706 = vxor.u32 %v4690, 2147483648
        %v4707 = vxor.u32 %v4692, 2147483648
        %v4708 = vxor.u32 %v4694, 2147483648
        %v4709 = vxor.u32 %v4696, 2147483648
        %v4710 = vxor.u32 %v4698, 2147483648
        %v4711 = vxor.u32 %v4700, 2147483648
        %v4712 = vxor.u32 %v4702, 2147483648
        %v4713 = vxor.u32 %v4704, 2147483648
        %v4714 = vmul.f32 %v4706, 1.442695
        %v4715 = vpow.pop %v4714
        %v4716 = vmul.f32 %v4707, 1.442695
        %v4717 = vpow.pop %v4716
        %v4718 = vmul.f32 %v4708, 1.442695
        %v4719 = vpow.pop %v4718
        %v4720 = vmul.f32 %v4709, 1.442695
        %v4721 = vpow.pop %v4720
        %v4722 = vmul.f32 %v4710, 1.442695
        %v4723 = vpow.pop %v4722
        %v4724 = vmul.f32 %v4711, 1.442695
        %v4725 = vpow.pop %v4724
        %v4726 = vmul.f32 %v4712, 1.442695
        %v4727 = vpow.pop %v4726
        %v4728 = vmul.f32 %v4713, 1.442695
        %v4729 = vpow.pop %v4728
        %v4730 = vadd.f32 %v4715, 1.0
        %v4731 = vadd.f32 %v4717, 1.0
        %v4732 = vadd.f32 %v4719, 1.0
        %v4733 = vadd.f32 %v4721, 1.0
        %v4734 = vadd.f32 %v4723, 1.0
        %v4735 = vadd.f32 %v4725, 1.0
        %v4736 = vadd.f32 %v4727, 1.0
        %v4737 = vadd.f32 %v4729, 1.0
        %v4738 = vrcp.pop %v4730
        %v4739 = vmul.f32 1.0, %v4738
        %v4740 = vrcp.pop %v4731
        %v4741 = vmul.f32 1.0, %v4740
        %v4742 = vrcp.pop %v4732
        %v4743 = vmul.f32 1.0, %v4742
        %v4744 = vrcp.pop %v4733
        %v4745 = vmul.f32 1.0, %v4744
        %v4746 = vrcp.pop %v4734
        %v4747 = vmul.f32 1.0, %v4746
        %v4748 = vrcp.pop %v4735
        %v4749 = vmul.f32 1.0, %v4748
        %v4750 = vrcp.pop %v4736
        %v4751 = vmul.f32 1.0, %v4750
        %v4752 = vrcp.pop %v4737
        %v4753 = vmul.f32 1.0, %v4752
        %4762 = vrot.lane.b32.xlu0 %v4739, 64
        %v4763 = vpop.permute.xlu0 %4762
        %4764 = vrot.lane.b32.xlu0 %v4741, 64
        %v4765 = vpop.permute.xlu0 %4764
        %4766 = vrot.lane.b32.xlu0 %v4743, 64
        %v4767 = vpop.permute.xlu0 %4766
        %4768 = vrot.lane.b32.xlu0 %v4745, 64
        %v4769 = vpop.permute.xlu0 %4768
        %4770 = vrot.lane.b32.xlu0 %v4747, 64
        %v4771 = vpop.permute.xlu0 %4770
        %4772 = vrot.lane.b32.xlu0 %v4749, 64
        %v4773 = vpop.permute.xlu0 %4772
        %4774 = vrot.lane.b32.xlu0 %v4751, 64
        %v4775 = vpop.permute.xlu0 %4774
        %4776 = vrot.lane.b32.xlu0 %v4753, 64
        %v4777 = vpop.permute.xlu0 %4776
        %v4786 = vmul.f32 %v4690, %v4763
        %v4787 = vmul.f32 %v4692, %v4765
        %v4788 = vmul.f32 %v4694, %v4767
        %v4789 = vmul.f32 %v4696, %v4769
        %v4790 = vmul.f32 %v4698, %v4771
        %v4791 = vmul.f32 %v4700, %v4773
        %v4792 = vmul.f32 %v4702, %v4775
        %v4793 = vmul.f32 %v4704, %v4777
        %v4794 = vadd.f32 %v4786, %v4691
        %v4795 = vadd.f32 %v4787, %v4693
        %v4796 = vadd.f32 %v4788, %v4695
        %v4797 = vadd.f32 %v4789, %v4697
        %v4798 = vadd.f32 %v4790, %v4699
        %v4799 = vadd.f32 %v4791, %v4701
        %v4800 = vadd.f32 %v4792, %v4703
        %v4801 = vadd.f32 %v4793, %v4705
        %v4802 = vmax.f32 %v4794, 0.0
        %v4803 = vmax.f32 %v4795, 0.0
        %v4804 = vmax.f32 %v4796, 0.0
        %v4805 = vmax.f32 %v4797, 0.0
        %v4806 = vmax.f32 %v4798, 0.0
        %v4807 = vmax.f32 %v4799, 0.0
        %v4808 = vmax.f32 %v4800, 0.0
        %v4809 = vmax.f32 %v4801, 0.0
        %v4810 = vsel %vm1847, %v4802, 0.0
        %4811 = vadd.xlane.f32.xlu0 %v4810
        %v4812 = vpop.xlane.xlu0 %4811
        %v4813 = vsel %vm1847, %v4803, 0.0
        %4814 = vadd.xlane.f32.xlu0 %v4813
        %v4815 = vpop.xlane.xlu0 %4814
        %v4816 = vsel %vm1847, %v4804, 0.0
        %4817 = vadd.xlane.f32.xlu0 %v4816
        %v4818 = vpop.xlane.xlu0 %4817
        %v4819 = vsel %vm1847, %v4805, 0.0
        %4820 = vadd.xlane.f32.xlu0 %v4819
        %v4821 = vpop.xlane.xlu0 %4820
        %v4822 = vsel %vm1847, %v4806, 0.0
        %4823 = vadd.xlane.f32.xlu0 %v4822
        %v4824 = vpop.xlane.xlu0 %4823
        %v4825 = vsel %vm1847, %v4807, 0.0
        %4826 = vadd.xlane.f32.xlu0 %v4825
        %v4827 = vpop.xlane.xlu0 %4826
        %v4828 = vsel %vm1847, %v4808, 0.0
        %4829 = vadd.xlane.f32.xlu0 %v4828
        %v4830 = vpop.xlane.xlu0 %4829
        %v4831 = vsel %vm1847, %v4809, 0.0
        %4832 = vadd.xlane.f32.xlu0 %v4831
        %v4833 = vpop.xlane.xlu0 %4832
        %v4834 = vadd.f32 %v4812, %v4815
        %v4835 = vadd.f32 %v4834, %v4818
        %v4836 = vadd.f32 %v4835, %v4821
        %v4837 = vadd.f32 %v4824, %v4827
        %v4838 = vadd.f32 %v4837, %v4830
        %v4839 = vadd.f32 %v4838, %v4833
        %v4840 = vadd.f32 %v4836, %v4839
        %v4841 = vmul.f32 %v4802, %v4802
        %v4842 = vmul.f32 %v4803, %v4803
        %v4843 = vmul.f32 %v4804, %v4804
        %v4844 = vmul.f32 %v4805, %v4805
        %v4845 = vmul.f32 %v4806, %v4806
        %v4846 = vmul.f32 %v4807, %v4807
        %v4847 = vmul.f32 %v4808, %v4808
        %v4848 = vmul.f32 %v4809, %v4809
        %v4849 = vsel %vm1847, %v4841, 0.0
        %4850 = vadd.xlane.f32.xlu0 %v4849
        %v4851 = vpop.xlane.xlu0 %4850
        %v4852 = vsel %vm1847, %v4842, 0.0
        %4853 = vadd.xlane.f32.xlu0 %v4852
        %v4854 = vpop.xlane.xlu0 %4853
        %v4855 = vsel %vm1847, %v4843, 0.0
        %4856 = vadd.xlane.f32.xlu0 %v4855
        %v4857 = vpop.xlane.xlu0 %4856
        %v4858 = vsel %vm1847, %v4844, 0.0
        %4859 = vadd.xlane.f32.xlu0 %v4858
        %v4860 = vpop.xlane.xlu0 %4859
        %v4861 = vsel %vm1847, %v4845, 0.0
        %4862 = vadd.xlane.f32.xlu0 %v4861
        %v4863 = vpop.xlane.xlu0 %4862
        %v4864 = vsel %vm1847, %v4846, 0.0
        %4865 = vadd.xlane.f32.xlu0 %v4864
        %v4866 = vpop.xlane.xlu0 %4865
        %v4867 = vsel %vm1847, %v4847, 0.0
        %4868 = vadd.xlane.f32.xlu0 %v4867
        %v4869 = vpop.xlane.xlu0 %4868
        %v4870 = vsel %vm1847, %v4848, 0.0
        %4871 = vadd.xlane.f32.xlu0 %v4870
        %v4872 = vpop.xlane.xlu0 %4871
        %v4873 = vadd.f32 %v4851, %v4854
        %v4874 = vadd.f32 %v4873, %v4857
        %v4875 = vadd.f32 %v4874, %v4860
        %v4876 = vadd.f32 %v4863, %v4866
        %v4877 = vadd.f32 %v4876, %v4869
        %v4878 = vadd.f32 %v4877, %v4872
        %v4879 = vadd.f32 %v4875, %v4878
        %v4880 = vrcp.pop 512.0
        %v4881 = vmul.f32 %v4840, %v4880
        %v4882 = vmul.f32 %v4879, %v4880
        %v4883 = vmul.f32 %v4881, %v4881
        %v4884 = vsub.f32 %v4882, %v4883
        %v4885 = vmax.f32 %v4884, 0.0
        %v4886 = vsub.f32 %v4802, %v4881
        %v4887 = vsub.f32 %v4803, %v4881
        %v4888 = vsub.f32 %v4804, %v4881
        %v4889 = vsub.f32 %v4805, %v4881
        %v4890 = vsub.f32 %v4806, %v4881
        %v4891 = vsub.f32 %v4807, %v4881
        %v4892 = vsub.f32 %v4808, %v4881
        %v4893 = vsub.f32 %v4809, %v4881
        %v4894 = vadd.f32 %v4885, 1e-05
        %v4895 = vrsqrt.pop %v4894
        %v4896 = vmul.f32 %v4886, %v4895
        %v4897 = vmul.f32 %v4887, %v4895
        %v4898 = vmul.f32 %v4888, %v4895
        %v4899 = vmul.f32 %v4889, %v4895
        %v4900 = vmul.f32 %v4890, %v4895
        %v4901 = vmul.f32 %v4891, %v4895
        %v4902 = vmul.f32 %v4892, %v4895
        %v4903 = vmul.f32 %v4893, %v4895
        %v4904 = vpack.c.bf16 %v4896, %v4896
        %v4905 = vpack.c.bf16 %v4897, %v4897
        %v4906 = vpack.c.bf16 %v4898, %v4898
        %v4907 = vpack.c.bf16 %v4899, %v4899
        %v4908 = vpack.c.bf16 %v4900, %v4900
        %v4909 = vpack.c.bf16 %v4901, %v4901
        %v4910 = vpack.c.bf16 %v4902, %v4902
        %v4911 = vpack.c.bf16 %v4903, %v4903
        %v4912 = vld [vmem:[%s16] sm:$0xff]
        %v4913 = vld [vmem:[%s16 + $0x8] sm:$0xff]
        %v4914 = vld [vmem:[%s16 + $0x10] sm:$0xff]
        %v4915 = vld [vmem:[%s16 + $0x18] sm:$0xff]
        %v4916 = vld [vmem:[%s16 + $0x20] sm:$0xff]
        %v4917 = vld [vmem:[%s16 + $0x28] sm:$0xff]
        %v4918 = vld [vmem:[%s16 + $0x30] sm:$0xff]
        %v4919 = vld [vmem:[%s16 + $0x38] sm:$0xff]
        %s4920 = scalar_lea.vmem %s16, 64
        %v4921 = vld [vmem:[%s4920] sm:$0xff]
        %v4922 = vld [vmem:[%s4920 + $0x8] sm:$0xff]
        %v4923 = vld [vmem:[%s4920 + $0x10] sm:$0xff]
        %v4924 = vld [vmem:[%s4920 + $0x18] sm:$0xff]
        %v4925 = vld [vmem:[%s4920 + $0x20] sm:$0xff]
        %v4926 = vld [vmem:[%s4920 + $0x28] sm:$0xff]
        %v4927 = vld [vmem:[%s4920 + $0x30] sm:$0xff]
        %v4928 = vld [vmem:[%s4920 + $0x38] sm:$0xff]
        %v4933 = vunpack.c.l.b16 %v4905
        %v4934 = vunpack.c.l.b16 %v4906
        %v4935 = vunpack.c.l.b16 %v4909
        %v4936 = vunpack.c.l.b16 %v4910
        %v4937 = vpack.c.b16 %v4934, %v4933
        %v4938 = vpack.c.b16 %v4936, %v4935
        %v4947 = vunpack.c.l.b16 %v4921
        %v4948 = vunpack.c.h.b16 %v4921
        %v4949 = vunpack.c.l.b16 %v4922
        %v4950 = vunpack.c.h.b16 %v4922
        %v4951 = vunpack.c.l.b16 %v4923
        %v4952 = vunpack.c.h.b16 %v4923
        %v4953 = vunpack.c.l.b16 %v4924
        %v4954 = vunpack.c.h.b16 %v4924
        %v4955 = vunpack.c.l.b16 %v4925
        %v4956 = vunpack.c.h.b16 %v4925
        %v4957 = vunpack.c.l.b16 %v4926
        %v4958 = vunpack.c.h.b16 %v4926
        %v4959 = vunpack.c.l.b16 %v4927
        %v4960 = vunpack.c.h.b16 %v4927
        %v4961 = vunpack.c.l.b16 %v4928
        %v4962 = vunpack.c.h.b16 %v4928
        %v4963 = vpack.c.b16 %v4949, %v4947
        %v4964 = vpack.c.b16 %v4950, %v4948
        %v4965 = vpack.c.b16 %v4953, %v4951
        %v4966 = vpack.c.b16 %v4954, %v4952
        %v4967 = vpack.c.b16 %v4957, %v4955
        %v4968 = vpack.c.b16 %v4958, %v4956
        %v4969 = vpack.c.b16 %v4961, %v4959
        %v4970 = vpack.c.b16 %v4962, %v4960
        %v4980 = vsel %vm1847, %v4937, 0
        %v4983 = vsel %vm1847, %v4938, 0
        %4985 = vmatprep.subr.bf16.mxu0 %v4964
        %4986 = vmatpush1.bf16.msra.mxu0 %v4963
        %4987 = vmatprep.subr.bf16.mxu0 %v4966
        %4988 = vmatpush1.bf16.msra.mxu0 %v4965
        %4989 = vmatprep.subr.bf16.mxu0 %v4968
        %4990 = vmatpush1.bf16.msra.mxu0 %v4967
        %4991 = vmatprep.subr.bf16.mxu0 %v4970
        %4992 = vmatpush1.bf16.msra.mxu0 %v4969
        %4993 = vmatprep.subr.bf16.mxu0 0
        %4994 = vmatpush1.bf16.msra.mxu0 0
        %4995 = vmatprep.subr.bf16.mxu0 0
        %4996 = vmatpush1.bf16.msra.mxu0 0
        %4997 = vmatprep.subr.bf16.mxu0 0
        %4998 = vmatpush1.bf16.msra.mxu0 0
        %4999 = vmatprep.subr.bf16.mxu0 0
        %5000 = vmatpush1.bf16.msra.mxu0 0
        %5001 = vmatprep.subr.bf16.mxu0 0
        %5002 = vmatpush1.bf16.msra.mxu0 0
        %5003 = vmatprep.subr.bf16.mxu0 0
        %5004 = vmatpush1.bf16.msra.mxu0 0
        %5005 = vmatprep.subr.bf16.mxu0 0
        %5006 = vmatpush1.bf16.msra.mxu0 0
        %5007 = vmatprep.subr.bf16.mxu0 0
        %5008 = vmatpush1.bf16.msra.mxu0 0
        %5009 = vmatprep.subr.bf16.mxu0 0
        %5010 = vmatpush1.bf16.msra.mxu0 0
        %5011 = vmatprep.subr.bf16.mxu0 0
        %5012 = vmatpush1.bf16.msra.mxu0 0
        %5013 = vmatprep.subr.bf16.mxu0 0
        %5014 = vmatpush1.bf16.msra.mxu0 0
        %5015 = vmatprep.subr.bf16.mxu0 0
        %5016 = vmatpush1.bf16.msra.mxu0 0
        %5017 = vmatprep.mubr.bf16.mxu0 0
        %5018 = vmatmul.mubr.bf16.gmra.mrb[0].mxu0 %v4980
        %v5019 = vpop.f32.mrb[0].mxu0
        %v5020 = vadd.f32 0.0, %v5019
        %v5021 = vpop.f32.mrb[0].mxu0
        %v5022 = vadd.f32 0.0, %v5021
        %v5023 = vpop.f32.mrb[0].mxu0
        %v5024 = vadd.f32 0.0, %v5023
        %v5025 = vpop.f32.mrb[0].mxu0
        %v5026 = vadd.f32 0.0, %v5025
        %5027 = vmatprep.mubr.bf16.mxu0 0
        %5028 = vmatmul.mubr.bf16.gmra.mrb[0].mxu0 %v4983
        %v5029 = vpop.f32.mrb[0].mxu0
        %v5030 = vadd.f32 0.0, %v5029
        %v5031 = vpop.f32.mrb[0].mxu0
        %v5032 = vadd.f32 0.0, %v5031
        %v5033 = vpop.f32.mrb[0].mxu0
        %v5034 = vadd.f32 0.0, %v5033
        %v5035 = vpop.f32.mrb[0].mxu0
        %v5036 = vadd.f32 0.0, %v5035
        %5037 = vdwg.mxu0
        %v5040 = vunpack.c.l.b16 %v4904
        %v5041 = vunpack.c.l.b16 %v4908
        %v5042 = vpack.c.b16 %v4933, %v5040
        %v5043 = vpack.c.b16 %v4935, %v5041
        %v5052 = vunpack.c.l.b16 %v4912
        %v5053 = vunpack.c.h.b16 %v4912
        %v5054 = vunpack.c.l.b16 %v4913
        %v5055 = vunpack.c.h.b16 %v4913
        %v5056 = vunpack.c.l.b16 %v4914
        %v5057 = vunpack.c.h.b16 %v4914
        %v5058 = vunpack.c.l.b16 %v4915
        %v5059 = vunpack.c.h.b16 %v4915
        %v5060 = vunpack.c.l.b16 %v4916
        %v5061 = vunpack.c.h.b16 %v4916
        %v5062 = vunpack.c.l.b16 %v4917
        %v5063 = vunpack.c.h.b16 %v4917
        %v5064 = vunpack.c.l.b16 %v4918
        %v5065 = vunpack.c.h.b16 %v4918
        %v5066 = vunpack.c.l.b16 %v4919
        %v5067 = vunpack.c.h.b16 %v4919
        %v5068 = vpack.c.b16 %v5054, %v5052
        %v5069 = vpack.c.b16 %v5055, %v5053
        %v5070 = vpack.c.b16 %v5058, %v5056
        %v5071 = vpack.c.b16 %v5059, %v5057
        %v5072 = vpack.c.b16 %v5062, %v5060
        %v5073 = vpack.c.b16 %v5063, %v5061
        %v5074 = vpack.c.b16 %v5066, %v5064
        %v5075 = vpack.c.b16 %v5067, %v5065
        %v5085 = vsel %vm1847, %v5042, 0
        %v5088 = vsel %vm1847, %v5043, 0
        %5090 = vmatprep.subr.bf16.mxu0 %v5069
        %5091 = vmatpush1.bf16.msra.mxu0 %v5068
        %5092 = vmatprep.subr.bf16.mxu0 %v5071
        %5093 = vmatpush1.bf16.msra.mxu0 %v5070
        %5094 = vmatprep.subr.bf16.mxu0 %v5073
        %5095 = vmatpush1.bf16.msra.mxu0 %v5072
        %5096 = vmatprep.subr.bf16.mxu0 %v5075
        %5097 = vmatpush1.bf16.msra.mxu0 %v5074
        %5098 = vmatprep.subr.bf16.mxu0 0
        %5099 = vmatpush1.bf16.msra.mxu0 0
        %5100 = vmatprep.subr.bf16.mxu0 0
        %5101 = vmatpush1.bf16.msra.mxu0 0
        %5102 = vmatprep.subr.bf16.mxu0 0
        %5103 = vmatpush1.bf16.msra.mxu0 0
        %5104 = vmatprep.subr.bf16.mxu0 0
        %5105 = vmatpush1.bf16.msra.mxu0 0
        %5106 = vmatprep.subr.bf16.mxu0 0
        %5107 = vmatpush1.bf16.msra.mxu0 0
        %5108 = vmatprep.subr.bf16.mxu0 0
        %5109 = vmatpush1.bf16.msra.mxu0 0
        %5110 = vmatprep.subr.bf16.mxu0 0
        %5111 = vmatpush1.bf16.msra.mxu0 0
        %5112 = vmatprep.subr.bf16.mxu0 0
        %5113 = vmatpush1.bf16.msra.mxu0 0
        %5114 = vmatprep.subr.bf16.mxu0 0
        %5115 = vmatpush1.bf16.msra.mxu0 0
        %5116 = vmatprep.subr.bf16.mxu0 0
        %5117 = vmatpush1.bf16.msra.mxu0 0
        %5118 = vmatprep.subr.bf16.mxu0 0
        %5119 = vmatpush1.bf16.msra.mxu0 0
        %5120 = vmatprep.subr.bf16.mxu0 0
        %5121 = vmatpush1.bf16.msra.mxu0 0
        %5122 = vmatprep.mubr.bf16.mxu0 0
        %5123 = vmatmul.mubr.bf16.gmra.mrb[0].mxu0 %v5085
        %v5124 = vpop.f32.mrb[0].mxu0
        %v5125 = vadd.f32 %v5020, %v5124
        %v5126 = vpop.f32.mrb[0].mxu0
        %v5127 = vadd.f32 %v5022, %v5126
        %v5128 = vpop.f32.mrb[0].mxu0
        %v5129 = vadd.f32 %v5024, %v5128
        %v5130 = vpop.f32.mrb[0].mxu0
        %v5131 = vadd.f32 %v5026, %v5130
        %5132 = vmatprep.mubr.bf16.mxu0 0
        %5133 = vmatmul.mubr.bf16.gmra.mrb[0].mxu0 %v5088
        %v5134 = vpop.f32.mrb[0].mxu0
        %v5135 = vadd.f32 %v5030, %v5134
        %v5136 = vpop.f32.mrb[0].mxu0
        %v5137 = vadd.f32 %v5032, %v5136
        %v5138 = vpop.f32.mrb[0].mxu0
        %v5139 = vadd.f32 %v5034, %v5138
        %v5140 = vpop.f32.mrb[0].mxu0
        %v5141 = vadd.f32 %v5036, %v5140
        %5142 = vdwg.mxu0
        %s5143 = scalar_lea.vmem %s16, 128
        %v5144 = vld [vmem:[%s5143] sm:$0xff]
        %v5145 = vld [vmem:[%s5143 + $0x8] sm:$0xff]
        %v5146 = vld [vmem:[%s5143 + $0x10] sm:$0xff]
        %v5147 = vld [vmem:[%s5143 + $0x18] sm:$0xff]
        %v5148 = vld [vmem:[%s5143 + $0x20] sm:$0xff]
        %v5149 = vld [vmem:[%s5143 + $0x28] sm:$0xff]
        %v5150 = vld [vmem:[%s5143 + $0x30] sm:$0xff]
        %v5151 = vld [vmem:[%s5143 + $0x38] sm:$0xff]
        %v5154 = vunpack.c.l.b16 %v4907
        %v5155 = vunpack.c.l.b16 %v4911
        %v5156 = vpack.c.b16 %v5154, %v4934
        %v5157 = vpack.c.b16 %v5155, %v4936
        %v5166 = vunpack.c.l.b16 %v5144
        %v5167 = vunpack.c.h.b16 %v5144
        %v5168 = vunpack.c.l.b16 %v5145
        %v5169 = vunpack.c.h.b16 %v5145
        %v5170 = vunpack.c.l.b16 %v5146
        %v5171 = vunpack.c.h.b16 %v5146
        %v5172 = vunpack.c.l.b16 %v5147
        %v5173 = vunpack.c.h.b16 %v5147
        %v5174 = vunpack.c.l.b16 %v5148
        %v5175 = vunpack.c.h.b16 %v5148
        %v5176 = vunpack.c.l.b16 %v5149
        %v5177 = vunpack.c.h.b16 %v5149
        %v5178 = vunpack.c.l.b16 %v5150
        %v5179 = vunpack.c.h.b16 %v5150
        %v5180 = vunpack.c.l.b16 %v5151
        %v5181 = vunpack.c.h.b16 %v5151
        %v5182 = vpack.c.b16 %v5168, %v5166
        %v5183 = vpack.c.b16 %v5169, %v5167
        %v5184 = vpack.c.b16 %v5172, %v5170
        %v5185 = vpack.c.b16 %v5173, %v5171
        %v5186 = vpack.c.b16 %v5176, %v5174
        %v5187 = vpack.c.b16 %v5177, %v5175
        %v5188 = vpack.c.b16 %v5180, %v5178
        %v5189 = vpack.c.b16 %v5181, %v5179
        %v5199 = vsel %vm1847, %v5156, 0
        %v5202 = vsel %vm1847, %v5157, 0
        %5204 = vmatprep.subr.bf16.mxu0 %v5183
        %5205 = vmatpush1.bf16.msra.mxu0 %v5182
        %5206 = vmatprep.subr.bf16.mxu0 %v5185
        %5207 = vmatpush1.bf16.msra.mxu0 %v5184
        %5208 = vmatprep.subr.bf16.mxu0 %v5187
        %5209 = vmatpush1.bf16.msra.mxu0 %v5186
        %5210 = vmatprep.subr.bf16.mxu0 %v5189
        %5211 = vmatpush1.bf16.msra.mxu0 %v5188
        %5212 = vmatprep.subr.bf16.mxu0 0
        %5213 = vmatpush1.bf16.msra.mxu0 0
        %5214 = vmatprep.subr.bf16.mxu0 0
        %5215 = vmatpush1.bf16.msra.mxu0 0
        %5216 = vmatprep.subr.bf16.mxu0 0
        %5217 = vmatpush1.bf16.msra.mxu0 0
        %5218 = vmatprep.subr.bf16.mxu0 0
        %5219 = vmatpush1.bf16.msra.mxu0 0
        %5220 = vmatprep.subr.bf16.mxu0 0
        %5221 = vmatpush1.bf16.msra.mxu0 0
        %5222 = vmatprep.subr.bf16.mxu0 0
        %5223 = vmatpush1.bf16.msra.mxu0 0
        %5224 = vmatprep.subr.bf16.mxu0 0
        %5225 = vmatpush1.bf16.msra.mxu0 0
        %5226 = vmatprep.subr.bf16.mxu0 0
        %5227 = vmatpush1.bf16.msra.mxu0 0
        %5228 = vmatprep.subr.bf16.mxu0 0
        %5229 = vmatpush1.bf16.msra.mxu0 0
        %5230 = vmatprep.subr.bf16.mxu0 0
        %5231 = vmatpush1.bf16.msra.mxu0 0
        %5232 = vmatprep.subr.bf16.mxu0 0
        %5233 = vmatpush1.bf16.msra.mxu0 0
        %5234 = vmatprep.subr.bf16.mxu0 0
        %5235 = vmatpush1.bf16.msra.mxu0 0
        %5236 = vmatprep.mubr.bf16.mxu0 0
        %5237 = vmatmul.mubr.bf16.gmra.mrb[0].mxu0 %v5199
        %v5238 = vpop.f32.mrb[0].mxu0
        %v5239 = vadd.f32 0.0, %v5238
        %v5240 = vpop.f32.mrb[0].mxu0
        %v5241 = vadd.f32 0.0, %v5240
        %v5242 = vpop.f32.mrb[0].mxu0
        %v5243 = vadd.f32 0.0, %v5242
        %v5244 = vpop.f32.mrb[0].mxu0
        %v5245 = vadd.f32 0.0, %v5244
        %5246 = vmatprep.mubr.bf16.mxu0 0
        %5247 = vmatmul.mubr.bf16.gmra.mrb[0].mxu0 %v5202
        %v5248 = vpop.f32.mrb[0].mxu0
        %v5249 = vadd.f32 0.0, %v5248
        %v5250 = vpop.f32.mrb[0].mxu0
        %v5251 = vadd.f32 0.0, %v5250
        %v5252 = vpop.f32.mrb[0].mxu0
        %v5253 = vadd.f32 0.0, %v5252
        %v5254 = vpop.f32.mrb[0].mxu0
        %v5255 = vadd.f32 0.0, %v5254
        %5256 = vdwg.mxu0
        %v5257 = vadd.f32 %v5125, %v5239
        %v5258 = vadd.f32 %v5127, %v5241
        %v5259 = vadd.f32 %v5129, %v5243
        %v5260 = vadd.f32 %v5131, %v5245
        %v5261 = vadd.f32 %v5135, %v5249
        %v5262 = vadd.f32 %v5137, %v5251
        %v5263 = vadd.f32 %v5139, %v5253
        %v5264 = vadd.f32 %v5141, %v5255
        %v5265 = vld [vmem:[%s17] sm:$0x3]
        %v5267 = vlaneseq
        %v5268 = vshrl.u32 %v5267, 7
        %v5269 = vsub.s32 0, %v5268
        %v5270 = vrot.slane %v5265, %v5269
        %v5271 = vlaneseq
        %v5272 = vshrl.u32 %v5271, 7
        %v5273 = vsub.s32 1, %v5272
        %v5274 = vrot.slane %v5265, %v5273
        %v5277 = vadd.f32 %v5257, %v5270
        %v5278 = vadd.f32 %v5258, %v5274
        %v5279 = vadd.f32 %v5259, %v5270
        %v5280 = vadd.f32 %v5260, %v5274
        %v5281 = vadd.f32 %v5261, %v5270
        %v5282 = vadd.f32 %v5262, %v5274
        %v5283 = vadd.f32 %v5263, %v5270
        %v5284 = vadd.f32 %v5264, %v5274
        %v5285 = vxor.u32 %v5277, 2147483648
        %v5286 = vxor.u32 %v5279, 2147483648
        %v5287 = vxor.u32 %v5281, 2147483648
        %v5288 = vxor.u32 %v5283, 2147483648
        %v5289 = vmul.f32 %v5285, 1.442695
        %v5290 = vpow.pop %v5289
        %v5291 = vmul.f32 %v5286, 1.442695
        %v5292 = vpow.pop %v5291
        %v5293 = vmul.f32 %v5287, 1.442695
        %v5294 = vpow.pop %v5293
        %v5295 = vmul.f32 %v5288, 1.442695
        %v5296 = vpow.pop %v5295
        %v5297 = vadd.f32 %v5290, 1.0
        %v5298 = vadd.f32 %v5292, 1.0
        %v5299 = vadd.f32 %v5294, 1.0
        %v5300 = vadd.f32 %v5296, 1.0
        %v5301 = vrcp.pop %v5297
        %v5302 = vmul.f32 1.0, %v5301
        %v5303 = vrcp.pop %v5298
        %v5304 = vmul.f32 1.0, %v5303
        %v5305 = vrcp.pop %v5299
        %v5306 = vmul.f32 1.0, %v5305
        %v5307 = vrcp.pop %v5300
        %v5308 = vmul.f32 1.0, %v5307
        %5313 = vrot.lane.b32.xlu0 %v5302, 64
        %v5314 = vpop.permute.xlu0 %5313
        %5315 = vrot.lane.b32.xlu0 %v5304, 64
        %v5316 = vpop.permute.xlu0 %5315
        %5317 = vrot.lane.b32.xlu0 %v5306, 64
        %v5318 = vpop.permute.xlu0 %5317
        %5319 = vrot.lane.b32.xlu0 %v5308, 64
        %v5320 = vpop.permute.xlu0 %5319
        %v5325 = vmul.f32 %v5277, %v5314
        %v5326 = vmul.f32 %v5279, %v5316
        %v5327 = vmul.f32 %v5281, %v5318
        %v5328 = vmul.f32 %v5283, %v5320
        %v5329 = vadd.f32 %v5325, %v5278
        %v5330 = vadd.f32 %v5326, %v5280
        %v5331 = vadd.f32 %v5327, %v5282
        %v5332 = vadd.f32 %v5328, %v5284
        %v5333 = vmax.f32 %v5329, 0.0
        %v5334 = vmax.f32 %v5330, 0.0
        %v5335 = vmax.f32 %v5331, 0.0
        %v5336 = vmax.f32 %v5332, 0.0
        %5339 = vrot.lane.b32.xlu0 %v5334, 64
        %v5340 = vpop.permute.xlu0 %5339
        %5341 = vrot.lane.b32.xlu0 %v5336, 64
        %v5342 = vpop.permute.xlu0 %5341
        %v5345 = vsel %vm1847, %v5333, %v5340
        %v5346 = vsel %vm1847, %v5335, %v5342
        %v5347 = vpack.c.bf16 %v5346, %v5345
        %v5348 = vld [vmem:[%s18] sm:$0xf]
        %v5349 = vld [vmem:[%s18 + $0x4] sm:$0xf]
        %v5350 = vld [vmem:[%s18 + $0x8] sm:$0xf]
        %v5351 = vld [vmem:[%s18 + $0xc] sm:$0xf]
        %v5352 = vld [vmem:[%s18 + $0x10] sm:$0xf]
        %v5353 = vld [vmem:[%s18 + $0x14] sm:$0xf]
        %v5354 = vld [vmem:[%s18 + $0x18] sm:$0xf]
        %v5355 = vld [vmem:[%s18 + $0x1c] sm:$0xf]
        %v5356 = vld [vmem:[%s18 + $0x20] sm:$0xf]
        %v5357 = vld [vmem:[%s18 + $0x24] sm:$0xf]
        %v5358 = vld [vmem:[%s18 + $0x28] sm:$0xf]
        %v5359 = vld [vmem:[%s18 + $0x2c] sm:$0xf]
        %v5360 = vld [vmem:[%s18 + $0x30] sm:$0xf]
        %v5361 = vld [vmem:[%s18 + $0x34] sm:$0xf]
        %v5362 = vld [vmem:[%s18 + $0x38] sm:$0xf]
        %v5363 = vld [vmem:[%s18 + $0x3c] sm:$0xf]
        %v5364 = vld [vmem:[%s19] sm:$0x1]
        %v5366 = vlaneseq
        %v5367 = vshrl.u32 %v5366, 7
        %v5368 = vsub.s32 0, %v5367
        %v5369 = vrot.slane %v5364, %v5368
        %v5387 = vunpack.c.l.b16 %v5348
        %v5388 = vunpack.c.l.b16 %v5349
        %v5389 = vunpack.c.l.b16 %v5350
        %v5390 = vunpack.c.l.b16 %v5351
        %v5391 = vunpack.c.l.b16 %v5352
        %v5392 = vunpack.c.l.b16 %v5353
        %v5393 = vunpack.c.l.b16 %v5354
        %v5394 = vunpack.c.l.b16 %v5355
        %v5395 = vunpack.c.l.b16 %v5356
        %v5396 = vunpack.c.l.b16 %v5357
        %v5397 = vunpack.c.l.b16 %v5358
        %v5398 = vunpack.c.l.b16 %v5359
        %v5399 = vunpack.c.l.b16 %v5360
        %v5400 = vunpack.c.l.b16 %v5361
        %v5401 = vunpack.c.l.b16 %v5362
        %v5402 = vunpack.c.l.b16 %v5363
        %v5403 = vpack.c.b16 %v5388, %v5387
        %v5404 = vpack.c.b16 %v5390, %v5389
        %v5405 = vpack.c.b16 %v5392, %v5391
        %v5406 = vpack.c.b16 %v5394, %v5393
        %v5407 = vpack.c.b16 %v5396, %v5395
        %v5408 = vpack.c.b16 %v5398, %v5397
        %v5409 = vpack.c.b16 %v5400, %v5399
        %v5410 = vpack.c.b16 %v5402, %v5401
        %5419 = vmatprep.subr.bf16.mxu0 0
        %5420 = vmatpush1.bf16.msra.mxu0 %v5403
        %5421 = vmatprep.subr.bf16.mxu0 0
        %5422 = vmatpush1.bf16.msra.mxu0 %v5404
        %5423 = vmatprep.subr.bf16.mxu0 0
        %5424 = vmatpush1.bf16.msra.mxu0 %v5405
        %5425 = vmatprep.subr.bf16.mxu0 0
        %5426 = vmatpush1.bf16.msra.mxu0 %v5406
        %5427 = vmatprep.subr.bf16.mxu0 0
        %5428 = vmatpush1.bf16.msra.mxu0 %v5407
        %5429 = vmatprep.subr.bf16.mxu0 0
        %5430 = vmatpush1.bf16.msra.mxu0 %v5408
        %5431 = vmatprep.subr.bf16.mxu0 0
        %5432 = vmatpush1.bf16.msra.mxu0 %v5409
        %5433 = vmatprep.subr.bf16.mxu0 0
        %5434 = vmatpush1.bf16.msra.mxu0 %v5410
        %5435 = vmatprep.subr.bf16.mxu0 0
        %5436 = vmatpush1.bf16.msra.mxu0 0
        %5437 = vmatprep.subr.bf16.mxu0 0
        %5438 = vmatpush1.bf16.msra.mxu0 0
        %5439 = vmatprep.subr.bf16.mxu0 0
        %5440 = vmatpush1.bf16.msra.mxu0 0
        %5441 = vmatprep.subr.bf16.mxu0 0
        %5442 = vmatpush1.bf16.msra.mxu0 0
        %5443 = vmatprep.subr.bf16.mxu0 0
        %5444 = vmatpush1.bf16.msra.mxu0 0
        %5445 = vmatprep.subr.bf16.mxu0 0
        %5446 = vmatpush1.bf16.msra.mxu0 0
        %5447 = vmatprep.subr.bf16.mxu0 0
        %5448 = vmatpush1.bf16.msra.mxu0 0
        %5449 = vmatprep.subr.bf16.mxu0 0
        %5450 = vmatpush1.bf16.msra.mxu0 0
        %5451 = vmatprep.mubr.bf16.mxu0 0
        %5452 = vmatmul.mubr.bf16.gmra.mrb[0].mxu0 %v5347
        %v5453 = vpop.f32.mrb[0].mxu0
        %v5454 = vadd.f32 %v5369, %v5453
        %v5455 = vpop.f32.mrb[0].mxu0
        %v5456 = vpop.f32.mrb[0].mxu0
        %v5457 = vadd.f32 %v5369, %v5456
        %v5458 = vpop.f32.mrb[0].mxu0
        %5459 = vdwg.mxu0
        %p5460 = scmp.eq.s32.totalorder %s38, 0
        // Predicated region
        $region113: #{_dynamic_reg_forward_impl.1} parent=107 // pred_check
          %p5461 = pneg %p5460
        $region114: #{_dynamic_reg_forward_impl.1} parent=107 // pred_check_branch
          %5463 = sbr.rel (%p5461) target = $region116
        $region115: #{_dynamic_reg_forward_impl.1} parent=107 // pred_region
          %vm5464 = vcmask 97280
          %5465 = vst.msk [vmem:[#allocation2] sm:$0xff] %vm5464, %v5454
          %5466 = vst.msk [vmem:[#allocation2 + $0x8] sm:$0xff] %vm5464, %v5457
        $region116: #{_dynamic_reg_forward_impl.1} parent=107 // pred_fallthru
          _
        %p5467 = scmp.eq.s32.totalorder %s38, 1
        // Predicated region
        $region117: #{_dynamic_reg_forward_impl.1} parent=107 // pred_check
          %p5468 = pneg %p5467
        $region118: #{_dynamic_reg_forward_impl.1} parent=107 // pred_check_branch
          %5470 = sbr.rel (%p5468) target = $region120
        $region119: #{_dynamic_reg_forward_impl.1} parent=107 // pred_region
          %v5471 = vld [vmem:[%s3] sm:$0xff]
          %v5472 = vld [vmem:[%s3 + $0x8] sm:$0xff]
          %v5473 = vsub.f32 %v5471, 5.0
          %v5474 = vsub.f32 %v5472, 5.0
          %v5475 = vrcp.pop 2.0
          %v5476 = vmul.f32 %v5473, %v5475
          %v5477 = vmul.f32 %v5474, %v5475
          %v5478 = vsub.f32 %v5476, %v5454
          %v5479 = vsub.f32 %v5477, %v5457
          %vm5480 = vcmp.ne.f32.partialorder %v5471, 0.0
          %vm5481 = vcmp.ne.f32.partialorder %v5472, 0.0
          %v5482 = vsel %vm5480, 1, 0
          %v5483 = vsel %vm5481, 1, 0
          %v5484 = vcvt.s32.f32 %v5482
          %v5485 = vcvt.s32.f32 %v5483
          %v5486 = vmul.f32 %v5478, %v5484
          %v5487 = vmul.f32 %v5479, %v5485
          %v5488 = vld [vmem:[%s20] sm:$0xff]
          %v5489 = vld [vmem:[%s20 + $0x8] sm:$0xf]
          %vm5490 = vcmask 97280
          %v5492 = vsel %vm5490, %v5486, 0
          %v5495 = vsel %vm5490, %v5487, 0
          %vm5497 = vcmask 1043456
          %v5499 = vsel %vm5497, %v5489, 0
          %5501 = vmatprep.subr.mxu0 0.0
          %5502 = vmatpush1.msra.mxu0 %v5488
          %5503 = vmatprep.subr.mxu0 0.0
          %5504 = vmatpush1.msra.mxu0 %v5499
          %5505 = vmatprep.subr.mxu0 0.0
          %5506 = vmatpush1.msra.mxu0 0.0
          %5507 = vmatprep.subr.mxu0 0.0
          %5508 = vmatpush1.msra.mxu0 0.0
          %5509 = vmatprep.subr.mxu0 0.0
          %5510 = vmatpush1.msra.mxu0 0.0
          %5511 = vmatprep.subr.mxu0 0.0
          %5512 = vmatpush1.msra.mxu0 0.0
          %5513 = vmatprep.subr.mxu0 0.0
          %5514 = vmatpush1.msra.mxu0 0.0
          %5515 = vmatprep.subr.mxu0 0.0
          %5516 = vmatpush1.msra.mxu0 0.0
          %5517 = vmatprep.subr.mxu0 0.0
          %5518 = vmatpush1.msra.mxu0 0.0
          %5519 = vmatprep.subr.mxu0 0.0
          %5520 = vmatpush1.msra.mxu0 0.0
          %5521 = vmatprep.subr.mxu0 0.0
          %5522 = vmatpush1.msra.mxu0 0.0
          %5523 = vmatprep.subr.mxu0 0.0
          %5524 = vmatpush1.msra.mxu0 0.0
          %5525 = vmatprep.subr.mxu0 0.0
          %5526 = vmatpush1.msra.mxu0 0.0
          %5527 = vmatprep.subr.mxu0 0.0
          %5528 = vmatpush1.msra.mxu0 0.0
          %5529 = vmatprep.subr.mxu0 0.0
          %5530 = vmatpush1.msra.mxu0 0.0
          %5531 = vmatprep.subr.mxu0 0.0
          %5532 = vmatpush1.msra.mxu0 0.0
          %5533 = vmatprep.subr.mxu0 0.0
          %5534 = vmatpush1.msra.mxu0 0.0
          %5535 = vmatprep.subr.mxu0 0.0
          %5536 = vmatpush1.msra.mxu0 0.0
          %5537 = vmatprep.subr.mxu0 0.0
          %5538 = vmatpush1.msra.mxu0 0.0
          %5539 = vmatprep.subr.mxu0 0.0
          %5540 = vmatpush1.msra.mxu0 0.0
          %5541 = vmatprep.subr.mxu0 0.0
          %5542 = vmatpush1.msra.mxu0 0.0
          %5543 = vmatprep.subr.mxu0 0.0
          %5544 = vmatpush1.msra.mxu0 0.0
          %5545 = vmatprep.subr.mxu0 0.0
          %5546 = vmatpush1.msra.mxu0 0.0
          %5547 = vmatprep.subr.mxu0 0.0
          %5548 = vmatpush1.msra.mxu0 0.0
          %5549 = vmatprep.subr.mxu0 0.0
          %5550 = vmatpush1.msra.mxu0 0.0
          %5551 = vmatprep.subr.mxu0 0.0
          %5552 = vmatpush1.msra.mxu0 0.0
          %5553 = vmatprep.subr.mxu0 0.0
          %5554 = vmatpush1.msra.mxu0 0.0
          %5555 = vmatprep.subr.mxu0 0.0
          %5556 = vmatpush1.msra.mxu0 0.0
          %5557 = vmatprep.subr.mxu0 0.0
          %5558 = vmatpush1.msra.mxu0 0.0
          %5559 = vmatprep.subr.mxu0 0.0
          %5560 = vmatpush1.msra.mxu0 0.0
          %5561 = vmatprep.subr.mxu0 0.0
          %5562 = vmatpush1.msra.mxu0 0.0
          %5563 = vmatprep.subr.mxu0 0.0
          %5564 = vmatpush1.msra.mxu0 0.0
          %5565 = vmatprep.mubr.f32.mxu0 0.0
          %5566 = vmatmul.mubr.f32.gmra.mrb[0].mxu0 %v5492
          %v5567 = vpop.f32.mrb[0].mxu0
          %v5568 = vadd.f32 0.0, %v5567
          %v5569 = vpop.f32.mrb[0].mxu0
          %5570 = vmatprep.mubr.f32.mxu0 0.0
          %5571 = vmatmul.mubr.f32.gmra.mrb[0].mxu0 %v5495
          %v5572 = vpop.f32.mrb[0].mxu0
          %v5573 = vadd.f32 0.0, %v5572
          %v5574 = vpop.f32.mrb[0].mxu0
          %5575 = vdwg.mxu0
          %v5576 = vld [vmem:[%s21] sm:$0xff]
          %v5577 = vld [vmem:[%s21 + $0x8] sm:$0xff]
          %v5579 = vsel %vm2350, %v5576, 0
          %v5582 = vsel %vm2350, %v5577, 0
          %5584 = vmatprep.subr.mxu0 0.0
          %5585 = vmatpush1.msra.mxu0 %v5568
          %5586 = vmatprep.subr.mxu0 0.0
          %5587 = vmatpush1.msra.mxu0 %v5573
          %5588 = vmatprep.subr.mxu0 0.0
          %5589 = vmatpush1.msra.mxu0 0.0
          %5590 = vmatprep.subr.mxu0 0.0
          %5591 = vmatpush1.msra.mxu0 0.0
          %5592 = vmatprep.subr.mxu0 0.0
          %5593 = vmatpush1.msra.mxu0 0.0
          %5594 = vmatprep.subr.mxu0 0.0
          %5595 = vmatpush1.msra.mxu0 0.0
          %5596 = vmatprep.subr.mxu0 0.0
          %5597 = vmatpush1.msra.mxu0 0.0
          %5598 = vmatprep.subr.mxu0 0.0
          %5599 = vmatpush1.msra.mxu0 0.0
          %5600 = vmatprep.subr.mxu0 0.0
          %5601 = vmatpush1.msra.mxu0 0.0
          %5602 = vmatprep.subr.mxu0 0.0
          %5603 = vmatpush1.msra.mxu0 0.0
          %5604 = vmatprep.subr.mxu0 0.0
          %5605 = vmatpush1.msra.mxu0 0.0
          %5606 = vmatprep.subr.mxu0 0.0
          %5607 = vmatpush1.msra.mxu0 0.0
          %5608 = vmatprep.subr.mxu0 0.0
          %5609 = vmatpush1.msra.mxu0 0.0
          %5610 = vmatprep.subr.mxu0 0.0
          %5611 = vmatpush1.msra.mxu0 0.0
          %5612 = vmatprep.subr.mxu0 0.0
          %5613 = vmatpush1.msra.mxu0 0.0
          %5614 = vmatprep.subr.mxu0 0.0
          %5615 = vmatpush1.msra.mxu0 0.0
          %5616 = vmatprep.subr.mxu0 0.0
          %5617 = vmatpush1.msra.mxu0 0.0
          %5618 = vmatprep.subr.mxu0 0.0
          %5619 = vmatpush1.msra.mxu0 0.0
          %5620 = vmatprep.subr.mxu0 0.0
          %5621 = vmatpush1.msra.mxu0 0.0
          %5622 = vmatprep.subr.mxu0 0.0
          %5623 = vmatpush1.msra.mxu0 0.0
          %5624 = vmatprep.subr.mxu0 0.0
          %5625 = vmatpush1.msra.mxu0 0.0
          %5626 = vmatprep.subr.mxu0 0.0
          %5627 = vmatpush1.msra.mxu0 0.0
          %5628 = vmatprep.subr.mxu0 0.0
          %5629 = vmatpush1.msra.mxu0 0.0
          %5630 = vmatprep.subr.mxu0 0.0
          %5631 = vmatpush1.msra.mxu0 0.0
          %5632 = vmatprep.subr.mxu0 0.0
          %5633 = vmatpush1.msra.mxu0 0.0
          %5634 = vmatprep.subr.mxu0 0.0
          %5635 = vmatpush1.msra.mxu0 0.0
          %5636 = vmatprep.subr.mxu0 0.0
          %5637 = vmatpush1.msra.mxu0 0.0
          %5638 = vmatprep.subr.mxu0 0.0
          %5639 = vmatpush1.msra.mxu0 0.0
          %5640 = vmatprep.subr.mxu0 0.0
          %5641 = vmatpush1.msra.mxu0 0.0
          %5642 = vmatprep.subr.mxu0 0.0
          %5643 = vmatpush1.msra.mxu0 0.0
          %5644 = vmatprep.subr.mxu0 0.0
          %5645 = vmatpush1.msra.mxu0 0.0
          %5646 = vmatprep.subr.mxu0 0.0
          %5647 = vmatpush1.msra.mxu0 0.0
          %5648 = vmatprep.mubr.f32.mxu0 0.0
          %5649 = vmatmul.mubr.f32.gmra.mrb[0].mxu0 %v5579
          %v5650 = vpop.f32.mrb[0].mxu0
          %v5651 = vadd.f32 0.0, %v5650
          %v5652 = vpop.f32.mrb[0].mxu0
          %5653 = vmatprep.mubr.f32.mxu0 0.0
          %5654 = vmatmul.mubr.f32.gmra.mrb[0].mxu0 %v5582
          %v5655 = vpop.f32.mrb[0].mxu0
          %v5656 = vadd.f32 0.0, %v5655
          %v5657 = vpop.f32.mrb[0].mxu0
          %5658 = vdwg.mxu0
          %v5659 = vld [vmem:[#allocation2] sm:$0xff]
          %v5660 = vld [vmem:[#allocation2 + $0x8] sm:$0xff]
          %v5661 = vadd.f32 %v5659, %v5651
          %v5662 = vadd.f32 %v5660, %v5656
          %5663 = vst.msk [vmem:[#allocation6] sm:$0xff] %vm5490, %v5661
          %5664 = vst.msk [vmem:[#allocation6 + $0x8] sm:$0xff] %vm5490, %v5662
          %v5665 = vld [vmem:[%s2] sm:$0xff]
          %v5666 = vld [vmem:[%s2 + $0x8] sm:$0xff]
          %v5667 = vsub.f32 %v5665, 5.0
          %v5668 = vsub.f32 %v5666, 5.0
          %v5669 = vmul.f32 %v5667, %v5475
          %v5670 = vmul.f32 %v5668, %v5475
          %v5671 = vsub.f32 %v5669, %v5661
          %v5672 = vsub.f32 %v5670, %v5662
          %vm5673 = vcmp.ne.f32.partialorder %v5665, 0.0
          %vm5674 = vcmp.ne.f32.partialorder %v5666, 0.0
          %v5675 = vsel %vm5673, 1, 0
          %v5676 = vsel %vm5674, 1, 0
          %v5677 = vcvt.s32.f32 %v5675
          %v5678 = vcvt.s32.f32 %v5676
          %v5679 = vmul.f32 %v5671, %v5677
          %v5680 = vmul.f32 %v5672, %v5678
          %v5681 = vmul.f32 %v5679, %v5679
          %v5682 = vmul.f32 %v5680, %v5680
          %v5683 = vsel %vm5490, %v5681, 0.0
          %5684 = vadd.xlane.f32.xlu0 %v5683
          %v5685 = vpop.xlane.xlu0 %5684
          %v5686 = vsel %vm5490, %v5682, 0.0
          %5687 = vadd.xlane.f32.xlu0 %v5686
          %v5688 = vpop.xlane.xlu0 %5687
          %v5689 = vrot.slane %v5685, 4
          %v5690 = vadd.f32 %v5685, %v5689
          %v5691 = vrot.slane %v5690, 2
          %v5692 = vadd.f32 %v5690, %v5691
          %v5693 = vrot.slane %v5692, 1
          %v5694 = vadd.f32 %v5692, %v5693
          %v5695 = vrot.slane %v5688, 4
          %v5696 = vadd.f32 %v5688, %v5695
          %v5697 = vrot.slane %v5696, 2
          %v5698 = vadd.f32 %v5696, %v5697
          %v5699 = vrot.slane %v5698, 1
          %v5700 = vadd.f32 %v5698, %v5699
          %v5701 = vadd.f32 %v5694, %v5700
          %s5702 = sld [smem:[#allocation3]]
          %s5703 = sld [smem:[#allocation3 + $0x1]]
          %s5704 = smul.f32 %s5702, 2.0
          %v5705 = vstv %s5704
          %v5706 = vrcp.pop %v5705
          %v5707 = vmul.f32 %v5701, %v5706
          %s5708 = sadd.f32 %s5703, 1.837877
          %s5709 = smul.f32 %s5708, 96.0
          %v5710 = vstv %s5709
          %v5711 = vadd.f32 %v5707, %v5710
          %v5712 = vmul.f32 %v5711, 0.5
          %vm5713 = vcmask 0
          %5714 = vst.msk [vmem:[#allocation7] sm:$0x1] %vm5713, %v5712
        $region120: #{_dynamic_reg_forward_impl.1} parent=107 // pred_fallthru
          _
        // Predicated region
        $region121: #{_dynamic_reg_forward_impl.1} parent=107 // pred_check
          %p5715 = pneg %p518
        $region122: #{_dynamic_reg_forward_impl.1} parent=107 // pred_check_branch
          %5717 = sbr.rel (%p5715) target = $region124
        $region123: #{_dynamic_reg_forward_impl.1} parent=107 // pred_region
          %s5719 = ssub.s32 256, 256
          %5720 = vsyncadd [#allocation4], %s5719
          %s5721 = sshll.u32 [#allocation6], 4
          %s5722 = int_to_ptr.vmem [resolvable:$true] %s5721
          %5727 = dma.vmem_to_hbm [thread:$0]  %s5722, 256, %s22, [#allocation4], 128, 128, 8
        $region124: #{_dynamic_reg_forward_impl.1} parent=107 // pred_fallthru
          _
        // Predicated region
        $region125: #{_dynamic_reg_forward_impl.1} parent=107 // pred_check
          %p5728 = pneg %p539
        $region126: #{_dynamic_reg_forward_impl.1} parent=107 // pred_check_branch
          %5730 = sbr.rel (%p5728) target = $region128
        $region127: #{_dynamic_reg_forward_impl.1} parent=107 // pred_region
          %s5732 = ssub.s32 16, 16
          %5733 = vsyncadd [#allocation8], %s5732
          %s5735 = sshll.u32 [#allocation7], 4
          %s5736 = int_to_ptr.vmem [resolvable:$true] %s5735
          %5738 = dma.vmem_to_hbm [thread:$0]  %s5736, 16, %s23, [#allocation8]
        $region128: #{_dynamic_reg_forward_impl.1} parent=107 // pred_fallthru
          _
        // Predicated region
        $region129: #{_dynamic_reg_forward_impl.1} parent=107 // pred_check
          %p5739 = pneg %p518
        $region130: #{_dynamic_reg_forward_impl.1} parent=107 // pred_check_branch
          %5741 = sbr.rel (%p5739) target = $region132
        $region131: #{_dynamic_reg_forward_impl.1} parent=107 // pred_region
          %5742 = dma.done [#allocation4], 256
        $region132: #{_dynamic_reg_forward_impl.1} parent=107 // pred_fallthru
          _
        // Predicated region
        $region133: #{_dynamic_reg_forward_impl.1} parent=107 // pred_check
          %p5743 = pneg %p539
        $region134: #{_dynamic_reg_forward_impl.1} parent=107 // pred_check_branch
          %5745 = sbr.rel (%p5743) target = $region136
        $region135: #{_dynamic_reg_forward_impl.1} parent=107 // pred_region
          %5746 = dma.done [#allocation8], 16
        $region136: #{_dynamic_reg_forward_impl.1} parent=107 // pred_fallthru
          _
      $region108: #{_dynamic_reg_forward_impl.1} parent=5 // pred_fallthru
        _
      %p5747 = scmp.le.s32.totalorder 2, %s33
      // Predicated region
      $region137: #{_dynamic_reg_forward_impl.1} parent=5 // pred_check
        %p5748 = pneg %p5747
      $region138: #{_dynamic_reg_forward_impl.1} parent=5 // pred_check_branch
        %5750 = sbr.rel (%p5748) target = $region140
      $region139: #{_dynamic_reg_forward_impl.1} parent=5 // pred_region
        %s5751 = ssub.s32 %s33, 2
      $region140: #{_dynamic_reg_forward_impl.1} parent=5 // pred_fallthru
        _
    $region6: #{_dynamic_reg_forward_impl.1} parent=1 // loop_footer
      %s37 = sadd.s32 1, %s33
    $region7: #{_dynamic_reg_forward_impl.1} parent=1 // loop_footer_branch
      %32 = sbr.rel target = $region3
    $region8: #{_dynamic_reg_forward_impl.1} parent=1 // loop_exit
      _
    %5752 = vsyncpa [#allocation4], 1
    %s5753 = scalar_lea.sflag [#allocation4], 1
    %5754 = vsyncpa %s5753, 1
    %5755 = vsyncpa [#allocation8], 1
    %5756 = vsyncpa [#allocation5], 1
    %s5757 = scalar_lea.sflag [#allocation5], 1
    %5758 = vsyncpa %s5757, 1

</llo_original>
